<compile_context>
chip_gen: v5e
topology: v5e:2x2
jax: 0.10.0
libtpu: 0.0.40
codegen_flags: <defaults>
</compile_context>

<pallas_src>
import functools

import jax
import jax.numpy as jnp
from jax import lax
from jax.experimental import pallas as pl
from jax.experimental.pallas import tpu as pltpu


def _round_up(v, m):
    return (v + m - 1) // m * m


def _is_pow2(v):
    return v > 0 and (v & (v - 1)) == 0


def _bottleneck3d_kernel(rows_per_tap, groups, D, H, W, dil, Mpad, eps, use_iota, *refs):
    """conv1x1x1 -> ReLU -> conv3x3x3(dilated, packed bf16 im2col) -> ReLU -> conv1x1x1
    -> BatchNorm3d (batch stats) -> +residual -> ReLU, all fused."""
    if use_iota:
        (x_ref, w1_ref, b1_ref, w2_ref, b2_ref, w3_ref, b3_ref,
         gamma_ref, beta_ref, out_ref, h1pad_ref, col_ref) = refs
        pos_ref = None
    else:
        (x_ref, pos_ref, w1_ref, b1_ref, w2_ref, b2_ref, w3_ref, b3_ref,
         gamma_ref, beta_ref, out_ref, h1pad_ref, col_ref) = refs

    dd, dh, dw = dil
    N = x_ref.shape[1]                      # B*D*H*W, lane-dense flattened spatial axis
    Pp = h1pad_ref.shape[0]

    # ---- conv1 (1x1x1 + bias) + ReLU: one MXU matmul ---------------------------------
    h1 = jnp.dot(w1_ref[...], x_ref[...],
                 preferred_element_type=jnp.float32) + b1_ref[...]
    h1 = jnp.maximum(h1, 0.0)                                    # (Pp, N)

    # Zero-halo padded copy of h1 so every 3x3x3 tap is a plain static lane slice.
    h1pad_ref[:, 0:Mpad] = jnp.zeros((Pp, Mpad), jnp.float32)
    h1pad_ref[:, Mpad + N:Mpad + N + Mpad] = jnp.zeros((Pp, Mpad), jnp.float32)
    h1pad_ref[:, Mpad:Mpad + N] = h1

    # ---- halo masks generated in-kernel (one iota, bitwise AND + compares on the VPU) -
    if use_iota:
        lf = lax.broadcasted_iota(jnp.int32, (1, N), 1)
        wq = lf & (W - 1)                   # w
        hwq = lf & (H * W - 1)              # h*W + w
        dhwq = lf & (D * H * W - 1)         # d*H*W + h*W + w
    else:
        wq = pos_ref[0:1, :]
        hwq = pos_ref[1:2, :]
        dhwq = pos_ref[2:3, :]

    def tap_value(tap):
        kd, kh, kw = tap // 9, (tap // 3) % 3, tap % 3
        od, oh, ow = (kd - 1) * dd, (kh - 1) * dh, (kw - 1) * dw
        off = od * H * W + oh * W + ow
        v = h1pad_ref[:, Mpad + off:Mpad + off + N]              # (Pp, N) static slice
        if rows_per_tap < Pp:
            v = v[0:rows_per_tap, :]                             # drop all-zero pad rows
        conds = []
        if ow < 0: conds.append(wq >= -ow)
        if ow > 0: conds.append(wq < W - ow)
        if oh < 0: conds.append(hwq >= -oh * W)
        if oh > 0: conds.append(hwq < (H - oh) * W)
        if od < 0: conds.append(dhwq >= -od * H * W)
        if od > 0: conds.append(dhwq < (D - od) * H * W)
        if not conds:                                            # center tap: no mask
            return v
        ok = conds[0]
        for c in conds[1:]:
            ok = ok & c
        return jnp.where(ok, v, 0.0)

    # ---- conv2 (3x3x3, stride 1, dilation=dil, padding=dil, bias) via packed im2col ---
    # Rows of col_ref are (tap, ci) packed as tap*rows_per_tap + ci; each store covers a
    # whole group of taps (full bf16 sublane tiles), then ONE MXU matmul does all of K.
    for row_start, taps, store_rows in groups:
        parts = [tap_value(t) for t in taps]
        blk = parts[0] if len(parts) == 1 else jnp.concatenate(parts, axis=0)
        pad = store_rows - blk.shape[0]
        if pad:                                                  # keep every K row finite
            blk = jnp.concatenate([blk, jnp.zeros((pad, N), jnp.float32)], axis=0)
        col_ref[row_start:row_start + store_rows, :] = blk.astype(jnp.bfloat16)

    h2 = jnp.dot(w2_ref[...], col_ref[...],
                 preferred_element_type=jnp.float32) + b2_ref[...]
    h2 = jnp.maximum(h2, 0.0)                                    # (Pp, N)

    # ---- conv3 (1x1x1 + bias): one MXU matmul -----------------------------------------
    h3 = jnp.dot(w3_ref[...], h2, preferred_element_type=jnp.float32) + b3_ref[...]

    # ---- BatchNorm3d (training-mode batch stats over N,D,H,W; biased variance), -------
    # ---- single-pass moments, then residual add (re-loaded) + final ReLU, fused store. -
    inv_n = jnp.float32(1.0 / N)
    mean = jnp.sum(h3, axis=1, keepdims=True) * inv_n            # (Pep, 1)
    ex2 = jnp.sum(h3 * h3, axis=1, keepdims=True) * inv_n
    var = ex2 - mean * mean
    scale = gamma_ref[...] * lax.rsqrt(var + eps)
    shift = beta_ref[...] - mean * scale
    out_ref[...] = jnp.maximum(h3 * scale + shift + x_ref[...], 0.0)


def bottleneck3d_forward(x, params, dilation=(1, 1, 1), eps=1e-5):
    """Fused Bottleneck3D forward. x: (B, Cin, D, H, W) float32, NCDHW like PyTorch."""
    w1, b1, w2, b2, w3, b3, gamma, beta = params
    B, Cin, D, H, W = x.shape
    P = w1.shape[0]
    Pe = w3.shape[0]
    assert Pe == Cin, "downsample=None requires inplanes == planes * expansion"
    dd, dh, dw = dilation
    DHW = D * H * W
    N = B * DHW

    # Channel padding so every sublane dimension is a multiple of 8 (f32 tile height).
    Cp = _round_up(Cin, 8)
    Pp = _round_up(P, 8)
    Pep = _round_up(Pe, 8)
    assert Cp == Pep

    # ---- layout plumbing (host/XLA glue): lane-dense (channels, B*D*H*W) --------------
    x2d = jnp.transpose(x, (1, 0, 2, 3, 4)).reshape(Cin, N)
    x2d = jnp.pad(x2d, ((0, Cp - Cin), (0, 0)))

    def pad2(a, r, c):
        return jnp.pad(a, ((0, r - a.shape[0]), (0, c - a.shape[1])))

    w1p = pad2(w1.reshape(P, Cin), Pp, Cp)
    b1p = jnp.pad(b1, (0, Pp - P)).reshape(Pp, 1)

    # Packed im2col K layout: row of (tap, ci) = tap*rows_per_tap + ci.  When P divides 16
    # several taps share one 16-row bf16 sublane tile so every col_ref store is full-tile.
    if 16 % P == 0:
        taps_per_group, rows_per_tap = 16 // P, P
    elif P % 8 == 0:
        taps_per_group, rows_per_tap = 1, P
    else:
        taps_per_group, rows_per_tap = 1, _round_up(P, 8)
    n_groups = -(-27 // taps_per_group)
    store_rows = taps_per_group * rows_per_tap
    Kp = n_groups * store_rows
    groups = tuple(
        (g * store_rows,
         tuple(range(g * taps_per_group, min((g + 1) * taps_per_group, 27))),
         store_rows)
        for g in range(n_groups))

    # conv2 weights as a (Pp, Kp) bf16 matrix: column tap*rows_per_tap + ci <-> w2[co, ci, tap].
    w2_tap = jnp.transpose(w2.reshape(P, P, 27), (0, 2, 1))              # [co, tap, ci]
    w2p = jnp.zeros((Pp, 27, rows_per_tap), jnp.float32).at[:P, :, :P].set(w2_tap)
    w2p = w2p.reshape(Pp, 27 * rows_per_tap)
    w2p = jnp.pad(w2p, ((0, 0), (0, Kp - 27 * rows_per_tap))).astype(jnp.bfloat16)
    b2p = jnp.pad(b2, (0, Pp - P)).reshape(Pp, 1)
    w3p = pad2(w3.reshape(Pe, P), Pep, Pp)
    b3p = jnp.pad(b3, (0, Pep - Pe)).reshape(Pep, 1)
    gammap = jnp.pad(gamma, (0, Pep - Pe)).reshape(Pep, 1)
    betap = jnp.pad(beta, (0, Pep - Pe)).reshape(Pep, 1)

    # Lane-aligned halo width covering the largest |flat tap offset|.
    max_off = dd * H * W + dh * W + dw
    Mpad = _round_up(max_off, 128)
    assert Mpad >= max_off

    # Power-of-two spatial dims -> masks fully in-kernel from an iota; otherwise pass a
    # tiny (3, N) int32 position array (w, h*W+w, d*H*W+h*W+w).
    use_iota = _is_pow2(D) and _is_pow2(H) and _is_pow2(W)
    inputs = [x2d]
    if not use_iota:
        lf = jnp.arange(N, dtype=jnp.int32) % DHW
        inputs.append(jnp.stack([lf % W, lf % (H * W), lf]).astype(jnp.int32))
    inputs += [w1p, b1p, w2p, b2p, w3p, b3p, gammap, betap]

    kernel = functools.partial(_bottleneck3d_kernel, rows_per_tap, groups,
                               D, H, W, (dd, dh, dw), Mpad, float(eps), use_iota)
    vmem = pl.BlockSpec(memory_space=pltpu.MemorySpace.VMEM)

    out2d = pl.pallas_call(
        kernel,
        out_shape=jax.ShapeDtypeStruct((Pep, N), jnp.float32),
        in_specs=[vmem] * len(inputs),
        out_specs=vmem,
        scratch_shapes=[
            pltpu.VMEM((Pp, N + 2 * Mpad), jnp.float32),   # zero-halo padded conv1 output
            pltpu.VMEM((Kp, N), jnp.bfloat16),             # packed bf16 im2col operand
        ],
    )(*inputs)

    # Back to NCDHW.
    return out2d[:Pe].reshape(Pe, B, D, H, W).transpose(1, 0, 2, 3, 4)


def bottleneck3d_ref(x, params, dilation=(1, 1, 1), eps=1e-5):
    """Pure-JAX reference with identical semantics (for validation)."""
    w1, b1, w2, b2, w3, b3, gamma, beta = params
    hp = jax.lax.Precision.HIGHEST

    def bcast(v):
        return v[None, :, None, None, None]

    h = jnp.einsum('bcdhw,oc->bodhw', x, w1, precision=hp) + bcast(b1)
    h = jax.nn.relu(h)
    w2_full = w2.reshape(w2.shape[0], w2.shape[1], 3, 3, 3)
    h = lax.conv_general_dilated(
        h, w2_full, window_strides=(1, 1, 1),
        padding=[(dilation[0], dilation[0]),
                 (dilation[1], dilation[1]),
                 (dilation[2], dilation[2])],
        rhs_dilation=dilation,
        dimension_numbers=('NCDHW', 'OIDHW', 'NCDHW'),
        precision=hp)
    h = jax.nn.relu(h + bcast(b2))
    h = jnp.einsum('bcdhw,oc->bodhw', h, w3, precision=hp) + bcast(b3)
    mean = h.mean(axis=(0, 2, 3, 4), keepdims=True)
    var = h.var(axis=(0, 2, 3, 4), keepdims=True)        # biased, as in BN training mode
    h = (h - mean) / jnp.sqrt(var + eps) * bcast(gamma) + bcast(beta)
    return jax.nn.relu(h + x)


if __name__ == "__main__":
    # Bottleneck3D(inplanes=8, planes=4, expansion=2, stride=1, dilation=[1,1,1],
    #              downsample=None) applied to x of shape (2, 8, 8, 8, 8).
    B, Cin, D, H, W = 2, 8, 8, 8, 8
    planes, expansion = 4, 2
    Pe = planes * expansion          # == Cin so the identity residual path applies

    key = jax.random.PRNGKey(0)
    ks = jax.random.split(key, 9)
    x = jax.random.normal(ks[0], (B, Cin, D, H, W), jnp.float32)

    # Deterministic synthetic parameters (shapes match the PyTorch __init__).
    w1 = 0.2 * jax.random.normal(ks[1], (planes, Cin), jnp.float32)          # conv1 (P,Cin,1,1,1) squeezed
    b1 = 0.1 * jax.random.normal(ks[2], (planes,), jnp.float32)
    w2 = 0.1 * jax.random.normal(ks[3], (planes, planes, 3, 3, 3), jnp.float32)
    b2 = 0.1 * jax.random.normal(ks[4], (planes,), jnp.float32)
    w3 = 0.2 * jax.random.normal(ks[5], (Pe, planes), jnp.float32)           # conv3 (Pe,P,1,1,1) squeezed
    b3 = 0.1 * jax.random.normal(ks[6], (Pe,), jnp.float32)
    gamma = jnp.ones((Pe,), jnp.float32) + 0.1 * jax.random.normal(ks[7], (Pe,), jnp.float32)
    beta = 0.1 * jax.random.normal(ks[8], (Pe,), jnp.float32)
    params = (w1, b1, w2, b2, w3, b3, gamma, beta)

    out = bottleneck3d_forward(x, params, dilation=(1, 1, 1))
    out = jax.block_until_ready(out)

    ref = bottleneck3d_ref(x, params, dilation=(1, 1, 1))
    err = float(jnp.max(jnp.abs(out - ref)))
    # Tolerance accommodates the deliberately-bf16 im2col operand / conv2 weights (and the
    # MXU's default-precision f32 passes on conv1/conv3); genuine layout/offset/mask bugs
    # produce O(1) errors and are still caught.
    assert jnp.allclose(out, ref, atol=5e-2, rtol=5e-2), f"max abs err = {err}"
    print("KERNEL_OK")
</pallas_src>

<mosaic_0001>
module attributes {stable_mosaic.version = 11 : i64} {
  func.func @_bottleneck3d_kernel(%arg0: memref<8x1024xf32, #tpu.memory_space<vmem>>, %arg1: memref<8x8xf32, #tpu.memory_space<vmem>>, %arg2: memref<8x1xf32, #tpu.memory_space<vmem>>, %arg3: memref<8x112xbf16, #tpu.memory_space<vmem>>, %arg4: memref<8x1xf32, #tpu.memory_space<vmem>>, %arg5: memref<8x8xf32, #tpu.memory_space<vmem>>, %arg6: memref<8x1xf32, #tpu.memory_space<vmem>>, %arg7: memref<8x1xf32, #tpu.memory_space<vmem>>, %arg8: memref<8x1xf32, #tpu.memory_space<vmem>>, %arg9: memref<8x1024xf32, #tpu.memory_space<vmem>>, %arg10: memref<8x1280xf32, #tpu.memory_space<vmem>>, %arg11: memref<112x1024xbf16, #tpu.memory_space<vmem>>) attributes {dimension_semantics = [], scalar_prefetch = 0 : i64, scratch_operands = 2 : i64, tpu.core_type = #tpu.core_type<tc>} {
    %c0 = arith.constant 0 : index
    %c0_0 = arith.constant 0 : index
    %0 = vector.load %arg1[%c0, %c0_0] : memref<8x8xf32, #tpu.memory_space<vmem>>, vector<8x8xf32>
    %c0_1 = arith.constant 0 : index
    %c0_2 = arith.constant 0 : index
    %1 = vector.load %arg0[%c0_1, %c0_2] : memref<8x1024xf32, #tpu.memory_space<vmem>>, vector<8x1024xf32>
    %cst = arith.constant dense<0.000000e+00> : vector<8x1024xf32>
    %2 = tpu.matmul %0, %1, %cst {dimension_numbers = #tpu.dot_dimension_numbers<[1], [0], [0], [1], [0, 0, 1, 1], [], []>} : vector<8x8xf32>, vector<8x1024xf32>, vector<8x1024xf32> -> vector<8x1024xf32>
    %c0_3 = arith.constant 0 : index
    %c0_4 = arith.constant 0 : index
    %3 = vector.load %arg2[%c0_3, %c0_4] : memref<8x1xf32, #tpu.memory_space<vmem>>, vector<8x1xf32>
    %4 = vector.broadcast %3 : vector<8x1xf32> to vector<8x1024xf32>
    %5 = arith.addf %2, %4 : vector<8x1024xf32>
    %cst_5 = arith.constant 0.000000e+00 : f32
    %6 = vector.broadcast %cst_5 : f32 to vector<8x1024xf32>
    %7 = arith.maximumf %5, %6 : vector<8x1024xf32>
    %cst_6 = arith.constant 0.000000e+00 : f32
    %8 = vector.broadcast %cst_6 : f32 to vector<8x128xf32>
    %c0_7 = arith.constant 0 : index
    %c0_8 = arith.constant 0 : index
    %9 = vector.load %arg10[%c0_7, %c0_8] : memref<8x1280xf32, #tpu.memory_space<vmem>>, vector<8x128xf32>
    tpu.vector_store %arg10[%c0_7, %c0_8], %8 {strides = array<i32>} : memref<8x1280xf32, #tpu.memory_space<vmem>>, vector<8x128xf32>,
    %cst_9 = arith.constant 0.000000e+00 : f32
    %10 = vector.broadcast %cst_9 : f32 to vector<8x128xf32>
    %c0_10 = arith.constant 0 : index
    %c1152 = arith.constant 1152 : index
    %11 = vector.load %arg10[%c0_10, %c1152] : memref<8x1280xf32, #tpu.memory_space<vmem>>, vector<8x128xf32>
    tpu.vector_store %arg10[%c0_10, %c1152], %10 {strides = array<i32>} : memref<8x1280xf32, #tpu.memory_space<vmem>>, vector<8x128xf32>,
    %c0_11 = arith.constant 0 : index
    %c128 = arith.constant 128 : index
    %12 = vector.load %arg10[%c0_11, %c128] : memref<8x1280xf32, #tpu.memory_space<vmem>>, vector<8x1024xf32>
    tpu.vector_store %arg10[%c0_11, %c128], %7 {strides = array<i32>} : memref<8x1280xf32, #tpu.memory_space<vmem>>, vector<8x1024xf32>,
    %13 = tpu.iota {dimensions = array<i32: 1>} : vector<1x1024xi32>
    %c7_i32 = arith.constant 7 : i32
    %14 = vector.broadcast %c7_i32 : i32 to vector<1x1024xi32>
    %15 = arith.andi %13, %14 : vector<1x1024xi32>
    %c63_i32 = arith.constant 63 : i32
    %16 = vector.broadcast %c63_i32 : i32 to vector<1x1024xi32>
    %17 = arith.andi %13, %16 : vector<1x1024xi32>
    %c511_i32 = arith.constant 511 : i32
    %18 = vector.broadcast %c511_i32 : i32 to vector<1x1024xi32>
    %19 = arith.andi %13, %18 : vector<1x1024xi32>
    %c0_12 = arith.constant 0 : index
    %c55 = arith.constant 55 : index
    %20 = vector.load %arg10[%c0_12, %c55] : memref<8x1280xf32, #tpu.memory_space<vmem>>, vector<8x1024xf32>
    %21 = vector.extract_strided_slice %20 {offsets = [0, 0], sizes = [4, 1024], strides = [1, 1]} : vector<8x1024xf32> to vector<4x1024xf32>
    %c1_i32 = arith.constant 1 : i32
    %22 = vector.broadcast %c1_i32 : i32 to vector<1x1024xi32>
    %23 = arith.cmpi sge, %15, %22 : vector<1x1024xi32>
    %c8_i32 = arith.constant 8 : i32
    %24 = vector.broadcast %c8_i32 : i32 to vector<1x1024xi32>
    %25 = arith.cmpi sge, %17, %24 : vector<1x1024xi32>
    %c64_i32 = arith.constant 64 : i32
    %26 = vector.broadcast %c64_i32 : i32 to vector<1x1024xi32>
    %27 = arith.cmpi sge, %19, %26 : vector<1x1024xi32>
    %28 = arith.andi %23, %25 : vector<1x1024xi1>
    %29 = arith.andi %28, %27 : vector<1x1024xi1>
    %cst_13 = arith.constant 0.000000e+00 : f32
    %30 = vector.shape_cast %29 : vector<1x1024xi1> to vector<1x1024xi1>
    %31 = vector.broadcast %30 : vector<1x1024xi1> to vector<4x1024xi1>
    %32 = vector.broadcast %cst_13 : f32 to vector<4x1024xf32>
    %33 = arith.select %31, %21, %32 : vector<4x1024xi1>, vector<4x1024xf32>
    %c0_14 = arith.constant 0 : index
    %c56 = arith.constant 56 : index
    %34 = vector.load %arg10[%c0_14, %c56] : memref<8x1280xf32, #tpu.memory_space<vmem>>, vector<8x1024xf32>
    %35 = vector.extract_strided_slice %34 {offsets = [0, 0], sizes = [4, 1024], strides = [1, 1]} : vector<8x1024xf32> to vector<4x1024xf32>
    %c8_i32_15 = arith.constant 8 : i32
    %36 = vector.broadcast %c8_i32_15 : i32 to vector<1x1024xi32>
    %37 = arith.cmpi sge, %17, %36 : vector<1x1024xi32>
    %c64_i32_16 = arith.constant 64 : i32
    %38 = vector.broadcast %c64_i32_16 : i32 to vector<1x1024xi32>
    %39 = arith.cmpi sge, %19, %38 : vector<1x1024xi32>
    %40 = arith.andi %37, %39 : vector<1x1024xi1>
    %cst_17 = arith.constant 0.000000e+00 : f32
    %41 = vector.shape_cast %40 : vector<1x1024xi1> to vector<1x1024xi1>
    %42 = vector.broadcast %41 : vector<1x1024xi1> to vector<4x1024xi1>
    %43 = vector.broadcast %cst_17 : f32 to vector<4x1024xf32>
    %44 = arith.select %42, %35, %43 : vector<4x1024xi1>, vector<4x1024xf32>
    %c0_18 = arith.constant 0 : index
    %c57 = arith.constant 57 : index
    %45 = vector.load %arg10[%c0_18, %c57] : memref<8x1280xf32, #tpu.memory_space<vmem>>, vector<8x1024xf32>
    %46 = vector.extract_strided_slice %45 {offsets = [0, 0], sizes = [4, 1024], strides = [1, 1]} : vector<8x1024xf32> to vector<4x1024xf32>
    %c7_i32_19 = arith.constant 7 : i32
    %47 = vector.broadcast %c7_i32_19 : i32 to vector<1x1024xi32>
    %48 = arith.cmpi slt, %15, %47 : vector<1x1024xi32>
    %c8_i32_20 = arith.constant 8 : i32
    %49 = vector.broadcast %c8_i32_20 : i32 to vector<1x1024xi32>
    %50 = arith.cmpi sge, %17, %49 : vector<1x1024xi32>
    %c64_i32_21 = arith.constant 64 : i32
    %51 = vector.broadcast %c64_i32_21 : i32 to vector<1x1024xi32>
    %52 = arith.cmpi sge, %19, %51 : vector<1x1024xi32>
    %53 = arith.andi %48, %50 : vector<1x1024xi1>
    %54 = arith.andi %53, %52 : vector<1x1024xi1>
    %cst_22 = arith.constant 0.000000e+00 : f32
    %55 = vector.shape_cast %54 : vector<1x1024xi1> to vector<1x1024xi1>
    %56 = vector.broadcast %55 : vector<1x1024xi1> to vector<4x1024xi1>
    %57 = vector.broadcast %cst_22 : f32 to vector<4x1024xf32>
    %58 = arith.select %56, %46, %57 : vector<4x1024xi1>, vector<4x1024xf32>
    %c0_23 = arith.constant 0 : index
    %c63 = arith.constant 63 : index
    %59 = vector.load %arg10[%c0_23, %c63] : memref<8x1280xf32, #tpu.memory_space<vmem>>, vector<8x1024xf32>
    %60 = vector.extract_strided_slice %59 {offsets = [0, 0], sizes = [4, 1024], strides = [1, 1]} : vector<8x1024xf32> to vector<4x1024xf32>
    %c1_i32_24 = arith.constant 1 : i32
    %61 = vector.broadcast %c1_i32_24 : i32 to vector<1x1024xi32>
    %62 = arith.cmpi sge, %15, %61 : vector<1x1024xi32>
    %c64_i32_25 = arith.constant 64 : i32
    %63 = vector.broadcast %c64_i32_25 : i32 to vector<1x1024xi32>
    %64 = arith.cmpi sge, %19, %63 : vector<1x1024xi32>
    %65 = arith.andi %62, %64 : vector<1x1024xi1>
    %cst_26 = arith.constant 0.000000e+00 : f32
    %66 = vector.shape_cast %65 : vector<1x1024xi1> to vector<1x1024xi1>
    %67 = vector.broadcast %66 : vector<1x1024xi1> to vector<4x1024xi1>
    %68 = vector.broadcast %cst_26 : f32 to vector<4x1024xf32>
    %69 = arith.select %67, %60, %68 : vector<4x1024xi1>, vector<4x1024xf32>
    %70 = tpu.concatenate %33, %44, %58, %69 in 0 : vector<4x1024xf32>, vector<4x1024xf32>, vector<4x1024xf32>, vector<4x1024xf32> -> vector<16x1024xf32>
    %71 = arith.truncf %70 : vector<16x1024xf32> to vector<16x1024xbf16>
    %c0_27 = arith.constant 0 : index
    %c0_28 = arith.constant 0 : index
    %72 = vector.load %arg11[%c0_27, %c0_28] : memref<112x1024xbf16, #tpu.memory_space<vmem>>, vector<16x1024xbf16>
    tpu.vector_store %arg11[%c0_27, %c0_28], %71 {strides = array<i32>} : memref<112x1024xbf16, #tpu.memory_space<vmem>>, vector<16x1024xbf16>,
    %c0_29 = arith.constant 0 : index
    %c64 = arith.constant 64 : index
    %73 = vector.load %arg10[%c0_29, %c64] : memref<8x1280xf32, #tpu.memory_space<vmem>>, vector<8x1024xf32>
    %74 = vector.extract_strided_slice %73 {offsets = [0, 0], sizes = [4, 1024], strides = [1, 1]} : vector<8x1024xf32> to vector<4x1024xf32>
    %c64_i32_30 = arith.constant 64 : i32
    %75 = vector.broadcast %c64_i32_30 : i32 to vector<1x1024xi32>
    %76 = arith.cmpi sge, %19, %75 : vector<1x1024xi32>
    %cst_31 = arith.constant 0.000000e+00 : f32
    %77 = vector.shape_cast %76 : vector<1x1024xi1> to vector<1x1024xi1>
    %78 = vector.broadcast %77 : vector<1x1024xi1> to vector<4x1024xi1>
    %79 = vector.broadcast %cst_31 : f32 to vector<4x1024xf32>
    %80 = arith.select %78, %74, %79 : vector<4x1024xi1>, vector<4x1024xf32>
    %c0_32 = arith.constant 0 : index
    %c65 = arith.constant 65 : index
    %81 = vector.load %arg10[%c0_32, %c65] : memref<8x1280xf32, #tpu.memory_space<vmem>>, vector<8x1024xf32>
    %82 = vector.extract_strided_slice %81 {offsets = [0, 0], sizes = [4, 1024], strides = [1, 1]} : vector<8x1024xf32> to vector<4x1024xf32>
    %c7_i32_33 = arith.constant 7 : i32
    %83 = vector.broadcast %c7_i32_33 : i32 to vector<1x1024xi32>
    %84 = arith.cmpi slt, %15, %83 : vector<1x1024xi32>
    %c64_i32_34 = arith.constant 64 : i32
    %85 = vector.broadcast %c64_i32_34 : i32 to vector<1x1024xi32>
    %86 = arith.cmpi sge, %19, %85 : vector<1x1024xi32>
    %87 = arith.andi %84, %86 : vector<1x1024xi1>
    %cst_35 = arith.constant 0.000000e+00 : f32
    %88 = vector.shape_cast %87 : vector<1x1024xi1> to vector<1x1024xi1>
    %89 = vector.broadcast %88 : vector<1x1024xi1> to vector<4x1024xi1>
    %90 = vector.broadcast %cst_35 : f32 to vector<4x1024xf32>
    %91 = arith.select %89, %82, %90 : vector<4x1024xi1>, vector<4x1024xf32>
    %c0_36 = arith.constant 0 : index
    %c71 = arith.constant 71 : index
    %92 = vector.load %arg10[%c0_36, %c71] : memref<8x1280xf32, #tpu.memory_space<vmem>>, vector<8x1024xf32>
    %93 = vector.extract_strided_slice %92 {offsets = [0, 0], sizes = [4, 1024], strides = [1, 1]} : vector<8x1024xf32> to vector<4x1024xf32>
    %c1_i32_37 = arith.constant 1 : i32
    %94 = vector.broadcast %c1_i32_37 : i32 to vector<1x1024xi32>
    %95 = arith.cmpi sge, %15, %94 : vector<1x1024xi32>
    %c56_i32 = arith.constant 56 : i32
    %96 = vector.broadcast %c56_i32 : i32 to vector<1x1024xi32>
    %97 = arith.cmpi slt, %17, %96 : vector<1x1024xi32>
    %c64_i32_38 = arith.constant 64 : i32
    %98 = vector.broadcast %c64_i32_38 : i32 to vector<1x1024xi32>
    %99 = arith.cmpi sge, %19, %98 : vector<1x1024xi32>
    %100 = arith.andi %95, %97 : vector<1x1024xi1>
    %101 = arith.andi %100, %99 : vector<1x1024xi1>
    %cst_39 = arith.constant 0.000000e+00 : f32
    %102 = vector.shape_cast %101 : vector<1x1024xi1> to vector<1x1024xi1>
    %103 = vector.broadcast %102 : vector<1x1024xi1> to vector<4x1024xi1>
    %104 = vector.broadcast %cst_39 : f32 to vector<4x1024xf32>
    %105 = arith.select %103, %93, %104 : vector<4x1024xi1>, vector<4x1024xf32>
    %c0_40 = arith.constant 0 : index
    %c72 = arith.constant 72 : index
    %106 = vector.load %arg10[%c0_40, %c72] : memref<8x1280xf32, #tpu.memory_space<vmem>>, vector<8x1024xf32>
    %107 = vector.extract_strided_slice %106 {offsets = [0, 0], sizes = [4, 1024], strides = [1, 1]} : vector<8x1024xf32> to vector<4x1024xf32>
    %c56_i32_41 = arith.constant 56 : i32
    %108 = vector.broadcast %c56_i32_41 : i32 to vector<1x1024xi32>
    %109 = arith.cmpi slt, %17, %108 : vector<1x1024xi32>
    %c64_i32_42 = arith.constant 64 : i32
    %110 = vector.broadcast %c64_i32_42 : i32 to vector<1x1024xi32>
    %111 = arith.cmpi sge, %19, %110 : vector<1x1024xi32>
    %112 = arith.andi %109, %111 : vector<1x1024xi1>
    %cst_43 = arith.constant 0.000000e+00 : f32
    %113 = vector.shape_cast %112 : vector<1x1024xi1> to vector<1x1024xi1>
    %114 = vector.broadcast %113 : vector<1x1024xi1> to vector<4x1024xi1>
    %115 = vector.broadcast %cst_43 : f32 to vector<4x1024xf32>
    %116 = arith.select %114, %107, %115 : vector<4x1024xi1>, vector<4x1024xf32>
    %117 = tpu.concatenate %80, %91, %105, %116 in 0 : vector<4x1024xf32>, vector<4x1024xf32>, vector<4x1024xf32>, vector<4x1024xf32> -> vector<16x1024xf32>
    %118 = arith.truncf %117 : vector<16x1024xf32> to vector<16x1024xbf16>
    %c16 = arith.constant 16 : index
    %c0_44 = arith.constant 0 : index
    %119 = vector.load %arg11[%c16, %c0_44] : memref<112x1024xbf16, #tpu.memory_space<vmem>>, vector<16x1024xbf16>
    tpu.vector_store %arg11[%c16, %c0_44], %118 {strides = array<i32>} : memref<112x1024xbf16, #tpu.memory_space<vmem>>, vector<16x1024xbf16>,
    %c0_45 = arith.constant 0 : index
    %c73 = arith.constant 73 : index
    %120 = vector.load %arg10[%c0_45, %c73] : memref<8x1280xf32, #tpu.memory_space<vmem>>, vector<8x1024xf32>
    %121 = vector.extract_strided_slice %120 {offsets = [0, 0], sizes = [4, 1024], strides = [1, 1]} : vector<8x1024xf32> to vector<4x1024xf32>
    %c7_i32_46 = arith.constant 7 : i32
    %122 = vector.broadcast %c7_i32_46 : i32 to vector<1x1024xi32>
    %123 = arith.cmpi slt, %15, %122 : vector<1x1024xi32>
    %c56_i32_47 = arith.constant 56 : i32
    %124 = vector.broadcast %c56_i32_47 : i32 to vector<1x1024xi32>
    %125 = arith.cmpi slt, %17, %124 : vector<1x1024xi32>
    %c64_i32_48 = arith.constant 64 : i32
    %126 = vector.broadcast %c64_i32_48 : i32 to vector<1x1024xi32>
    %127 = arith.cmpi sge, %19, %126 : vector<1x1024xi32>
    %128 = arith.andi %123, %125 : vector<1x1024xi1>
    %129 = arith.andi %128, %127 : vector<1x1024xi1>
    %cst_49 = arith.constant 0.000000e+00 : f32
    %130 = vector.shape_cast %129 : vector<1x1024xi1> to vector<1x1024xi1>
    %131 = vector.broadcast %130 : vector<1x1024xi1> to vector<4x1024xi1>
    %132 = vector.broadcast %cst_49 : f32 to vector<4x1024xf32>
    %133 = arith.select %131, %121, %132 : vector<4x1024xi1>, vector<4x1024xf32>
    %c0_50 = arith.constant 0 : index
    %c119 = arith.constant 119 : index
    %134 = vector.load %arg10[%c0_50, %c119] : memref<8x1280xf32, #tpu.memory_space<vmem>>, vector<8x1024xf32>
    %135 = vector.extract_strided_slice %134 {offsets = [0, 0], sizes = [4, 1024], strides = [1, 1]} : vector<8x1024xf32> to vector<4x1024xf32>
    %c1_i32_51 = arith.constant 1 : i32
    %136 = vector.broadcast %c1_i32_51 : i32 to vector<1x1024xi32>
    %137 = arith.cmpi sge, %15, %136 : vector<1x1024xi32>
    %c8_i32_52 = arith.constant 8 : i32
    %138 = vector.broadcast %c8_i32_52 : i32 to vector<1x1024xi32>
    %139 = arith.cmpi sge, %17, %138 : vector<1x1024xi32>
    %140 = arith.andi %137, %139 : vector<1x1024xi1>
    %cst_53 = arith.constant 0.000000e+00 : f32
    %141 = vector.shape_cast %140 : vector<1x1024xi1> to vector<1x1024xi1>
    %142 = vector.broadcast %141 : vector<1x1024xi1> to vector<4x1024xi1>
    %143 = vector.broadcast %cst_53 : f32 to vector<4x1024xf32>
    %144 = arith.select %142, %135, %143 : vector<4x1024xi1>, vector<4x1024xf32>
    %c0_54 = arith.constant 0 : index
    %c120 = arith.constant 120 : index
    %145 = vector.load %arg10[%c0_54, %c120] : memref<8x1280xf32, #tpu.memory_space<vmem>>, vector<8x1024xf32>
    %146 = vector.extract_strided_slice %145 {offsets = [0, 0], sizes = [4, 1024], strides = [1, 1]} : vector<8x1024xf32> to vector<4x1024xf32>
    %c8_i32_55 = arith.constant 8 : i32
    %147 = vector.broadcast %c8_i32_55 : i32 to vector<1x1024xi32>
    %148 = arith.cmpi sge, %17, %147 : vector<1x1024xi32>
    %cst_56 = arith.constant 0.000000e+00 : f32
    %149 = vector.shape_cast %148 : vector<1x1024xi1> to vector<1x1024xi1>
    %150 = vector.broadcast %149 : vector<1x1024xi1> to vector<4x1024xi1>
    %151 = vector.broadcast %cst_56 : f32 to vector<4x1024xf32>
    %152 = arith.select %150, %146, %151 : vector<4x1024xi1>, vector<4x1024xf32>
    %c0_57 = arith.constant 0 : index
    %c121 = arith.constant 121 : index
    %153 = vector.load %arg10[%c0_57, %c121] : memref<8x1280xf32, #tpu.memory_space<vmem>>, vector<8x1024xf32>
    %154 = vector.extract_strided_slice %153 {offsets = [0, 0], sizes = [4, 1024], strides = [1, 1]} : vector<8x1024xf32> to vector<4x1024xf32>
    %c7_i32_58 = arith.constant 7 : i32
    %155 = vector.broadcast %c7_i32_58 : i32 to vector<1x1024xi32>
    %156 = arith.cmpi slt, %15, %155 : vector<1x1024xi32>
    %c8_i32_59 = arith.constant 8 : i32
    %157 = vector.broadcast %c8_i32_59 : i32 to vector<1x1024xi32>
    %158 = arith.cmpi sge, %17, %157 : vector<1x1024xi32>
    %159 = arith.andi %156, %158 : vector<1x1024xi1>
    %cst_60 = arith.constant 0.000000e+00 : f32
    %160 = vector.shape_cast %159 : vector<1x1024xi1> to vector<1x1024xi1>
    %161 = vector.broadcast %160 : vector<1x1024xi1> to vector<4x1024xi1>
    %162 = vector.broadcast %cst_60 : f32 to vector<4x1024xf32>
    %163 = arith.select %161, %154, %162 : vector<4x1024xi1>, vector<4x1024xf32>
    %164 = tpu.concatenate %133, %144, %152, %163 in 0 : vector<4x1024xf32>, vector<4x1024xf32>, vector<4x1024xf32>, vector<4x1024xf32> -> vector<16x1024xf32>
    %165 = arith.truncf %164 : vector<16x1024xf32> to vector<16x1024xbf16>
    %c32 = arith.constant 32 : index
    %c0_61 = arith.constant 0 : index
    %166 = vector.load %arg11[%c32, %c0_61] : memref<112x1024xbf16, #tpu.memory_space<vmem>>, vector<16x1024xbf16>
    tpu.vector_store %arg11[%c32, %c0_61], %165 {strides = array<i32>} : memref<112x1024xbf16, #tpu.memory_space<vmem>>, vector<16x1024xbf16>,
    %c0_62 = arith.constant 0 : index
    %c127 = arith.constant 127 : index
    %167 = vector.load %arg10[%c0_62, %c127] : memref<8x1280xf32, #tpu.memory_space<vmem>>, vector<8x1024xf32>
    %168 = vector.extract_strided_slice %167 {offsets = [0, 0], sizes = [4, 1024], strides = [1, 1]} : vector<8x1024xf32> to vector<4x1024xf32>
    %c1_i32_63 = arith.constant 1 : i32
    %169 = vector.broadcast %c1_i32_63 : i32 to vector<1x1024xi32>
    %170 = arith.cmpi sge, %15, %169 : vector<1x1024xi32>
    %cst_64 = arith.constant 0.000000e+00 : f32
    %171 = vector.shape_cast %170 : vector<1x1024xi1> to vector<1x1024xi1>
    %172 = vector.broadcast %171 : vector<1x1024xi1> to vector<4x1024xi1>
    %173 = vector.broadcast %cst_64 : f32 to vector<4x1024xf32>
    %174 = arith.select %172, %168, %173 : vector<4x1024xi1>, vector<4x1024xf32>
    %c0_65 = arith.constant 0 : index
    %c128_66 = arith.constant 128 : index
    %175 = vector.load %arg10[%c0_65, %c128_66] : memref<8x1280xf32, #tpu.memory_space<vmem>>, vector<8x1024xf32>
    %176 = vector.extract_strided_slice %175 {offsets = [0, 0], sizes = [4, 1024], strides = [1, 1]} : vector<8x1024xf32> to vector<4x1024xf32>
    %c0_67 = arith.constant 0 : index
    %c129 = arith.constant 129 : index
    %177 = vector.load %arg10[%c0_67, %c129] : memref<8x1280xf32, #tpu.memory_space<vmem>>, vector<8x1024xf32>
    %178 = vector.extract_strided_slice %177 {offsets = [0, 0], sizes = [4, 1024], strides = [1, 1]} : vector<8x1024xf32> to vector<4x1024xf32>
    %c7_i32_68 = arith.constant 7 : i32
    %179 = vector.broadcast %c7_i32_68 : i32 to vector<1x1024xi32>
    %180 = arith.cmpi slt, %15, %179 : vector<1x1024xi32>
    %cst_69 = arith.constant 0.000000e+00 : f32
    %181 = vector.shape_cast %180 : vector<1x1024xi1> to vector<1x1024xi1>
    %182 = vector.broadcast %181 : vector<1x1024xi1> to vector<4x1024xi1>
    %183 = vector.broadcast %cst_69 : f32 to vector<4x1024xf32>
    %184 = arith.select %182, %178, %183 : vector<4x1024xi1>, vector<4x1024xf32>
    %c0_70 = arith.constant 0 : index
    %c135 = arith.constant 135 : index
    %185 = vector.load %arg10[%c0_70, %c135] : memref<8x1280xf32, #tpu.memory_space<vmem>>, vector<8x1024xf32>
    %186 = vector.extract_strided_slice %185 {offsets = [0, 0], sizes = [4, 1024], strides = [1, 1]} : vector<8x1024xf32> to vector<4x1024xf32>
    %c1_i32_71 = arith.constant 1 : i32
    %187 = vector.broadcast %c1_i32_71 : i32 to vector<1x1024xi32>
    %188 = arith.cmpi sge, %15, %187 : vector<1x1024xi32>
    %c56_i32_72 = arith.constant 56 : i32
    %189 = vector.broadcast %c56_i32_72 : i32 to vector<1x1024xi32>
    %190 = arith.cmpi slt, %17, %189 : vector<1x1024xi32>
    %191 = arith.andi %188, %190 : vector<1x1024xi1>
    %cst_73 = arith.constant 0.000000e+00 : f32
    %192 = vector.shape_cast %191 : vector<1x1024xi1> to vector<1x1024xi1>
    %193 = vector.broadcast %192 : vector<1x1024xi1> to vector<4x1024xi1>
    %194 = vector.broadcast %cst_73 : f32 to vector<4x1024xf32>
    %195 = arith.select %193, %186, %194 : vector<4x1024xi1>, vector<4x1024xf32>
    %196 = tpu.concatenate %174, %176, %184, %195 in 0 : vector<4x1024xf32>, vector<4x1024xf32>, vector<4x1024xf32>, vector<4x1024xf32> -> vector<16x1024xf32>
    %197 = arith.truncf %196 : vector<16x1024xf32> to vector<16x1024xbf16>
    %c48 = arith.constant 48 : index
    %c0_74 = arith.constant 0 : index
    %198 = vector.load %arg11[%c48, %c0_74] : memref<112x1024xbf16, #tpu.memory_space<vmem>>, vector<16x1024xbf16>
    tpu.vector_store %arg11[%c48, %c0_74], %197 {strides = array<i32>} : memref<112x1024xbf16, #tpu.memory_space<vmem>>, vector<16x1024xbf16>,
    %c0_75 = arith.constant 0 : index
    %c136 = arith.constant 136 : index
    %199 = vector.load %arg10[%c0_75, %c136] : memref<8x1280xf32, #tpu.memory_space<vmem>>, vector<8x1024xf32>
    %200 = vector.extract_strided_slice %199 {offsets = [0, 0], sizes = [4, 1024], strides = [1, 1]} : vector<8x1024xf32> to vector<4x1024xf32>
    %c56_i32_76 = arith.constant 56 : i32
    %201 = vector.broadcast %c56_i32_76 : i32 to vector<1x1024xi32>
    %202 = arith.cmpi slt, %17, %201 : vector<1x1024xi32>
    %cst_77 = arith.constant 0.000000e+00 : f32
    %203 = vector.shape_cast %202 : vector<1x1024xi1> to vector<1x1024xi1>
    %204 = vector.broadcast %203 : vector<1x1024xi1> to vector<4x1024xi1>
    %205 = vector.broadcast %cst_77 : f32 to vector<4x1024xf32>
    %206 = arith.select %204, %200, %205 : vector<4x1024xi1>, vector<4x1024xf32>
    %c0_78 = arith.constant 0 : index
    %c137 = arith.constant 137 : index
    %207 = vector.load %arg10[%c0_78, %c137] : memref<8x1280xf32, #tpu.memory_space<vmem>>, vector<8x1024xf32>
    %208 = vector.extract_strided_slice %207 {offsets = [0, 0], sizes = [4, 1024], strides = [1, 1]} : vector<8x1024xf32> to vector<4x1024xf32>
    %c7_i32_79 = arith.constant 7 : i32
    %209 = vector.broadcast %c7_i32_79 : i32 to vector<1x1024xi32>
    %210 = arith.cmpi slt, %15, %209 : vector<1x1024xi32>
    %c56_i32_80 = arith.constant 56 : i32
    %211 = vector.broadcast %c56_i32_80 : i32 to vector<1x1024xi32>
    %212 = arith.cmpi slt, %17, %211 : vector<1x1024xi32>
    %213 = arith.andi %210, %212 : vector<1x1024xi1>
    %cst_81 = arith.constant 0.000000e+00 : f32
    %214 = vector.shape_cast %213 : vector<1x1024xi1> to vector<1x1024xi1>
    %215 = vector.broadcast %214 : vector<1x1024xi1> to vector<4x1024xi1>
    %216 = vector.broadcast %cst_81 : f32 to vector<4x1024xf32>
    %217 = arith.select %215, %208, %216 : vector<4x1024xi1>, vector<4x1024xf32>
    %c0_82 = arith.constant 0 : index
    %c183 = arith.constant 183 : index
    %218 = vector.load %arg10[%c0_82, %c183] : memref<8x1280xf32, #tpu.memory_space<vmem>>, vector<8x1024xf32>
    %219 = vector.extract_strided_slice %218 {offsets = [0, 0], sizes = [4, 1024], strides = [1, 1]} : vector<8x1024xf32> to vector<4x1024xf32>
    %c1_i32_83 = arith.constant 1 : i32
    %220 = vector.broadcast %c1_i32_83 : i32 to vector<1x1024xi32>
    %221 = arith.cmpi sge, %15, %220 : vector<1x1024xi32>
    %c8_i32_84 = arith.constant 8 : i32
    %222 = vector.broadcast %c8_i32_84 : i32 to vector<1x1024xi32>
    %223 = arith.cmpi sge, %17, %222 : vector<1x1024xi32>
    %c448_i32 = arith.constant 448 : i32
    %224 = vector.broadcast %c448_i32 : i32 to vector<1x1024xi32>
    %225 = arith.cmpi slt, %19, %224 : vector<1x1024xi32>
    %226 = arith.andi %221, %223 : vector<1x1024xi1>
    %227 = arith.andi %226, %225 : vector<1x1024xi1>
    %cst_85 = arith.constant 0.000000e+00 : f32
    %228 = vector.shape_cast %227 : vector<1x1024xi1> to vector<1x1024xi1>
    %229 = vector.broadcast %228 : vector<1x1024xi1> to vector<4x1024xi1>
    %230 = vector.broadcast %cst_85 : f32 to vector<4x1024xf32>
    %231 = arith.select %229, %219, %230 : vector<4x1024xi1>, vector<4x1024xf32>
    %c0_86 = arith.constant 0 : index
    %c184 = arith.constant 184 : index
    %232 = vector.load %arg10[%c0_86, %c184] : memref<8x1280xf32, #tpu.memory_space<vmem>>, vector<8x1024xf32>
    %233 = vector.extract_strided_slice %232 {offsets = [0, 0], sizes = [4, 1024], strides = [1, 1]} : vector<8x1024xf32> to vector<4x1024xf32>
    %c8_i32_87 = arith.constant 8 : i32
    %234 = vector.broadcast %c8_i32_87 : i32 to vector<1x1024xi32>
    %235 = arith.cmpi sge, %17, %234 : vector<1x1024xi32>
    %c448_i32_88 = arith.constant 448 : i32
    %236 = vector.broadcast %c448_i32_88 : i32 to vector<1x1024xi32>
    %237 = arith.cmpi slt, %19, %236 : vector<1x1024xi32>
    %238 = arith.andi %235, %237 : vector<1x1024xi1>
    %cst_89 = arith.constant 0.000000e+00 : f32
    %239 = vector.shape_cast %238 : vector<1x1024xi1> to vector<1x1024xi1>
    %240 = vector.broadcast %239 : vector<1x1024xi1> to vector<4x1024xi1>
    %241 = vector.broadcast %cst_89 : f32 to vector<4x1024xf32>
    %242 = arith.select %240, %233, %241 : vector<4x1024xi1>, vector<4x1024xf32>
    %243 = tpu.concatenate %206, %217, %231, %242 in 0 : vector<4x1024xf32>, vector<4x1024xf32>, vector<4x1024xf32>, vector<4x1024xf32> -> vector<16x1024xf32>
    %244 = arith.truncf %243 : vector<16x1024xf32> to vector<16x1024xbf16>
    %c64_90 = arith.constant 64 : index
    %c0_91 = arith.constant 0 : index
    %245 = vector.load %arg11[%c64_90, %c0_91] : memref<112x1024xbf16, #tpu.memory_space<vmem>>, vector<16x1024xbf16>
    tpu.vector_store %arg11[%c64_90, %c0_91], %244 {strides = array<i32>} : memref<112x1024xbf16, #tpu.memory_space<vmem>>, vector<16x1024xbf16>,
    %c0_92 = arith.constant 0 : index
    %c185 = arith.constant 185 : index
    %246 = vector.load %arg10[%c0_92, %c185] : memref<8x1280xf32, #tpu.memory_space<vmem>>, vector<8x1024xf32>
    %247 = vector.extract_strided_slice %246 {offsets = [0, 0], sizes = [4, 1024], strides = [1, 1]} : vector<8x1024xf32> to vector<4x1024xf32>
    %c7_i32_93 = arith.constant 7 : i32
    %248 = vector.broadcast %c7_i32_93 : i32 to vector<1x1024xi32>
    %249 = arith.cmpi slt, %15, %248 : vector<1x1024xi32>
    %c8_i32_94 = arith.constant 8 : i32
    %250 = vector.broadcast %c8_i32_94 : i32 to vector<1x1024xi32>
    %251 = arith.cmpi sge, %17, %250 : vector<1x1024xi32>
    %c448_i32_95 = arith.constant 448 : i32
    %252 = vector.broadcast %c448_i32_95 : i32 to vector<1x1024xi32>
    %253 = arith.cmpi slt, %19, %252 : vector<1x1024xi32>
    %254 = arith.andi %249, %251 : vector<1x1024xi1>
    %255 = arith.andi %254, %253 : vector<1x1024xi1>
    %cst_96 = arith.constant 0.000000e+00 : f32
    %256 = vector.shape_cast %255 : vector<1x1024xi1> to vector<1x1024xi1>
    %257 = vector.broadcast %256 : vector<1x1024xi1> to vector<4x1024xi1>
    %258 = vector.broadcast %cst_96 : f32 to vector<4x1024xf32>
    %259 = arith.select %257, %247, %258 : vector<4x1024xi1>, vector<4x1024xf32>
    %c0_97 = arith.constant 0 : index
    %c191 = arith.constant 191 : index
    %260 = vector.load %arg10[%c0_97, %c191] : memref<8x1280xf32, #tpu.memory_space<vmem>>, vector<8x1024xf32>
    %261 = vector.extract_strided_slice %260 {offsets = [0, 0], sizes = [4, 1024], strides = [1, 1]} : vector<8x1024xf32> to vector<4x1024xf32>
    %c1_i32_98 = arith.constant 1 : i32
    %262 = vector.broadcast %c1_i32_98 : i32 to vector<1x1024xi32>
    %263 = arith.cmpi sge, %15, %262 : vector<1x1024xi32>
    %c448_i32_99 = arith.constant 448 : i32
    %264 = vector.broadcast %c448_i32_99 : i32 to vector<1x1024xi32>
    %265 = arith.cmpi slt, %19, %264 : vector<1x1024xi32>
    %266 = arith.andi %263, %265 : vector<1x1024xi1>
    %cst_100 = arith.constant 0.000000e+00 : f32
    %267 = vector.shape_cast %266 : vector<1x1024xi1> to vector<1x1024xi1>
    %268 = vector.broadcast %267 : vector<1x1024xi1> to vector<4x1024xi1>
    %269 = vector.broadcast %cst_100 : f32 to vector<4x1024xf32>
    %270 = arith.select %268, %261, %269 : vector<4x1024xi1>, vector<4x1024xf32>
    %c0_101 = arith.constant 0 : index
    %c192 = arith.constant 192 : index
    %271 = vector.load %arg10[%c0_101, %c192] : memref<8x1280xf32, #tpu.memory_space<vmem>>, vector<8x1024xf32>
    %272 = vector.extract_strided_slice %271 {offsets = [0, 0], sizes = [4, 1024], strides = [1, 1]} : vector<8x1024xf32> to vector<4x1024xf32>
    %c448_i32_102 = arith.constant 448 : i32
    %273 = vector.broadcast %c448_i32_102 : i32 to vector<1x1024xi32>
    %274 = arith.cmpi slt, %19, %273 : vector<1x1024xi32>
    %cst_103 = arith.constant 0.000000e+00 : f32
    %275 = vector.shape_cast %274 : vector<1x1024xi1> to vector<1x1024xi1>
    %276 = vector.broadcast %275 : vector<1x1024xi1> to vector<4x1024xi1>
    %277 = vector.broadcast %cst_103 : f32 to vector<4x1024xf32>
    %278 = arith.select %276, %272, %277 : vector<4x1024xi1>, vector<4x1024xf32>
    %c0_104 = arith.constant 0 : index
    %c193 = arith.constant 193 : index
    %279 = vector.load %arg10[%c0_104, %c193] : memref<8x1280xf32, #tpu.memory_space<vmem>>, vector<8x1024xf32>
    %280 = vector.extract_strided_slice %279 {offsets = [0, 0], sizes = [4, 1024], strides = [1, 1]} : vector<8x1024xf32> to vector<4x1024xf32>
    %c7_i32_105 = arith.constant 7 : i32
    %281 = vector.broadcast %c7_i32_105 : i32 to vector<1x1024xi32>
    %282 = arith.cmpi slt, %15, %281 : vector<1x1024xi32>
    %c448_i32_106 = arith.constant 448 : i32
    %283 = vector.broadcast %c448_i32_106 : i32 to vector<1x1024xi32>
    %284 = arith.cmpi slt, %19, %283 : vector<1x1024xi32>
    %285 = arith.andi %282, %284 : vector<1x1024xi1>
    %cst_107 = arith.constant 0.000000e+00 : f32
    %286 = vector.shape_cast %285 : vector<1x1024xi1> to vector<1x1024xi1>
    %287 = vector.broadcast %286 : vector<1x1024xi1> to vector<4x1024xi1>
    %288 = vector.broadcast %cst_107 : f32 to vector<4x1024xf32>
    %289 = arith.select %287, %280, %288 : vector<4x1024xi1>, vector<4x1024xf32>
    %290 = tpu.concatenate %259, %270, %278, %289 in 0 : vector<4x1024xf32>, vector<4x1024xf32>, vector<4x1024xf32>, vector<4x1024xf32> -> vector<16x1024xf32>
    %291 = arith.truncf %290 : vector<16x1024xf32> to vector<16x1024xbf16>
    %c80 = arith.constant 80 : index
    %c0_108 = arith.constant 0 : index
    %292 = vector.load %arg11[%c80, %c0_108] : memref<112x1024xbf16, #tpu.memory_space<vmem>>, vector<16x1024xbf16>
    tpu.vector_store %arg11[%c80, %c0_108], %291 {strides = array<i32>} : memref<112x1024xbf16, #tpu.memory_space<vmem>>, vector<16x1024xbf16>,
    %c0_109 = arith.constant 0 : index
    %c199 = arith.constant 199 : index
    %293 = vector.load %arg10[%c0_109, %c199] : memref<8x1280xf32, #tpu.memory_space<vmem>>, vector<8x1024xf32>
    %294 = vector.extract_strided_slice %293 {offsets = [0, 0], sizes = [4, 1024], strides = [1, 1]} : vector<8x1024xf32> to vector<4x1024xf32>
    %c1_i32_110 = arith.constant 1 : i32
    %295 = vector.broadcast %c1_i32_110 : i32 to vector<1x1024xi32>
    %296 = arith.cmpi sge, %15, %295 : vector<1x1024xi32>
    %c56_i32_111 = arith.constant 56 : i32
    %297 = vector.broadcast %c56_i32_111 : i32 to vector<1x1024xi32>
    %298 = arith.cmpi slt, %17, %297 : vector<1x1024xi32>
    %c448_i32_112 = arith.constant 448 : i32
    %299 = vector.broadcast %c448_i32_112 : i32 to vector<1x1024xi32>
    %300 = arith.cmpi slt, %19, %299 : vector<1x1024xi32>
    %301 = arith.andi %296, %298 : vector<1x1024xi1>
    %302 = arith.andi %301, %300 : vector<1x1024xi1>
    %cst_113 = arith.constant 0.000000e+00 : f32
    %303 = vector.shape_cast %302 : vector<1x1024xi1> to vector<1x1024xi1>
    %304 = vector.broadcast %303 : vector<1x1024xi1> to vector<4x1024xi1>
    %305 = vector.broadcast %cst_113 : f32 to vector<4x1024xf32>
    %306 = arith.select %304, %294, %305 : vector<4x1024xi1>, vector<4x1024xf32>
    %c0_114 = arith.constant 0 : index
    %c200 = arith.constant 200 : index
    %307 = vector.load %arg10[%c0_114, %c200] : memref<8x1280xf32, #tpu.memory_space<vmem>>, vector<8x1024xf32>
    %308 = vector.extract_strided_slice %307 {offsets = [0, 0], sizes = [4, 1024], strides = [1, 1]} : vector<8x1024xf32> to vector<4x1024xf32>
    %c56_i32_115 = arith.constant 56 : i32
    %309 = vector.broadcast %c56_i32_115 : i32 to vector<1x1024xi32>
    %310 = arith.cmpi slt, %17, %309 : vector<1x1024xi32>
    %c448_i32_116 = arith.constant 448 : i32
    %311 = vector.broadcast %c448_i32_116 : i32 to vector<1x1024xi32>
    %312 = arith.cmpi slt, %19, %311 : vector<1x1024xi32>
    %313 = arith.andi %310, %312 : vector<1x1024xi1>
    %cst_117 = arith.constant 0.000000e+00 : f32
    %314 = vector.shape_cast %313 : vector<1x1024xi1> to vector<1x1024xi1>
    %315 = vector.broadcast %314 : vector<1x1024xi1> to vector<4x1024xi1>
    %316 = vector.broadcast %cst_117 : f32 to vector<4x1024xf32>
    %317 = arith.select %315, %308, %316 : vector<4x1024xi1>, vector<4x1024xf32>
    %c0_118 = arith.constant 0 : index
    %c201 = arith.constant 201 : index
    %318 = vector.load %arg10[%c0_118, %c201] : memref<8x1280xf32, #tpu.memory_space<vmem>>, vector<8x1024xf32>
    %319 = vector.extract_strided_slice %318 {offsets = [0, 0], sizes = [4, 1024], strides = [1, 1]} : vector<8x1024xf32> to vector<4x1024xf32>
    %c7_i32_119 = arith.constant 7 : i32
    %320 = vector.broadcast %c7_i32_119 : i32 to vector<1x1024xi32>
    %321 = arith.cmpi slt, %15, %320 : vector<1x1024xi32>
    %c56_i32_120 = arith.constant 56 : i32
    %322 = vector.broadcast %c56_i32_120 : i32 to vector<1x1024xi32>
    %323 = arith.cmpi slt, %17, %322 : vector<1x1024xi32>
    %c448_i32_121 = arith.constant 448 : i32
    %324 = vector.broadcast %c448_i32_121 : i32 to vector<1x1024xi32>
    %325 = arith.cmpi slt, %19, %324 : vector<1x1024xi32>
    %326 = arith.andi %321, %323 : vector<1x1024xi1>
    %327 = arith.andi %326, %325 : vector<1x1024xi1>
    %cst_122 = arith.constant 0.000000e+00 : f32
    %328 = vector.shape_cast %327 : vector<1x1024xi1> to vector<1x1024xi1>
    %329 = vector.broadcast %328 : vector<1x1024xi1> to vector<4x1024xi1>
    %330 = vector.broadcast %cst_122 : f32 to vector<4x1024xf32>
    %331 = arith.select %329, %319, %330 : vector<4x1024xi1>, vector<4x1024xf32>
    %332 = tpu.concatenate %306, %317, %331 in 0 : vector<4x1024xf32>, vector<4x1024xf32>, vector<4x1024xf32> -> vector<12x1024xf32>
    %cst_123 = arith.constant 0.000000e+00 : f32
    %333 = vector.broadcast %cst_123 : f32 to vector<4x1024xf32>
    %334 = tpu.concatenate %332, %333 in 0 : vector<12x1024xf32>, vector<4x1024xf32> -> vector<16x1024xf32>
    %335 = arith.truncf %334 : vector<16x1024xf32> to vector<16x1024xbf16>
    %c96 = arith.constant 96 : index
    %c0_124 = arith.constant 0 : index
    %336 = vector.load %arg11[%c96, %c0_124] : memref<112x1024xbf16, #tpu.memory_space<vmem>>, vector<16x1024xbf16>
    tpu.vector_store %arg11[%c96, %c0_124], %335 {strides = array<i32>} : memref<112x1024xbf16, #tpu.memory_space<vmem>>, vector<16x1024xbf16>,
    %c0_125 = arith.constant 0 : index
    %c0_126 = arith.constant 0 : index
    %337 = vector.load %arg3[%c0_125, %c0_126] : memref<8x112xbf16, #tpu.memory_space<vmem>>, vector<8x112xbf16>
    %c0_127 = arith.constant 0 : index
    %c0_128 = arith.constant 0 : index
    %338 = vector.load %arg11[%c0_127, %c0_128] : memref<112x1024xbf16, #tpu.memory_space<vmem>>, vector<112x1024xbf16>
    %cst_129 = arith.constant dense<0.000000e+00> : vector<8x1024xf32>
    %339 = tpu.matmul %337, %338, %cst_129 {dimension_numbers = #tpu.dot_dimension_numbers<[1], [0], [0], [1], [0, 0, 1, 1], [], []>} : vector<8x112xbf16>, vector<112x1024xbf16>, vector<8x1024xf32> -> vector<8x1024xf32>
    %c0_130 = arith.constant 0 : index
    %c0_131 = arith.constant 0 : index
    %340 = vector.load %arg4[%c0_130, %c0_131] : memref<8x1xf32, #tpu.memory_space<vmem>>, vector<8x1xf32>
    %341 = vector.broadcast %340 : vector<8x1xf32> to vector<8x1024xf32>
    %342 = arith.addf %339, %341 : vector<8x1024xf32>
    %cst_132 = arith.constant 0.000000e+00 : f32
    %343 = vector.broadcast %cst_132 : f32 to vector<8x1024xf32>
    %344 = arith.maximumf %342, %343 : vector<8x1024xf32>
    %c0_133 = arith.constant 0 : index
    %c0_134 = arith.constant 0 : index
    %345 = vector.load %arg5[%c0_133, %c0_134] : memref<8x8xf32, #tpu.memory_space<vmem>>, vector<8x8xf32>
    %cst_135 = arith.constant dense<0.000000e+00> : vector<8x1024xf32>
    %346 = tpu.matmul %345, %344, %cst_135 {dimension_numbers = #tpu.dot_dimension_numbers<[1], [0], [0], [1], [0, 0, 1, 1], [], []>} : vector<8x8xf32>, vector<8x1024xf32>, vector<8x1024xf32> -> vector<8x1024xf32>
    %c0_136 = arith.constant 0 : index
    %c0_137 = arith.constant 0 : index
    %347 = vector.load %arg6[%c0_136, %c0_137] : memref<8x1xf32, #tpu.memory_space<vmem>>, vector<8x1xf32>
    %348 = vector.broadcast %347 : vector<8x1xf32> to vector<8x1024xf32>
    %349 = arith.addf %346, %348 : vector<8x1024xf32>
    %cst_138 = arith.constant dense<0.000000e+00> : vector<8xf32>
    %350 = vector.multi_reduction <add>, %349, %cst_138 [1] : vector<8x1024xf32> to vector<8xf32>
    %351 = vector.shape_cast %350 : vector<8xf32> to vector<8x1xf32>
    %cst_139 = arith.constant 9.765625E-4 : f32
    %352 = vector.broadcast %cst_139 : f32 to vector<8x1xf32>
    %353 = arith.mulf %351, %352 : vector<8x1xf32>
    %354 = arith.mulf %349, %349 : vector<8x1024xf32>
    %cst_140 = arith.constant dense<0.000000e+00> : vector<8xf32>
    %355 = vector.multi_reduction <add>, %354, %cst_140 [1] : vector<8x1024xf32> to vector<8xf32>
    %356 = vector.shape_cast %355 : vector<8xf32> to vector<8x1xf32>
    %cst_141 = arith.constant 9.765625E-4 : f32
    %357 = vector.broadcast %cst_141 : f32 to vector<8x1xf32>
    %358 = arith.mulf %356, %357 : vector<8x1xf32>
    %359 = arith.mulf %353, %353 : vector<8x1xf32>
    %360 = arith.subf %358, %359 : vector<8x1xf32>
    %c0_142 = arith.constant 0 : index
    %c0_143 = arith.constant 0 : index
    %361 = vector.load %arg7[%c0_142, %c0_143] : memref<8x1xf32, #tpu.memory_space<vmem>>, vector<8x1xf32>
    %cst_144 = arith.constant 9.99999974E-6 : f32
    %362 = vector.broadcast %cst_144 : f32 to vector<8x1xf32>
    %363 = arith.addf %360, %362 : vector<8x1xf32>
    %364 = math.rsqrt %363 : vector<8x1xf32>
    %365 = arith.mulf %361, %364 : vector<8x1xf32>
    %c0_145 = arith.constant 0 : index
    %c0_146 = arith.constant 0 : index
    %366 = vector.load %arg8[%c0_145, %c0_146] : memref<8x1xf32, #tpu.memory_space<vmem>>, vector<8x1xf32>
    %367 = arith.mulf %353, %365 : vector<8x1xf32>
    %368 = arith.subf %366, %367 : vector<8x1xf32>
    %369 = vector.broadcast %365 : vector<8x1xf32> to vector<8x1024xf32>
    %370 = arith.mulf %349, %369 : vector<8x1024xf32>
    %371 = vector.broadcast %368 : vector<8x1xf32> to vector<8x1024xf32>
    %372 = arith.addf %370, %371 : vector<8x1024xf32>
    %c0_147 = arith.constant 0 : index
    %c0_148 = arith.constant 0 : index
    %373 = vector.load %arg0[%c0_147, %c0_148] : memref<8x1024xf32, #tpu.memory_space<vmem>>, vector<8x1024xf32>
    %374 = arith.addf %372, %373 : vector<8x1024xf32>
    %cst_149 = arith.constant 0.000000e+00 : f32
    %375 = vector.broadcast %cst_149 : f32 to vector<8x1024xf32>
    %376 = arith.maximumf %374, %375 : vector<8x1024xf32>
    %c0_150 = arith.constant 0 : index
    %c0_151 = arith.constant 0 : index
    %377 = vector.load %arg9[%c0_150, %c0_151] : memref<8x1024xf32, #tpu.memory_space<vmem>>, vector<8x1024xf32>
    tpu.vector_store %arg9[%c0_150, %c0_151], %376 {strides = array<i32>} : memref<8x1024xf32, #tpu.memory_space<vmem>>, vector<8x1024xf32>,
    return
  }
}

</mosaic_0001>

<llo_original>
// kernel: tpu_custom_call.1
$region0: #{tpu_custom_call.1}
  #allocation0 [shape = 'u32[]', space=smem, size = 0x4, offset = 0x4, fixed_abs, tag = 'smem constant byte address 0x4 - core index']
  #allocation1 [shape = 'u32[72,128]{1,0:T(1,128)}', space=vmem, size = 0x9000, scoped, tag = 'internal scratch']
  #allocation2 [shape = 'f32[8,1280]{1,0:T(8,128)}', space=vmem, size = 0xa000, scoped, tag = 'scratch operand']
  #allocation3 [shape = 'bf16[112,1024]{1,0:T(8,128)(2,1)}', space=vmem, size = 0x38000, scoped, tag = 'scratch operand']
  %s0 = inlined_call_operand.hbm [shape: f32[8,1024], index: 0, kind: input, shape index: {}]
  %s1 = inlined_call_operand.vmem [shape: f32[8,8], index: 1, kind: input, shape index: {}]
  %s2 = inlined_call_operand.vmem [shape: f32[8,1], index: 2, kind: input, shape index: {}]
  %s3 = inlined_call_operand.vmem [shape: bf16[8,112], index: 3, kind: input, shape index: {}]
  %s4 = inlined_call_operand.vmem [shape: f32[8,1], index: 4, kind: input, shape index: {}]
  %s5 = inlined_call_operand.vmem [shape: f32[8,8], index: 5, kind: input, shape index: {}]
  %s6 = inlined_call_operand.vmem [shape: f32[8,1], index: 6, kind: input, shape index: {}]
  %s7 = inlined_call_operand.vmem [shape: f32[8,1], index: 7, kind: input, shape index: {}]
  %s8 = inlined_call_operand.vmem [shape: f32[8,1], index: 8, kind: input, shape index: {}]
  %s9 = inlined_call_operand.hbm [shape: f32[8,1024], index: 9, kind: output, shape index: {}]
  %s10 = sld [smem:[#allocation0]]
  $region50: #{tpu_custom_call.1} parent=0
    _
  %s12 = ssub.s32 1, %s10
  %s13 = scalar_select 0, %s12, %s10
  $region1: #{tpu_custom_call.1} parent=0
    #allocation4 [shape = 'u8[32768]{0}', space=vmem, size = 0x8000, scoped, tag = 'input window, operand 0, single buffered']
    #allocation5 [shape = 's32[1]{0}', space=sflag, size = 0x4, scoped, tag = 'scoped memory for tpu_custom_call.1']
    #allocation6 [shape = 's32[1]{0}', space=sflag, size = 0x4, scoped, tag = 'scoped memory for tpu_custom_call.1']
    #allocation7 [shape = 'u8[32768]{0}', space=vmem, size = 0x8000, scoped, tag = 'output window, operand 0, single buffered']
    %14 = vsyncpa [#allocation5], 0
    %15 = vsyncpa [#allocation6], 0
    // Predicated region
    $region2: #{tpu_custom_call.1} parent=1 // pred_check
      _
    $region3: #{tpu_custom_call.1} parent=1 // pred_check_branch
      %17 = sbr.rel (0) target = $region5
    $region4: #{tpu_custom_call.1} parent=1 // pred_region
      %19 = vsyncadd [#allocation5], 0
      %s21 = sshll.u32 %s0, 4
      %s22 = int_to_ptr.hbm [resolvable:$true] %s21
      %s23 = sshll.u32 [#allocation4], 4
      %s24 = int_to_ptr.vmem [resolvable:$true] %s23
      %26 = dma.hbm_to_vmem [thread:$0]  %s22, 1024, %s24, [#allocation5]
    $region5: #{tpu_custom_call.1} parent=1 // pred_fallthru
      _
    // Predicated region
    $region6: #{tpu_custom_call.1} parent=1 // pred_check
      _
    $region7: #{tpu_custom_call.1} parent=1 // pred_check_branch
      %28 = sbr.rel (0) target = $region9
    $region8: #{tpu_custom_call.1} parent=1 // pred_region
      _
    $region9: #{tpu_custom_call.1} parent=1 // pred_fallthru
      _
    // Predicated region
    $region10: #{tpu_custom_call.1} parent=1 // pred_check
      _
    $region11: #{tpu_custom_call.1} parent=1 // pred_check_branch
      %30 = sbr.rel (0) target = $region13
    $region12: #{tpu_custom_call.1} parent=1 // pred_region
      _
    $region13: #{tpu_custom_call.1} parent=1 // pred_fallthru
      _
    // Predicated region
    $region14: #{tpu_custom_call.1} parent=1 // pred_check
      _
    $region15: #{tpu_custom_call.1} parent=1 // pred_check_branch
      %32 = sbr.rel (0) target = $region17
    $region16: #{tpu_custom_call.1} parent=1 // pred_region
      _
    $region17: #{tpu_custom_call.1} parent=1 // pred_fallthru
      _
    // Predicated region
    $region18: #{tpu_custom_call.1} parent=1 // pred_check
      _
    $region19: #{tpu_custom_call.1} parent=1 // pred_check_branch
      %34 = sbr.rel (0) target = $region21
    $region20: #{tpu_custom_call.1} parent=1 // pred_region
      _
    $region21: #{tpu_custom_call.1} parent=1 // pred_fallthru
      _
    // Predicated region
    $region22: #{tpu_custom_call.1} parent=1 // pred_check
      _
    $region23: #{tpu_custom_call.1} parent=1 // pred_check_branch
      %36 = sbr.rel (0) target = $region25
    $region24: #{tpu_custom_call.1} parent=1 // pred_region
      _
    $region25: #{tpu_custom_call.1} parent=1 // pred_fallthru
      _
    // Predicated region
    $region26: #{tpu_custom_call.1} parent=1 // pred_check
      _
    $region27: #{tpu_custom_call.1} parent=1 // pred_check_branch
      %38 = sbr.rel (0) target = $region29
    $region28: #{tpu_custom_call.1} parent=1 // pred_region
      _
    $region29: #{tpu_custom_call.1} parent=1 // pred_fallthru
      _
    // Predicated region
    $region30: #{tpu_custom_call.1} parent=1 // pred_check
      _
    $region31: #{tpu_custom_call.1} parent=1 // pred_check_branch
      %40 = sbr.rel (0) target = $region33
    $region32: #{tpu_custom_call.1} parent=1 // pred_region
      _
    $region33: #{tpu_custom_call.1} parent=1 // pred_fallthru
      _
    // Predicated region
    $region34: #{tpu_custom_call.1} parent=1 // pred_check
      _
    $region35: #{tpu_custom_call.1} parent=1 // pred_check_branch
      %42 = sbr.rel (0) target = $region37
    $region36: #{tpu_custom_call.1} parent=1 // pred_region
      _
    $region37: #{tpu_custom_call.1} parent=1 // pred_fallthru
      _
    // Predicated region
    $region38: #{tpu_custom_call.1} parent=1 // pred_check
      _
    $region39: #{tpu_custom_call.1} parent=1 // pred_check_branch
      %44 = sbr.rel (0) target = $region41
    $region40: #{tpu_custom_call.1} parent=1 // pred_region
      %46 = dma.done [#allocation5], 1024
    $region41: #{tpu_custom_call.1} parent=1 // pred_fallthru
      _
    %v48 = vld [vmem:[%s1] sm:$0xff]
    %v49 = vld [vmem:[#allocation4] sm:$0xff]
    %v50 = vld [vmem:[#allocation4 + $0x8] sm:$0xff]
    %v51 = vld [vmem:[#allocation4 + $0x10] sm:$0xff]
    %v52 = vld [vmem:[#allocation4 + $0x18] sm:$0xff]
    %v53 = vld [vmem:[#allocation4 + $0x20] sm:$0xff]
    %v54 = vld [vmem:[#allocation4 + $0x28] sm:$0xff]
    %v55 = vld [vmem:[#allocation4 + $0x30] sm:$0xff]
    %v56 = vld [vmem:[#allocation4 + $0x38] sm:$0xff]
    %v57 = vld [vmem:[%s2] sm:$0xff]
    %59 = vset.pattern.permute.xlu0 0
    %60 = vperm.xlu0 %59, %v57
    %v61 = vpop.permute.xlu0 %60
    %vm63 = vcmask 64512
    %v65 = vsel %vm63, %v48, 0
    %67 = vmatpush.msra.mxu0 0.0
    %68 = vmatpush.msra.mxu0 0.0
    %69 = vmatpush.msra.mxu0 0.0
    %70 = vmatpush.msra.mxu0 0.0
    %71 = vmatpush.msra.mxu0 0.0
    %72 = vmatpush.msra.mxu0 0.0
    %73 = vmatpush.msra.mxu0 0.0
    %74 = vmatpush.msra.mxu0 0.0
    %75 = vmatpush.msra.mxu0 0.0
    %76 = vmatpush.msra.mxu0 0.0
    %77 = vmatpush.msra.mxu0 0.0
    %78 = vmatpush.msra.mxu0 0.0
    %79 = vmatpush.msra.mxu0 0.0
    %80 = vmatpush.msra.mxu0 0.0
    %81 = vmatpush.msra.mxu0 0.0
    %82 = vmatpush.msra.mxu0 %v49
    %83 = vmatmul.f32.gmra.mxu0 %v65
    %v84 = vpop.f32.mrf.mxu0
    %v85 = vadd.f32 %v61, %v84
    %86 = vdwg.mxu0
    %87 = vmatpush.msra.mxu0 0.0
    %88 = vmatpush.msra.mxu0 0.0
    %89 = vmatpush.msra.mxu0 0.0
    %90 = vmatpush.msra.mxu0 0.0
    %91 = vmatpush.msra.mxu0 0.0
    %92 = vmatpush.msra.mxu0 0.0
    %93 = vmatpush.msra.mxu0 0.0
    %94 = vmatpush.msra.mxu0 0.0
    %95 = vmatpush.msra.mxu0 0.0
    %96 = vmatpush.msra.mxu0 0.0
    %97 = vmatpush.msra.mxu0 0.0
    %98 = vmatpush.msra.mxu0 0.0
    %99 = vmatpush.msra.mxu0 0.0
    %100 = vmatpush.msra.mxu0 0.0
    %101 = vmatpush.msra.mxu0 0.0
    %102 = vmatpush.msra.mxu0 %v50
    %103 = vmatmul.f32.gmra.mxu0 %v65
    %v104 = vpop.f32.mrf.mxu0
    %v105 = vadd.f32 %v61, %v104
    %106 = vdwg.mxu0
    %107 = vmatpush.msra.mxu0 0.0
    %108 = vmatpush.msra.mxu0 0.0
    %109 = vmatpush.msra.mxu0 0.0
    %110 = vmatpush.msra.mxu0 0.0
    %111 = vmatpush.msra.mxu0 0.0
    %112 = vmatpush.msra.mxu0 0.0
    %113 = vmatpush.msra.mxu0 0.0
    %114 = vmatpush.msra.mxu0 0.0
    %115 = vmatpush.msra.mxu0 0.0
    %116 = vmatpush.msra.mxu0 0.0
    %117 = vmatpush.msra.mxu0 0.0
    %118 = vmatpush.msra.mxu0 0.0
    %119 = vmatpush.msra.mxu0 0.0
    %120 = vmatpush.msra.mxu0 0.0
    %121 = vmatpush.msra.mxu0 0.0
    %122 = vmatpush.msra.mxu0 %v51
    %123 = vmatmul.f32.gmra.mxu0 %v65
    %v124 = vpop.f32.mrf.mxu0
    %v125 = vadd.f32 %v61, %v124
    %126 = vdwg.mxu0
    %127 = vmatpush.msra.mxu0 0.0
    %128 = vmatpush.msra.mxu0 0.0
    %129 = vmatpush.msra.mxu0 0.0
    %130 = vmatpush.msra.mxu0 0.0
    %131 = vmatpush.msra.mxu0 0.0
    %132 = vmatpush.msra.mxu0 0.0
    %133 = vmatpush.msra.mxu0 0.0
    %134 = vmatpush.msra.mxu0 0.0
    %135 = vmatpush.msra.mxu0 0.0
    %136 = vmatpush.msra.mxu0 0.0
    %137 = vmatpush.msra.mxu0 0.0
    %138 = vmatpush.msra.mxu0 0.0
    %139 = vmatpush.msra.mxu0 0.0
    %140 = vmatpush.msra.mxu0 0.0
    %141 = vmatpush.msra.mxu0 0.0
    %142 = vmatpush.msra.mxu0 %v52
    %143 = vmatmul.f32.gmra.mxu0 %v65
    %v144 = vpop.f32.mrf.mxu0
    %v145 = vadd.f32 %v61, %v144
    %146 = vdwg.mxu0
    %147 = vmatpush.msra.mxu0 0.0
    %148 = vmatpush.msra.mxu0 0.0
    %149 = vmatpush.msra.mxu0 0.0
    %150 = vmatpush.msra.mxu0 0.0
    %151 = vmatpush.msra.mxu0 0.0
    %152 = vmatpush.msra.mxu0 0.0
    %153 = vmatpush.msra.mxu0 0.0
    %154 = vmatpush.msra.mxu0 0.0
    %155 = vmatpush.msra.mxu0 0.0
    %156 = vmatpush.msra.mxu0 0.0
    %157 = vmatpush.msra.mxu0 0.0
    %158 = vmatpush.msra.mxu0 0.0
    %159 = vmatpush.msra.mxu0 0.0
    %160 = vmatpush.msra.mxu0 0.0
    %161 = vmatpush.msra.mxu0 0.0
    %162 = vmatpush.msra.mxu0 %v53
    %163 = vmatmul.f32.gmra.mxu0 %v65
    %v164 = vpop.f32.mrf.mxu0
    %v165 = vadd.f32 %v61, %v164
    %166 = vdwg.mxu0
    %167 = vmatpush.msra.mxu0 0.0
    %168 = vmatpush.msra.mxu0 0.0
    %169 = vmatpush.msra.mxu0 0.0
    %170 = vmatpush.msra.mxu0 0.0
    %171 = vmatpush.msra.mxu0 0.0
    %172 = vmatpush.msra.mxu0 0.0
    %173 = vmatpush.msra.mxu0 0.0
    %174 = vmatpush.msra.mxu0 0.0
    %175 = vmatpush.msra.mxu0 0.0
    %176 = vmatpush.msra.mxu0 0.0
    %177 = vmatpush.msra.mxu0 0.0
    %178 = vmatpush.msra.mxu0 0.0
    %179 = vmatpush.msra.mxu0 0.0
    %180 = vmatpush.msra.mxu0 0.0
    %181 = vmatpush.msra.mxu0 0.0
    %182 = vmatpush.msra.mxu0 %v54
    %183 = vmatmul.f32.gmra.mxu0 %v65
    %v184 = vpop.f32.mrf.mxu0
    %v185 = vadd.f32 %v61, %v184
    %186 = vdwg.mxu0
    %187 = vmatpush.msra.mxu0 0.0
    %188 = vmatpush.msra.mxu0 0.0
    %189 = vmatpush.msra.mxu0 0.0
    %190 = vmatpush.msra.mxu0 0.0
    %191 = vmatpush.msra.mxu0 0.0
    %192 = vmatpush.msra.mxu0 0.0
    %193 = vmatpush.msra.mxu0 0.0
    %194 = vmatpush.msra.mxu0 0.0
    %195 = vmatpush.msra.mxu0 0.0
    %196 = vmatpush.msra.mxu0 0.0
    %197 = vmatpush.msra.mxu0 0.0
    %198 = vmatpush.msra.mxu0 0.0
    %199 = vmatpush.msra.mxu0 0.0
    %200 = vmatpush.msra.mxu0 0.0
    %201 = vmatpush.msra.mxu0 0.0
    %202 = vmatpush.msra.mxu0 %v55
    %203 = vmatmul.f32.gmra.mxu0 %v65
    %v204 = vpop.f32.mrf.mxu0
    %v205 = vadd.f32 %v61, %v204
    %206 = vdwg.mxu0
    %207 = vmatpush.msra.mxu0 0.0
    %208 = vmatpush.msra.mxu0 0.0
    %209 = vmatpush.msra.mxu0 0.0
    %210 = vmatpush.msra.mxu0 0.0
    %211 = vmatpush.msra.mxu0 0.0
    %212 = vmatpush.msra.mxu0 0.0
    %213 = vmatpush.msra.mxu0 0.0
    %214 = vmatpush.msra.mxu0 0.0
    %215 = vmatpush.msra.mxu0 0.0
    %216 = vmatpush.msra.mxu0 0.0
    %217 = vmatpush.msra.mxu0 0.0
    %218 = vmatpush.msra.mxu0 0.0
    %219 = vmatpush.msra.mxu0 0.0
    %220 = vmatpush.msra.mxu0 0.0
    %221 = vmatpush.msra.mxu0 0.0
    %222 = vmatpush.msra.mxu0 %v56
    %223 = vmatmul.f32.gmra.mxu0 %v65
    %v224 = vpop.f32.mrf.mxu0
    %v225 = vadd.f32 %v61, %v224
    %226 = vdwg.mxu0
    %v227 = vmax.f32 %v85, 0.0
    %v228 = vmax.f32 %v105, 0.0
    %v229 = vmax.f32 %v125, 0.0
    %v230 = vmax.f32 %v145, 0.0
    %v231 = vmax.f32 %v165, 0.0
    %v232 = vmax.f32 %v185, 0.0
    %v233 = vmax.f32 %v205, 0.0
    %v234 = vmax.f32 %v225, 0.0
    %235 = vst [vmem:[#allocation2] sm:$0xff] 0.0
    %236 = vst [vmem:[#allocation2 + $0x48] sm:$0xff] 0.0
    %237 = vst [vmem:[#allocation2 + $0x8] sm:$0xff] %v227
    %238 = vst [vmem:[#allocation2 + $0x10] sm:$0xff] %v228
    %239 = vst [vmem:[#allocation2 + $0x18] sm:$0xff] %v229
    %240 = vst [vmem:[#allocation2 + $0x20] sm:$0xff] %v230
    %241 = vst [vmem:[#allocation2 + $0x28] sm:$0xff] %v231
    %242 = vst [vmem:[#allocation2 + $0x30] sm:$0xff] %v232
    %243 = vst [vmem:[#allocation2 + $0x38] sm:$0xff] %v233
    %244 = vst [vmem:[#allocation2 + $0x40] sm:$0xff] %v234
    %v245 = vlaneseq
    %v246 = vand.u32 %v245, 127
    %v247 = vadd.s32 %v246, 128
    %v248 = vadd.s32 %v246, 256
    %v249 = vadd.s32 %v246, 384
    %v250 = vadd.s32 %v246, 512
    %v251 = vadd.s32 %v246, 640
    %v252 = vadd.s32 %v246, 768
    %v253 = vadd.s32 %v246, 896
    %v254 = vand.u32 %v246, 7
    %v255 = vand.u32 %v247, 7
    %v256 = vand.u32 %v248, 7
    %v257 = vand.u32 %v249, 7
    %v258 = vand.u32 %v250, 7
    %v259 = vand.u32 %v251, 7
    %v260 = vand.u32 %v252, 7
    %v261 = vand.u32 %v253, 7
    %v262 = vand.u32 %v246, 63
    %v263 = vand.u32 %v247, 63
    %v264 = vand.u32 %v248, 63
    %v265 = vand.u32 %v249, 63
    %v266 = vand.u32 %v250, 63
    %v267 = vand.u32 %v251, 63
    %v268 = vand.u32 %v252, 63
    %v269 = vand.u32 %v253, 63
    %v270 = vand.u32 %v246, 511
    %v271 = vand.u32 %v247, 511
    %v272 = vand.u32 %v248, 511
    %v273 = vand.u32 %v249, 511
    %v274 = vand.u32 %v250, 511
    %v275 = vand.u32 %v251, 511
    %v276 = vand.u32 %v252, 511
    %v277 = vand.u32 %v253, 511
    %v278 = vld [vmem:[#allocation2] sm:$0xff]
    %v279 = vld [vmem:[#allocation2 + $0x8] sm:$0xff]
    %v280 = vld [vmem:[#allocation2 + $0x10] sm:$0xff]
    %v281 = vld [vmem:[#allocation2 + $0x18] sm:$0xff]
    %v282 = vld [vmem:[#allocation2 + $0x20] sm:$0xff]
    %v283 = vld [vmem:[#allocation2 + $0x28] sm:$0xff]
    %v284 = vld [vmem:[#allocation2 + $0x30] sm:$0xff]
    %v285 = vld [vmem:[#allocation2 + $0x38] sm:$0xff]
    %v286 = vld [vmem:[#allocation2 + $0x40] sm:$0xff]
    %vm287 = vcmp.ge.s32.totalorder %v254, 1
    %vm288 = vcmp.ge.s32.totalorder %v255, 1
    %vm289 = vcmp.ge.s32.totalorder %v256, 1
    %vm290 = vcmp.ge.s32.totalorder %v257, 1
    %vm291 = vcmp.ge.s32.totalorder %v258, 1
    %vm292 = vcmp.ge.s32.totalorder %v259, 1
    %vm293 = vcmp.ge.s32.totalorder %v260, 1
    %vm294 = vcmp.ge.s32.totalorder %v261, 1
    %vm295 = vcmp.ge.s32.totalorder %v262, 8
    %vm296 = vcmp.ge.s32.totalorder %v263, 8
    %vm297 = vcmp.ge.s32.totalorder %v264, 8
    %vm298 = vcmp.ge.s32.totalorder %v265, 8
    %vm299 = vcmp.ge.s32.totalorder %v266, 8
    %vm300 = vcmp.ge.s32.totalorder %v267, 8
    %vm301 = vcmp.ge.s32.totalorder %v268, 8
    %vm302 = vcmp.ge.s32.totalorder %v269, 8
    %vm303 = vcmp.ge.s32.totalorder %v270, 64
    %vm304 = vcmp.ge.s32.totalorder %v271, 64
    %vm305 = vcmp.ge.s32.totalorder %v272, 64
    %vm306 = vcmp.ge.s32.totalorder %v273, 64
    %vm307 = vcmp.ge.s32.totalorder %v274, 64
    %vm308 = vcmp.ge.s32.totalorder %v275, 64
    %vm309 = vcmp.ge.s32.totalorder %v276, 64
    %vm310 = vcmp.ge.s32.totalorder %v277, 64
    %vm311 = vmand %vm287, %vm295
    %vm312 = vmand %vm288, %vm296
    %vm313 = vmand %vm289, %vm297
    %vm314 = vmand %vm290, %vm298
    %vm315 = vmand %vm291, %vm299
    %vm316 = vmand %vm292, %vm300
    %vm317 = vmand %vm293, %vm301
    %vm318 = vmand %vm294, %vm302
    %vm319 = vmand %vm311, %vm303
    %vm320 = vmand %vm312, %vm304
    %vm321 = vmand %vm313, %vm305
    %vm322 = vmand %vm314, %vm306
    %vm323 = vmand %vm315, %vm307
    %vm324 = vmand %vm316, %vm308
    %vm325 = vmand %vm317, %vm309
    %vm326 = vmand %vm318, %vm310
    %v327 = vsel %vm319, 1, 0
    %v328 = vsel %vm320, 1, 0
    %v329 = vsel %vm321, 1, 0
    %v330 = vsel %vm322, 1, 0
    %v331 = vsel %vm323, 1, 0
    %v332 = vsel %vm324, 1, 0
    %v333 = vsel %vm325, 1, 0
    %v334 = vsel %vm326, 1, 0
    %vm335 = vcmp.eq.s32.totalorder %v327, 1
    %vm336 = vcmp.eq.s32.totalorder %v328, 1
    %vm337 = vcmp.eq.s32.totalorder %v329, 1
    %vm338 = vcmp.eq.s32.totalorder %v330, 1
    %vm339 = vcmp.eq.s32.totalorder %v331, 1
    %vm340 = vcmp.eq.s32.totalorder %v332, 1
    %vm341 = vcmp.eq.s32.totalorder %v333, 1
    %vm342 = vcmp.eq.s32.totalorder %v334, 1
    %352 = vrot.lane.b32.xlu0 %v278, 73
    %v353 = vpop.permute.xlu0 %352
    %354 = vrot.lane.b32.xlu0 %v279, 73
    %v355 = vpop.permute.xlu0 %354
    %356 = vrot.lane.b32.xlu0 %v280, 73
    %v357 = vpop.permute.xlu0 %356
    %358 = vrot.lane.b32.xlu0 %v281, 73
    %v359 = vpop.permute.xlu0 %358
    %360 = vrot.lane.b32.xlu0 %v282, 73
    %v361 = vpop.permute.xlu0 %360
    %362 = vrot.lane.b32.xlu0 %v283, 73
    %v363 = vpop.permute.xlu0 %362
    %364 = vrot.lane.b32.xlu0 %v284, 73
    %v365 = vpop.permute.xlu0 %364
    %366 = vrot.lane.b32.xlu0 %v285, 73
    %v367 = vpop.permute.xlu0 %366
    %368 = vrot.lane.b32.xlu0 %v286, 73
    %v369 = vpop.permute.xlu0 %368
    %vm370 = vcmask 596992
    %v371 = vsel %vm370, %v353, %v355
    %v372 = vsel %vm370, %v355, %v357
    %v373 = vsel %vm370, %v357, %v359
    %v374 = vsel %vm370, %v359, %v361
    %v375 = vsel %vm370, %v361, %v363
    %v376 = vsel %vm370, %v363, %v365
    %v377 = vsel %vm370, %v365, %v367
    %v378 = vsel %vm370, %v367, %v369
    %v387 = vsel %vm335, %v371, 0.0
    %v388 = vsel %vm336, %v372, 0.0
    %v389 = vsel %vm337, %v373, 0.0
    %v390 = vsel %vm338, %v374, 0.0
    %v391 = vsel %vm339, %v375, 0.0
    %v392 = vsel %vm340, %v376, 0.0
    %v393 = vsel %vm341, %v377, 0.0
    %v394 = vsel %vm342, %v378, 0.0
    %vm395 = vmand %vm295, %vm303
    %vm396 = vmand %vm296, %vm304
    %vm397 = vmand %vm297, %vm305
    %vm398 = vmand %vm298, %vm306
    %vm399 = vmand %vm299, %vm307
    %vm400 = vmand %vm300, %vm308
    %vm401 = vmand %vm301, %vm309
    %vm402 = vmand %vm302, %vm310
    %v403 = vsel %vm395, 1, 0
    %v404 = vsel %vm396, 1, 0
    %v405 = vsel %vm397, 1, 0
    %v406 = vsel %vm398, 1, 0
    %v407 = vsel %vm399, 1, 0
    %v408 = vsel %vm400, 1, 0
    %v409 = vsel %vm401, 1, 0
    %v410 = vsel %vm402, 1, 0
    %vm411 = vcmp.eq.s32.totalorder %v403, 1
    %vm412 = vcmp.eq.s32.totalorder %v404, 1
    %vm413 = vcmp.eq.s32.totalorder %v405, 1
    %vm414 = vcmp.eq.s32.totalorder %v406, 1
    %vm415 = vcmp.eq.s32.totalorder %v407, 1
    %vm416 = vcmp.eq.s32.totalorder %v408, 1
    %vm417 = vcmp.eq.s32.totalorder %v409, 1
    %vm418 = vcmp.eq.s32.totalorder %v410, 1
    %419 = vrot.lane.b32.xlu0 %v278, 72
    %v420 = vpop.permute.xlu0 %419
    %421 = vrot.lane.b32.xlu0 %v279, 72
    %v422 = vpop.permute.xlu0 %421
    %423 = vrot.lane.b32.xlu0 %v280, 72
    %v424 = vpop.permute.xlu0 %423
    %425 = vrot.lane.b32.xlu0 %v281, 72
    %v426 = vpop.permute.xlu0 %425
    %427 = vrot.lane.b32.xlu0 %v282, 72
    %v428 = vpop.permute.xlu0 %427
    %429 = vrot.lane.b32.xlu0 %v283, 72
    %v430 = vpop.permute.xlu0 %429
    %431 = vrot.lane.b32.xlu0 %v284, 72
    %v432 = vpop.permute.xlu0 %431
    %433 = vrot.lane.b32.xlu0 %v285, 72
    %v434 = vpop.permute.xlu0 %433
    %435 = vrot.lane.b32.xlu0 %v286, 72
    %v436 = vpop.permute.xlu0 %435
    %vm437 = vcmask 588800
    %v438 = vsel %vm437, %v420, %v422
    %v439 = vsel %vm437, %v422, %v424
    %v440 = vsel %vm437, %v424, %v426
    %v441 = vsel %vm437, %v426, %v428
    %v442 = vsel %vm437, %v428, %v430
    %v443 = vsel %vm437, %v430, %v432
    %v444 = vsel %vm437, %v432, %v434
    %v445 = vsel %vm437, %v434, %v436
    %v454 = vsel %vm411, %v438, 0.0
    %v455 = vsel %vm412, %v439, 0.0
    %v456 = vsel %vm413, %v440, 0.0
    %v457 = vsel %vm414, %v441, 0.0
    %v458 = vsel %vm415, %v442, 0.0
    %v459 = vsel %vm416, %v443, 0.0
    %v460 = vsel %vm417, %v444, 0.0
    %v461 = vsel %vm418, %v445, 0.0
    %vm462 = vcmp.lt.s32.totalorder %v254, 7
    %vm463 = vcmp.lt.s32.totalorder %v255, 7
    %vm464 = vcmp.lt.s32.totalorder %v256, 7
    %vm465 = vcmp.lt.s32.totalorder %v257, 7
    %vm466 = vcmp.lt.s32.totalorder %v258, 7
    %vm467 = vcmp.lt.s32.totalorder %v259, 7
    %vm468 = vcmp.lt.s32.totalorder %v260, 7
    %vm469 = vcmp.lt.s32.totalorder %v261, 7
    %vm470 = vmand %vm462, %vm295
    %vm471 = vmand %vm463, %vm296
    %vm472 = vmand %vm464, %vm297
    %vm473 = vmand %vm465, %vm298
    %vm474 = vmand %vm466, %vm299
    %vm475 = vmand %vm467, %vm300
    %vm476 = vmand %vm468, %vm301
    %vm477 = vmand %vm469, %vm302
    %vm478 = vmand %vm470, %vm303
    %vm479 = vmand %vm471, %vm304
    %vm480 = vmand %vm472, %vm305
    %vm481 = vmand %vm473, %vm306
    %vm482 = vmand %vm474, %vm307
    %vm483 = vmand %vm475, %vm308
    %vm484 = vmand %vm476, %vm309
    %vm485 = vmand %vm477, %vm310
    %v486 = vsel %vm478, 1, 0
    %v487 = vsel %vm479, 1, 0
    %v488 = vsel %vm480, 1, 0
    %v489 = vsel %vm481, 1, 0
    %v490 = vsel %vm482, 1, 0
    %v491 = vsel %vm483, 1, 0
    %v492 = vsel %vm484, 1, 0
    %v493 = vsel %vm485, 1, 0
    %vm494 = vcmp.eq.s32.totalorder %v486, 1
    %vm495 = vcmp.eq.s32.totalorder %v487, 1
    %vm496 = vcmp.eq.s32.totalorder %v488, 1
    %vm497 = vcmp.eq.s32.totalorder %v489, 1
    %vm498 = vcmp.eq.s32.totalorder %v490, 1
    %vm499 = vcmp.eq.s32.totalorder %v491, 1
    %vm500 = vcmp.eq.s32.totalorder %v492, 1
    %vm501 = vcmp.eq.s32.totalorder %v493, 1
    %502 = vrot.lane.b32.xlu0 %v278, 71
    %v503 = vpop.permute.xlu0 %502
    %504 = vrot.lane.b32.xlu0 %v279, 71
    %v505 = vpop.permute.xlu0 %504
    %506 = vrot.lane.b32.xlu0 %v280, 71
    %v507 = vpop.permute.xlu0 %506
    %508 = vrot.lane.b32.xlu0 %v281, 71
    %v509 = vpop.permute.xlu0 %508
    %510 = vrot.lane.b32.xlu0 %v282, 71
    %v511 = vpop.permute.xlu0 %510
    %512 = vrot.lane.b32.xlu0 %v283, 71
    %v513 = vpop.permute.xlu0 %512
    %514 = vrot.lane.b32.xlu0 %v284, 71
    %v515 = vpop.permute.xlu0 %514
    %516 = vrot.lane.b32.xlu0 %v285, 71
    %v517 = vpop.permute.xlu0 %516
    %518 = vrot.lane.b32.xlu0 %v286, 71
    %v519 = vpop.permute.xlu0 %518
    %vm520 = vcmask 580608
    %v521 = vsel %vm520, %v503, %v505
    %v522 = vsel %vm520, %v505, %v507
    %v523 = vsel %vm520, %v507, %v509
    %v524 = vsel %vm520, %v509, %v511
    %v525 = vsel %vm520, %v511, %v513
    %v526 = vsel %vm520, %v513, %v515
    %v527 = vsel %vm520, %v515, %v517
    %v528 = vsel %vm520, %v517, %v519
    %v537 = vsel %vm494, %v521, 0.0
    %v538 = vsel %vm495, %v522, 0.0
    %v539 = vsel %vm496, %v523, 0.0
    %v540 = vsel %vm497, %v524, 0.0
    %v541 = vsel %vm498, %v525, 0.0
    %v542 = vsel %vm499, %v526, 0.0
    %v543 = vsel %vm500, %v527, 0.0
    %v544 = vsel %vm501, %v528, 0.0
    %vm545 = vmand %vm287, %vm303
    %vm546 = vmand %vm288, %vm304
    %vm547 = vmand %vm289, %vm305
    %vm548 = vmand %vm290, %vm306
    %vm549 = vmand %vm291, %vm307
    %vm550 = vmand %vm292, %vm308
    %vm551 = vmand %vm293, %vm309
    %vm552 = vmand %vm294, %vm310
    %v553 = vsel %vm545, 1, 0
    %v554 = vsel %vm546, 1, 0
    %v555 = vsel %vm547, 1, 0
    %v556 = vsel %vm548, 1, 0
    %v557 = vsel %vm549, 1, 0
    %v558 = vsel %vm550, 1, 0
    %v559 = vsel %vm551, 1, 0
    %v560 = vsel %vm552, 1, 0
    %vm561 = vcmp.eq.s32.totalorder %v553, 1
    %vm562 = vcmp.eq.s32.totalorder %v554, 1
    %vm563 = vcmp.eq.s32.totalorder %v555, 1
    %vm564 = vcmp.eq.s32.totalorder %v556, 1
    %vm565 = vcmp.eq.s32.totalorder %v557, 1
    %vm566 = vcmp.eq.s32.totalorder %v558, 1
    %vm567 = vcmp.eq.s32.totalorder %v559, 1
    %vm568 = vcmp.eq.s32.totalorder %v560, 1
    %569 = vrot.lane.b32.xlu0 %v278, 65
    %v570 = vpop.permute.xlu0 %569
    %571 = vrot.lane.b32.xlu0 %v279, 65
    %v572 = vpop.permute.xlu0 %571
    %573 = vrot.lane.b32.xlu0 %v280, 65
    %v574 = vpop.permute.xlu0 %573
    %575 = vrot.lane.b32.xlu0 %v281, 65
    %v576 = vpop.permute.xlu0 %575
    %577 = vrot.lane.b32.xlu0 %v282, 65
    %v578 = vpop.permute.xlu0 %577
    %579 = vrot.lane.b32.xlu0 %v283, 65
    %v580 = vpop.permute.xlu0 %579
    %581 = vrot.lane.b32.xlu0 %v284, 65
    %v582 = vpop.permute.xlu0 %581
    %583 = vrot.lane.b32.xlu0 %v285, 65
    %v584 = vpop.permute.xlu0 %583
    %585 = vrot.lane.b32.xlu0 %v286, 65
    %v586 = vpop.permute.xlu0 %585
    %vm587 = vcmask 531456
    %v588 = vsel %vm587, %v570, %v572
    %v589 = vsel %vm587, %v572, %v574
    %v590 = vsel %vm587, %v574, %v576
    %v591 = vsel %vm587, %v576, %v578
    %v592 = vsel %vm587, %v578, %v580
    %v593 = vsel %vm587, %v580, %v582
    %v594 = vsel %vm587, %v582, %v584
    %v595 = vsel %vm587, %v584, %v586
    %v604 = vsel %vm561, %v588, 0.0
    %v605 = vsel %vm562, %v589, 0.0
    %v606 = vsel %vm563, %v590, 0.0
    %v607 = vsel %vm564, %v591, 0.0
    %v608 = vsel %vm565, %v592, 0.0
    %v609 = vsel %vm566, %v593, 0.0
    %v610 = vsel %vm567, %v594, 0.0
    %v611 = vsel %vm568, %v595, 0.0
    %v620 = vrot.slane %v454, 4
    %v621 = vrot.slane %v455, 4
    %v622 = vrot.slane %v456, 4
    %v623 = vrot.slane %v457, 4
    %v624 = vrot.slane %v458, 4
    %v625 = vrot.slane %v459, 4
    %v626 = vrot.slane %v460, 4
    %v627 = vrot.slane %v461, 4
    %v644 = vrot.slane %v604, 4
    %v645 = vrot.slane %v605, 4
    %v646 = vrot.slane %v606, 4
    %v647 = vrot.slane %v607, 4
    %v648 = vrot.slane %v608, 4
    %v649 = vrot.slane %v609, 4
    %v650 = vrot.slane %v610, 4
    %v651 = vrot.slane %v611, 4
    %vm660 = vcmask 1043456
    %v661 = vsel %vm660, %v387, %v620
    %v662 = vsel %vm660, %v388, %v621
    %v663 = vsel %vm660, %v389, %v622
    %v664 = vsel %vm660, %v390, %v623
    %v665 = vsel %vm660, %v391, %v624
    %v666 = vsel %vm660, %v392, %v625
    %v667 = vsel %vm660, %v393, %v626
    %v668 = vsel %vm660, %v394, %v627
    %v669 = vsel %vm660, %v537, %v644
    %v670 = vsel %vm660, %v538, %v645
    %v671 = vsel %vm660, %v539, %v646
    %v672 = vsel %vm660, %v540, %v647
    %v673 = vsel %vm660, %v541, %v648
    %v674 = vsel %vm660, %v542, %v649
    %v675 = vsel %vm660, %v543, %v650
    %v676 = vsel %vm660, %v544, %v651
    %v677 = vpack.c.bf16 %v662, %v661
    %v678 = vpack.c.bf16 %v664, %v663
    %v679 = vpack.c.bf16 %v666, %v665
    %v680 = vpack.c.bf16 %v668, %v667
    %v681 = vpack.c.bf16 %v670, %v669
    %v682 = vpack.c.bf16 %v672, %v671
    %v683 = vpack.c.bf16 %v674, %v673
    %v684 = vpack.c.bf16 %v676, %v675
    %685 = vst [vmem:[#allocation3] sm:$0xff] %v677
    %686 = vst [vmem:[#allocation3 + $0x8] sm:$0xff] %v678
    %687 = vst [vmem:[#allocation3 + $0x10] sm:$0xff] %v679
    %688 = vst [vmem:[#allocation3 + $0x18] sm:$0xff] %v680
    %689 = vst [vmem:[#allocation3 + $0x20] sm:$0xff] %v681
    %690 = vst [vmem:[#allocation3 + $0x28] sm:$0xff] %v682
    %691 = vst [vmem:[#allocation3 + $0x30] sm:$0xff] %v683
    %692 = vst [vmem:[#allocation3 + $0x38] sm:$0xff] %v684
    %v693 = vld [vmem:[#allocation2] sm:$0xff]
    %v694 = vld [vmem:[#allocation2 + $0x8] sm:$0xff]
    %v695 = vld [vmem:[#allocation2 + $0x10] sm:$0xff]
    %v696 = vld [vmem:[#allocation2 + $0x18] sm:$0xff]
    %v697 = vld [vmem:[#allocation2 + $0x20] sm:$0xff]
    %v698 = vld [vmem:[#allocation2 + $0x28] sm:$0xff]
    %v699 = vld [vmem:[#allocation2 + $0x30] sm:$0xff]
    %v700 = vld [vmem:[#allocation2 + $0x38] sm:$0xff]
    %v701 = vld [vmem:[#allocation2 + $0x40] sm:$0xff]
    %v702 = vsel %vm303, 1, 0
    %v703 = vsel %vm304, 1, 0
    %v704 = vsel %vm305, 1, 0
    %v705 = vsel %vm306, 1, 0
    %v706 = vsel %vm307, 1, 0
    %v707 = vsel %vm308, 1, 0
    %v708 = vsel %vm309, 1, 0
    %v709 = vsel %vm310, 1, 0
    %vm710 = vcmp.eq.s32.totalorder %v702, 1
    %vm711 = vcmp.eq.s32.totalorder %v703, 1
    %vm712 = vcmp.eq.s32.totalorder %v704, 1
    %vm713 = vcmp.eq.s32.totalorder %v705, 1
    %vm714 = vcmp.eq.s32.totalorder %v706, 1
    %vm715 = vcmp.eq.s32.totalorder %v707, 1
    %vm716 = vcmp.eq.s32.totalorder %v708, 1
    %vm717 = vcmp.eq.s32.totalorder %v709, 1
    %727 = vrot.lane.b32.xlu0 %v693, 64
    %v728 = vpop.permute.xlu0 %727
    %729 = vrot.lane.b32.xlu0 %v694, 64
    %v730 = vpop.permute.xlu0 %729
    %731 = vrot.lane.b32.xlu0 %v695, 64
    %v732 = vpop.permute.xlu0 %731
    %733 = vrot.lane.b32.xlu0 %v696, 64
    %v734 = vpop.permute.xlu0 %733
    %735 = vrot.lane.b32.xlu0 %v697, 64
    %v736 = vpop.permute.xlu0 %735
    %737 = vrot.lane.b32.xlu0 %v698, 64
    %v738 = vpop.permute.xlu0 %737
    %739 = vrot.lane.b32.xlu0 %v699, 64
    %v740 = vpop.permute.xlu0 %739
    %741 = vrot.lane.b32.xlu0 %v700, 64
    %v742 = vpop.permute.xlu0 %741
    %743 = vrot.lane.b32.xlu0 %v701, 64
    %v744 = vpop.permute.xlu0 %743
    %vm745 = vcmask 523264
    %v746 = vsel %vm745, %v728, %v730
    %v747 = vsel %vm745, %v730, %v732
    %v748 = vsel %vm745, %v732, %v734
    %v749 = vsel %vm745, %v734, %v736
    %v750 = vsel %vm745, %v736, %v738
    %v751 = vsel %vm745, %v738, %v740
    %v752 = vsel %vm745, %v740, %v742
    %v753 = vsel %vm745, %v742, %v744
    %v762 = vsel %vm710, %v746, 0.0
    %v763 = vsel %vm711, %v747, 0.0
    %v764 = vsel %vm712, %v748, 0.0
    %v765 = vsel %vm713, %v749, 0.0
    %v766 = vsel %vm714, %v750, 0.0
    %v767 = vsel %vm715, %v751, 0.0
    %v768 = vsel %vm716, %v752, 0.0
    %v769 = vsel %vm717, %v753, 0.0
    %vm770 = vmand %vm462, %vm303
    %vm771 = vmand %vm463, %vm304
    %vm772 = vmand %vm464, %vm305
    %vm773 = vmand %vm465, %vm306
    %vm774 = vmand %vm466, %vm307
    %vm775 = vmand %vm467, %vm308
    %vm776 = vmand %vm468, %vm309
    %vm777 = vmand %vm469, %vm310
    %v778 = vsel %vm770, 1, 0
    %v779 = vsel %vm771, 1, 0
    %v780 = vsel %vm772, 1, 0
    %v781 = vsel %vm773, 1, 0
    %v782 = vsel %vm774, 1, 0
    %v783 = vsel %vm775, 1, 0
    %v784 = vsel %vm776, 1, 0
    %v785 = vsel %vm777, 1, 0
    %vm786 = vcmp.eq.s32.totalorder %v778, 1
    %vm787 = vcmp.eq.s32.totalorder %v779, 1
    %vm788 = vcmp.eq.s32.totalorder %v780, 1
    %vm789 = vcmp.eq.s32.totalorder %v781, 1
    %vm790 = vcmp.eq.s32.totalorder %v782, 1
    %vm791 = vcmp.eq.s32.totalorder %v783, 1
    %vm792 = vcmp.eq.s32.totalorder %v784, 1
    %vm793 = vcmp.eq.s32.totalorder %v785, 1
    %794 = vrot.lane.b32.xlu0 %v693, 63
    %v795 = vpop.permute.xlu0 %794
    %796 = vrot.lane.b32.xlu0 %v694, 63
    %v797 = vpop.permute.xlu0 %796
    %798 = vrot.lane.b32.xlu0 %v695, 63
    %v799 = vpop.permute.xlu0 %798
    %800 = vrot.lane.b32.xlu0 %v696, 63
    %v801 = vpop.permute.xlu0 %800
    %802 = vrot.lane.b32.xlu0 %v697, 63
    %v803 = vpop.permute.xlu0 %802
    %804 = vrot.lane.b32.xlu0 %v698, 63
    %v805 = vpop.permute.xlu0 %804
    %806 = vrot.lane.b32.xlu0 %v699, 63
    %v807 = vpop.permute.xlu0 %806
    %808 = vrot.lane.b32.xlu0 %v700, 63
    %v809 = vpop.permute.xlu0 %808
    %810 = vrot.lane.b32.xlu0 %v701, 63
    %v811 = vpop.permute.xlu0 %810
    %vm812 = vcmask 515072
    %v813 = vsel %vm812, %v795, %v797
    %v814 = vsel %vm812, %v797, %v799
    %v815 = vsel %vm812, %v799, %v801
    %v816 = vsel %vm812, %v801, %v803
    %v817 = vsel %vm812, %v803, %v805
    %v818 = vsel %vm812, %v805, %v807
    %v819 = vsel %vm812, %v807, %v809
    %v820 = vsel %vm812, %v809, %v811
    %v829 = vsel %vm786, %v813, 0.0
    %v830 = vsel %vm787, %v814, 0.0
    %v831 = vsel %vm788, %v815, 0.0
    %v832 = vsel %vm789, %v816, 0.0
    %v833 = vsel %vm790, %v817, 0.0
    %v834 = vsel %vm791, %v818, 0.0
    %v835 = vsel %vm792, %v819, 0.0
    %v836 = vsel %vm793, %v820, 0.0
    %vm837 = vcmp.lt.s32.totalorder %v262, 56
    %vm838 = vcmp.lt.s32.totalorder %v263, 56
    %vm839 = vcmp.lt.s32.totalorder %v264, 56
    %vm840 = vcmp.lt.s32.totalorder %v265, 56
    %vm841 = vcmp.lt.s32.totalorder %v266, 56
    %vm842 = vcmp.lt.s32.totalorder %v267, 56
    %vm843 = vcmp.lt.s32.totalorder %v268, 56
    %vm844 = vcmp.lt.s32.totalorder %v269, 56
    %vm845 = vmand %vm287, %vm837
    %vm846 = vmand %vm288, %vm838
    %vm847 = vmand %vm289, %vm839
    %vm848 = vmand %vm290, %vm840
    %vm849 = vmand %vm291, %vm841
    %vm850 = vmand %vm292, %vm842
    %vm851 = vmand %vm293, %vm843
    %vm852 = vmand %vm294, %vm844
    %vm853 = vmand %vm845, %vm303
    %vm854 = vmand %vm846, %vm304
    %vm855 = vmand %vm847, %vm305
    %vm856 = vmand %vm848, %vm306
    %vm857 = vmand %vm849, %vm307
    %vm858 = vmand %vm850, %vm308
    %vm859 = vmand %vm851, %vm309
    %vm860 = vmand %vm852, %vm310
    %v861 = vsel %vm853, 1, 0
    %v862 = vsel %vm854, 1, 0
    %v863 = vsel %vm855, 1, 0
    %v864 = vsel %vm856, 1, 0
    %v865 = vsel %vm857, 1, 0
    %v866 = vsel %vm858, 1, 0
    %v867 = vsel %vm859, 1, 0
    %v868 = vsel %vm860, 1, 0
    %vm869 = vcmp.eq.s32.totalorder %v861, 1
    %vm870 = vcmp.eq.s32.totalorder %v862, 1
    %vm871 = vcmp.eq.s32.totalorder %v863, 1
    %vm872 = vcmp.eq.s32.totalorder %v864, 1
    %vm873 = vcmp.eq.s32.totalorder %v865, 1
    %vm874 = vcmp.eq.s32.totalorder %v866, 1
    %vm875 = vcmp.eq.s32.totalorder %v867, 1
    %vm876 = vcmp.eq.s32.totalorder %v868, 1
    %877 = vrot.lane.b32.xlu0 %v693, 57
    %v878 = vpop.permute.xlu0 %877
    %879 = vrot.lane.b32.xlu0 %v694, 57
    %v880 = vpop.permute.xlu0 %879
    %881 = vrot.lane.b32.xlu0 %v695, 57
    %v882 = vpop.permute.xlu0 %881
    %883 = vrot.lane.b32.xlu0 %v696, 57
    %v884 = vpop.permute.xlu0 %883
    %885 = vrot.lane.b32.xlu0 %v697, 57
    %v886 = vpop.permute.xlu0 %885
    %887 = vrot.lane.b32.xlu0 %v698, 57
    %v888 = vpop.permute.xlu0 %887
    %889 = vrot.lane.b32.xlu0 %v699, 57
    %v890 = vpop.permute.xlu0 %889
    %891 = vrot.lane.b32.xlu0 %v700, 57
    %v892 = vpop.permute.xlu0 %891
    %893 = vrot.lane.b32.xlu0 %v701, 57
    %v894 = vpop.permute.xlu0 %893
    %vm895 = vcmask 465920
    %v896 = vsel %vm895, %v878, %v880
    %v897 = vsel %vm895, %v880, %v882
    %v898 = vsel %vm895, %v882, %v884
    %v899 = vsel %vm895, %v884, %v886
    %v900 = vsel %vm895, %v886, %v888
    %v901 = vsel %vm895, %v888, %v890
    %v902 = vsel %vm895, %v890, %v892
    %v903 = vsel %vm895, %v892, %v894
    %v912 = vsel %vm869, %v896, 0.0
    %v913 = vsel %vm870, %v897, 0.0
    %v914 = vsel %vm871, %v898, 0.0
    %v915 = vsel %vm872, %v899, 0.0
    %v916 = vsel %vm873, %v900, 0.0
    %v917 = vsel %vm874, %v901, 0.0
    %v918 = vsel %vm875, %v902, 0.0
    %v919 = vsel %vm876, %v903, 0.0
    %vm920 = vmand %vm837, %vm303
    %vm921 = vmand %vm838, %vm304
    %vm922 = vmand %vm839, %vm305
    %vm923 = vmand %vm840, %vm306
    %vm924 = vmand %vm841, %vm307
    %vm925 = vmand %vm842, %vm308
    %vm926 = vmand %vm843, %vm309
    %vm927 = vmand %vm844, %vm310
    %v928 = vsel %vm920, 1, 0
    %v929 = vsel %vm921, 1, 0
    %v930 = vsel %vm922, 1, 0
    %v931 = vsel %vm923, 1, 0
    %v932 = vsel %vm924, 1, 0
    %v933 = vsel %vm925, 1, 0
    %v934 = vsel %vm926, 1, 0
    %v935 = vsel %vm927, 1, 0
    %vm936 = vcmp.eq.s32.totalorder %v928, 1
    %vm937 = vcmp.eq.s32.totalorder %v929, 1
    %vm938 = vcmp.eq.s32.totalorder %v930, 1
    %vm939 = vcmp.eq.s32.totalorder %v931, 1
    %vm940 = vcmp.eq.s32.totalorder %v932, 1
    %vm941 = vcmp.eq.s32.totalorder %v933, 1
    %vm942 = vcmp.eq.s32.totalorder %v934, 1
    %vm943 = vcmp.eq.s32.totalorder %v935, 1
    %944 = vrot.lane.b32.xlu0 %v693, 56
    %v945 = vpop.permute.xlu0 %944
    %946 = vrot.lane.b32.xlu0 %v694, 56
    %v947 = vpop.permute.xlu0 %946
    %948 = vrot.lane.b32.xlu0 %v695, 56
    %v949 = vpop.permute.xlu0 %948
    %950 = vrot.lane.b32.xlu0 %v696, 56
    %v951 = vpop.permute.xlu0 %950
    %952 = vrot.lane.b32.xlu0 %v697, 56
    %v953 = vpop.permute.xlu0 %952
    %954 = vrot.lane.b32.xlu0 %v698, 56
    %v955 = vpop.permute.xlu0 %954
    %956 = vrot.lane.b32.xlu0 %v699, 56
    %v957 = vpop.permute.xlu0 %956
    %958 = vrot.lane.b32.xlu0 %v700, 56
    %v959 = vpop.permute.xlu0 %958
    %960 = vrot.lane.b32.xlu0 %v701, 56
    %v961 = vpop.permute.xlu0 %960
    %vm962 = vcmask 457728
    %v963 = vsel %vm962, %v945, %v947
    %v964 = vsel %vm962, %v947, %v949
    %v965 = vsel %vm962, %v949, %v951
    %v966 = vsel %vm962, %v951, %v953
    %v967 = vsel %vm962, %v953, %v955
    %v968 = vsel %vm962, %v955, %v957
    %v969 = vsel %vm962, %v957, %v959
    %v970 = vsel %vm962, %v959, %v961
    %v979 = vsel %vm936, %v963, 0.0
    %v980 = vsel %vm937, %v964, 0.0
    %v981 = vsel %vm938, %v965, 0.0
    %v982 = vsel %vm939, %v966, 0.0
    %v983 = vsel %vm940, %v967, 0.0
    %v984 = vsel %vm941, %v968, 0.0
    %v985 = vsel %vm942, %v969, 0.0
    %v986 = vsel %vm943, %v970, 0.0
    %v995 = vrot.slane %v829, 4
    %v996 = vrot.slane %v830, 4
    %v997 = vrot.slane %v831, 4
    %v998 = vrot.slane %v832, 4
    %v999 = vrot.slane %v833, 4
    %v1000 = vrot.slane %v834, 4
    %v1001 = vrot.slane %v835, 4
    %v1002 = vrot.slane %v836, 4
    %v1019 = vrot.slane %v979, 4
    %v1020 = vrot.slane %v980, 4
    %v1021 = vrot.slane %v981, 4
    %v1022 = vrot.slane %v982, 4
    %v1023 = vrot.slane %v983, 4
    %v1024 = vrot.slane %v984, 4
    %v1025 = vrot.slane %v985, 4
    %v1026 = vrot.slane %v986, 4
    %v1035 = vsel %vm660, %v762, %v995
    %v1036 = vsel %vm660, %v763, %v996
    %v1037 = vsel %vm660, %v764, %v997
    %v1038 = vsel %vm660, %v765, %v998
    %v1039 = vsel %vm660, %v766, %v999
    %v1040 = vsel %vm660, %v767, %v1000
    %v1041 = vsel %vm660, %v768, %v1001
    %v1042 = vsel %vm660, %v769, %v1002
    %v1043 = vsel %vm660, %v912, %v1019
    %v1044 = vsel %vm660, %v913, %v1020
    %v1045 = vsel %vm660, %v914, %v1021
    %v1046 = vsel %vm660, %v915, %v1022
    %v1047 = vsel %vm660, %v916, %v1023
    %v1048 = vsel %vm660, %v917, %v1024
    %v1049 = vsel %vm660, %v918, %v1025
    %v1050 = vsel %vm660, %v919, %v1026
    %v1051 = vpack.c.bf16 %v1036, %v1035
    %v1052 = vpack.c.bf16 %v1038, %v1037
    %v1053 = vpack.c.bf16 %v1040, %v1039
    %v1054 = vpack.c.bf16 %v1042, %v1041
    %v1055 = vpack.c.bf16 %v1044, %v1043
    %v1056 = vpack.c.bf16 %v1046, %v1045
    %v1057 = vpack.c.bf16 %v1048, %v1047
    %v1058 = vpack.c.bf16 %v1050, %v1049
    %1059 = vst [vmem:[#allocation3 + $0x40] sm:$0xff] %v1051
    %1060 = vst [vmem:[#allocation3 + $0x48] sm:$0xff] %v1052
    %1061 = vst [vmem:[#allocation3 + $0x50] sm:$0xff] %v1053
    %1062 = vst [vmem:[#allocation3 + $0x58] sm:$0xff] %v1054
    %1063 = vst [vmem:[#allocation3 + $0x60] sm:$0xff] %v1055
    %1064 = vst [vmem:[#allocation3 + $0x68] sm:$0xff] %v1056
    %1065 = vst [vmem:[#allocation3 + $0x70] sm:$0xff] %v1057
    %1066 = vst [vmem:[#allocation3 + $0x78] sm:$0xff] %v1058
    %v1067 = vld [vmem:[#allocation2] sm:$0xff]
    %v1068 = vld [vmem:[#allocation2 + $0x8] sm:$0xff]
    %v1069 = vld [vmem:[#allocation2 + $0x10] sm:$0xff]
    %v1070 = vld [vmem:[#allocation2 + $0x18] sm:$0xff]
    %v1071 = vld [vmem:[#allocation2 + $0x20] sm:$0xff]
    %v1072 = vld [vmem:[#allocation2 + $0x28] sm:$0xff]
    %v1073 = vld [vmem:[#allocation2 + $0x30] sm:$0xff]
    %v1074 = vld [vmem:[#allocation2 + $0x38] sm:$0xff]
    %v1075 = vld [vmem:[#allocation2 + $0x40] sm:$0xff]
    %vm1076 = vmand %vm462, %vm837
    %vm1077 = vmand %vm463, %vm838
    %vm1078 = vmand %vm464, %vm839
    %vm1079 = vmand %vm465, %vm840
    %vm1080 = vmand %vm466, %vm841
    %vm1081 = vmand %vm467, %vm842
    %vm1082 = vmand %vm468, %vm843
    %vm1083 = vmand %vm469, %vm844
    %vm1084 = vmand %vm1076, %vm303
    %vm1085 = vmand %vm1077, %vm304
    %vm1086 = vmand %vm1078, %vm305
    %vm1087 = vmand %vm1079, %vm306
    %vm1088 = vmand %vm1080, %vm307
    %vm1089 = vmand %vm1081, %vm308
    %vm1090 = vmand %vm1082, %vm309
    %vm1091 = vmand %vm1083, %vm310
    %v1092 = vsel %vm1084, 1, 0
    %v1093 = vsel %vm1085, 1, 0
    %v1094 = vsel %vm1086, 1, 0
    %v1095 = vsel %vm1087, 1, 0
    %v1096 = vsel %vm1088, 1, 0
    %v1097 = vsel %vm1089, 1, 0
    %v1098 = vsel %vm1090, 1, 0
    %v1099 = vsel %vm1091, 1, 0
    %vm1100 = vcmp.eq.s32.totalorder %v1092, 1
    %vm1101 = vcmp.eq.s32.totalorder %v1093, 1
    %vm1102 = vcmp.eq.s32.totalorder %v1094, 1
    %vm1103 = vcmp.eq.s32.totalorder %v1095, 1
    %vm1104 = vcmp.eq.s32.totalorder %v1096, 1
    %vm1105 = vcmp.eq.s32.totalorder %v1097, 1
    %vm1106 = vcmp.eq.s32.totalorder %v1098, 1
    %vm1107 = vcmp.eq.s32.totalorder %v1099, 1
    %1117 = vrot.lane.b32.xlu0 %v1067, 55
    %v1118 = vpop.permute.xlu0 %1117
    %1119 = vrot.lane.b32.xlu0 %v1068, 55
    %v1120 = vpop.permute.xlu0 %1119
    %1121 = vrot.lane.b32.xlu0 %v1069, 55
    %v1122 = vpop.permute.xlu0 %1121
    %1123 = vrot.lane.b32.xlu0 %v1070, 55
    %v1124 = vpop.permute.xlu0 %1123
    %1125 = vrot.lane.b32.xlu0 %v1071, 55
    %v1126 = vpop.permute.xlu0 %1125
    %1127 = vrot.lane.b32.xlu0 %v1072, 55
    %v1128 = vpop.permute.xlu0 %1127
    %1129 = vrot.lane.b32.xlu0 %v1073, 55
    %v1130 = vpop.permute.xlu0 %1129
    %1131 = vrot.lane.b32.xlu0 %v1074, 55
    %v1132 = vpop.permute.xlu0 %1131
    %1133 = vrot.lane.b32.xlu0 %v1075, 55
    %v1134 = vpop.permute.xlu0 %1133
    %vm1135 = vcmask 449536
    %v1136 = vsel %vm1135, %v1118, %v1120
    %v1137 = vsel %vm1135, %v1120, %v1122
    %v1138 = vsel %vm1135, %v1122, %v1124
    %v1139 = vsel %vm1135, %v1124, %v1126
    %v1140 = vsel %vm1135, %v1126, %v1128
    %v1141 = vsel %vm1135, %v1128, %v1130
    %v1142 = vsel %vm1135, %v1130, %v1132
    %v1143 = vsel %vm1135, %v1132, %v1134
    %v1152 = vsel %vm1100, %v1136, 0.0
    %v1153 = vsel %vm1101, %v1137, 0.0
    %v1154 = vsel %vm1102, %v1138, 0.0
    %v1155 = vsel %vm1103, %v1139, 0.0
    %v1156 = vsel %vm1104, %v1140, 0.0
    %v1157 = vsel %vm1105, %v1141, 0.0
    %v1158 = vsel %vm1106, %v1142, 0.0
    %v1159 = vsel %vm1107, %v1143, 0.0
    %v1160 = vsel %vm311, 1, 0
    %v1161 = vsel %vm312, 1, 0
    %v1162 = vsel %vm313, 1, 0
    %v1163 = vsel %vm314, 1, 0
    %v1164 = vsel %vm315, 1, 0
    %v1165 = vsel %vm316, 1, 0
    %v1166 = vsel %vm317, 1, 0
    %v1167 = vsel %vm318, 1, 0
    %vm1168 = vcmp.eq.s32.totalorder %v1160, 1
    %vm1169 = vcmp.eq.s32.totalorder %v1161, 1
    %vm1170 = vcmp.eq.s32.totalorder %v1162, 1
    %vm1171 = vcmp.eq.s32.totalorder %v1163, 1
    %vm1172 = vcmp.eq.s32.totalorder %v1164, 1
    %vm1173 = vcmp.eq.s32.totalorder %v1165, 1
    %vm1174 = vcmp.eq.s32.totalorder %v1166, 1
    %vm1175 = vcmp.eq.s32.totalorder %v1167, 1
    %1176 = vrot.lane.b32.xlu0 %v1067, 9
    %v1177 = vpop.permute.xlu0 %1176
    %1178 = vrot.lane.b32.xlu0 %v1068, 9
    %v1179 = vpop.permute.xlu0 %1178
    %1180 = vrot.lane.b32.xlu0 %v1069, 9
    %v1181 = vpop.permute.xlu0 %1180
    %1182 = vrot.lane.b32.xlu0 %v1070, 9
    %v1183 = vpop.permute.xlu0 %1182
    %1184 = vrot.lane.b32.xlu0 %v1071, 9
    %v1185 = vpop.permute.xlu0 %1184
    %1186 = vrot.lane.b32.xlu0 %v1072, 9
    %v1187 = vpop.permute.xlu0 %1186
    %1188 = vrot.lane.b32.xlu0 %v1073, 9
    %v1189 = vpop.permute.xlu0 %1188
    %1190 = vrot.lane.b32.xlu0 %v1074, 9
    %v1191 = vpop.permute.xlu0 %1190
    %1192 = vrot.lane.b32.xlu0 %v1075, 9
    %v1193 = vpop.permute.xlu0 %1192
    %vm1194 = vcmask 72704
    %v1195 = vsel %vm1194, %v1177, %v1179
    %v1196 = vsel %vm1194, %v1179, %v1181
    %v1197 = vsel %vm1194, %v1181, %v1183
    %v1198 = vsel %vm1194, %v1183, %v1185
    %v1199 = vsel %vm1194, %v1185, %v1187
    %v1200 = vsel %vm1194, %v1187, %v1189
    %v1201 = vsel %vm1194, %v1189, %v1191
    %v1202 = vsel %vm1194, %v1191, %v1193
    %v1211 = vsel %vm1168, %v1195, 0.0
    %v1212 = vsel %vm1169, %v1196, 0.0
    %v1213 = vsel %vm1170, %v1197, 0.0
    %v1214 = vsel %vm1171, %v1198, 0.0
    %v1215 = vsel %vm1172, %v1199, 0.0
    %v1216 = vsel %vm1173, %v1200, 0.0
    %v1217 = vsel %vm1174, %v1201, 0.0
    %v1218 = vsel %vm1175, %v1202, 0.0
    %v1219 = vsel %vm295, 1, 0
    %v1220 = vsel %vm296, 1, 0
    %v1221 = vsel %vm297, 1, 0
    %v1222 = vsel %vm298, 1, 0
    %v1223 = vsel %vm299, 1, 0
    %v1224 = vsel %vm300, 1, 0
    %v1225 = vsel %vm301, 1, 0
    %v1226 = vsel %vm302, 1, 0
    %vm1227 = vcmp.eq.s32.totalorder %v1219, 1
    %vm1228 = vcmp.eq.s32.totalorder %v1220, 1
    %vm1229 = vcmp.eq.s32.totalorder %v1221, 1
    %vm1230 = vcmp.eq.s32.totalorder %v1222, 1
    %vm1231 = vcmp.eq.s32.totalorder %v1223, 1
    %vm1232 = vcmp.eq.s32.totalorder %v1224, 1
    %vm1233 = vcmp.eq.s32.totalorder %v1225, 1
    %vm1234 = vcmp.eq.s32.totalorder %v1226, 1
    %1235 = vrot.lane.b32.xlu0 %v1067, 8
    %v1236 = vpop.permute.xlu0 %1235
    %1237 = vrot.lane.b32.xlu0 %v1068, 8
    %v1238 = vpop.permute.xlu0 %1237
    %1239 = vrot.lane.b32.xlu0 %v1069, 8
    %v1240 = vpop.permute.xlu0 %1239
    %1241 = vrot.lane.b32.xlu0 %v1070, 8
    %v1242 = vpop.permute.xlu0 %1241
    %1243 = vrot.lane.b32.xlu0 %v1071, 8
    %v1244 = vpop.permute.xlu0 %1243
    %1245 = vrot.lane.b32.xlu0 %v1072, 8
    %v1246 = vpop.permute.xlu0 %1245
    %1247 = vrot.lane.b32.xlu0 %v1073, 8
    %v1248 = vpop.permute.xlu0 %1247
    %1249 = vrot.lane.b32.xlu0 %v1074, 8
    %v1250 = vpop.permute.xlu0 %1249
    %1251 = vrot.lane.b32.xlu0 %v1075, 8
    %v1252 = vpop.permute.xlu0 %1251
    %v1253 = vsel %vm63, %v1236, %v1238
    %v1254 = vsel %vm63, %v1238, %v1240
    %v1255 = vsel %vm63, %v1240, %v1242
    %v1256 = vsel %vm63, %v1242, %v1244
    %v1257 = vsel %vm63, %v1244, %v1246
    %v1258 = vsel %vm63, %v1246, %v1248
    %v1259 = vsel %vm63, %v1248, %v1250
    %v1260 = vsel %vm63, %v1250, %v1252
    %v1269 = vsel %vm1227, %v1253, 0.0
    %v1270 = vsel %vm1228, %v1254, 0.0
    %v1271 = vsel %vm1229, %v1255, 0.0
    %v1272 = vsel %vm1230, %v1256, 0.0
    %v1273 = vsel %vm1231, %v1257, 0.0
    %v1274 = vsel %vm1232, %v1258, 0.0
    %v1275 = vsel %vm1233, %v1259, 0.0
    %v1276 = vsel %vm1234, %v1260, 0.0
    %v1277 = vsel %vm470, 1, 0
    %v1278 = vsel %vm471, 1, 0
    %v1279 = vsel %vm472, 1, 0
    %v1280 = vsel %vm473, 1, 0
    %v1281 = vsel %vm474, 1, 0
    %v1282 = vsel %vm475, 1, 0
    %v1283 = vsel %vm476, 1, 0
    %v1284 = vsel %vm477, 1, 0
    %vm1285 = vcmp.eq.s32.totalorder %v1277, 1
    %vm1286 = vcmp.eq.s32.totalorder %v1278, 1
    %vm1287 = vcmp.eq.s32.totalorder %v1279, 1
    %vm1288 = vcmp.eq.s32.totalorder %v1280, 1
    %vm1289 = vcmp.eq.s32.totalorder %v1281, 1
    %vm1290 = vcmp.eq.s32.totalorder %v1282, 1
    %vm1291 = vcmp.eq.s32.totalorder %v1283, 1
    %vm1292 = vcmp.eq.s32.totalorder %v1284, 1
    %1293 = vrot.lane.b32.xlu0 %v1067, 7
    %v1294 = vpop.permute.xlu0 %1293
    %1295 = vrot.lane.b32.xlu0 %v1068, 7
    %v1296 = vpop.permute.xlu0 %1295
    %1297 = vrot.lane.b32.xlu0 %v1069, 7
    %v1298 = vpop.permute.xlu0 %1297
    %1299 = vrot.lane.b32.xlu0 %v1070, 7
    %v1300 = vpop.permute.xlu0 %1299
    %1301 = vrot.lane.b32.xlu0 %v1071, 7
    %v1302 = vpop.permute.xlu0 %1301
    %1303 = vrot.lane.b32.xlu0 %v1072, 7
    %v1304 = vpop.permute.xlu0 %1303
    %1305 = vrot.lane.b32.xlu0 %v1073, 7
    %v1306 = vpop.permute.xlu0 %1305
    %1307 = vrot.lane.b32.xlu0 %v1074, 7
    %v1308 = vpop.permute.xlu0 %1307
    %1309 = vrot.lane.b32.xlu0 %v1075, 7
    %v1310 = vpop.permute.xlu0 %1309
    %vm1311 = vcmask 56320
    %v1312 = vsel %vm1311, %v1294, %v1296
    %v1313 = vsel %vm1311, %v1296, %v1298
    %v1314 = vsel %vm1311, %v1298, %v1300
    %v1315 = vsel %vm1311, %v1300, %v1302
    %v1316 = vsel %vm1311, %v1302, %v1304
    %v1317 = vsel %vm1311, %v1304, %v1306
    %v1318 = vsel %vm1311, %v1306, %v1308
    %v1319 = vsel %vm1311, %v1308, %v1310
    %v1328 = vsel %vm1285, %v1312, 0.0
    %v1329 = vsel %vm1286, %v1313, 0.0
    %v1330 = vsel %vm1287, %v1314, 0.0
    %v1331 = vsel %vm1288, %v1315, 0.0
    %v1332 = vsel %vm1289, %v1316, 0.0
    %v1333 = vsel %vm1290, %v1317, 0.0
    %v1334 = vsel %vm1291, %v1318, 0.0
    %v1335 = vsel %vm1292, %v1319, 0.0
    %v1344 = vrot.slane %v1211, 4
    %v1345 = vrot.slane %v1212, 4
    %v1346 = vrot.slane %v1213, 4
    %v1347 = vrot.slane %v1214, 4
    %v1348 = vrot.slane %v1215, 4
    %v1349 = vrot.slane %v1216, 4
    %v1350 = vrot.slane %v1217, 4
    %v1351 = vrot.slane %v1218, 4
    %v1368 = vrot.slane %v1328, 4
    %v1369 = vrot.slane %v1329, 4
    %v1370 = vrot.slane %v1330, 4
    %v1371 = vrot.slane %v1331, 4
    %v1372 = vrot.slane %v1332, 4
    %v1373 = vrot.slane %v1333, 4
    %v1374 = vrot.slane %v1334, 4
    %v1375 = vrot.slane %v1335, 4
    %v1384 = vsel %vm660, %v1152, %v1344
    %v1385 = vsel %vm660, %v1153, %v1345
    %v1386 = vsel %vm660, %v1154, %v1346
    %v1387 = vsel %vm660, %v1155, %v1347
    %v1388 = vsel %vm660, %v1156, %v1348
    %v1389 = vsel %vm660, %v1157, %v1349
    %v1390 = vsel %vm660, %v1158, %v1350
    %v1391 = vsel %vm660, %v1159, %v1351
    %v1392 = vsel %vm660, %v1269, %v1368
    %v1393 = vsel %vm660, %v1270, %v1369
    %v1394 = vsel %vm660, %v1271, %v1370
    %v1395 = vsel %vm660, %v1272, %v1371
    %v1396 = vsel %vm660, %v1273, %v1372
    %v1397 = vsel %vm660, %v1274, %v1373
    %v1398 = vsel %vm660, %v1275, %v1374
    %v1399 = vsel %vm660, %v1276, %v1375
    %v1400 = vpack.c.bf16 %v1385, %v1384
    %v1401 = vpack.c.bf16 %v1387, %v1386
    %v1402 = vpack.c.bf16 %v1389, %v1388
    %v1403 = vpack.c.bf16 %v1391, %v1390
    %v1404 = vpack.c.bf16 %v1393, %v1392
    %v1405 = vpack.c.bf16 %v1395, %v1394
    %v1406 = vpack.c.bf16 %v1397, %v1396
    %v1407 = vpack.c.bf16 %v1399, %v1398
    %1408 = vst [vmem:[#allocation3 + $0x80] sm:$0xff] %v1400
    %1409 = vst [vmem:[#allocation3 + $0x88] sm:$0xff] %v1401
    %1410 = vst [vmem:[#allocation3 + $0x90] sm:$0xff] %v1402
    %1411 = vst [vmem:[#allocation3 + $0x98] sm:$0xff] %v1403
    %1412 = vst [vmem:[#allocation3 + $0xa0] sm:$0xff] %v1404
    %1413 = vst [vmem:[#allocation3 + $0xa8] sm:$0xff] %v1405
    %1414 = vst [vmem:[#allocation3 + $0xb0] sm:$0xff] %v1406
    %1415 = vst [vmem:[#allocation3 + $0xb8] sm:$0xff] %v1407
    %v1416 = vld [vmem:[#allocation2] sm:$0xff]
    %v1417 = vld [vmem:[#allocation2 + $0x8] sm:$0xff]
    %v1418 = vld [vmem:[#allocation2 + $0x10] sm:$0xff]
    %v1419 = vld [vmem:[#allocation2 + $0x18] sm:$0xff]
    %v1420 = vld [vmem:[#allocation2 + $0x20] sm:$0xff]
    %v1421 = vld [vmem:[#allocation2 + $0x28] sm:$0xff]
    %v1422 = vld [vmem:[#allocation2 + $0x30] sm:$0xff]
    %v1423 = vld [vmem:[#allocation2 + $0x38] sm:$0xff]
    %v1424 = vld [vmem:[#allocation2 + $0x40] sm:$0xff]
    %v1425 = vsel %vm287, 1, 0
    %v1426 = vsel %vm288, 1, 0
    %v1427 = vsel %vm289, 1, 0
    %v1428 = vsel %vm290, 1, 0
    %v1429 = vsel %vm291, 1, 0
    %v1430 = vsel %vm292, 1, 0
    %v1431 = vsel %vm293, 1, 0
    %v1432 = vsel %vm294, 1, 0
    %vm1433 = vcmp.eq.s32.totalorder %v1425, 1
    %vm1434 = vcmp.eq.s32.totalorder %v1426, 1
    %vm1435 = vcmp.eq.s32.totalorder %v1427, 1
    %vm1436 = vcmp.eq.s32.totalorder %v1428, 1
    %vm1437 = vcmp.eq.s32.totalorder %v1429, 1
    %vm1438 = vcmp.eq.s32.totalorder %v1430, 1
    %vm1439 = vcmp.eq.s32.totalorder %v1431, 1
    %vm1440 = vcmp.eq.s32.totalorder %v1432, 1
    %1450 = vrot.lane.b32.xlu0 %v1416, 1
    %v1451 = vpop.permute.xlu0 %1450
    %1452 = vrot.lane.b32.xlu0 %v1417, 1
    %v1453 = vpop.permute.xlu0 %1452
    %1454 = vrot.lane.b32.xlu0 %v1418, 1
    %v1455 = vpop.permute.xlu0 %1454
    %1456 = vrot.lane.b32.xlu0 %v1419, 1
    %v1457 = vpop.permute.xlu0 %1456
    %1458 = vrot.lane.b32.xlu0 %v1420, 1
    %v1459 = vpop.permute.xlu0 %1458
    %1460 = vrot.lane.b32.xlu0 %v1421, 1
    %v1461 = vpop.permute.xlu0 %1460
    %1462 = vrot.lane.b32.xlu0 %v1422, 1
    %v1463 = vpop.permute.xlu0 %1462
    %1464 = vrot.lane.b32.xlu0 %v1423, 1
    %v1465 = vpop.permute.xlu0 %1464
    %1466 = vrot.lane.b32.xlu0 %v1424, 1
    %v1467 = vpop.permute.xlu0 %1466
    %vm1468 = vcmask 7168
    %v1469 = vsel %vm1468, %v1451, %v1453
    %v1470 = vsel %vm1468, %v1453, %v1455
    %v1471 = vsel %vm1468, %v1455, %v1457
    %v1472 = vsel %vm1468, %v1457, %v1459
    %v1473 = vsel %vm1468, %v1459, %v1461
    %v1474 = vsel %vm1468, %v1461, %v1463
    %v1475 = vsel %vm1468, %v1463, %v1465
    %v1476 = vsel %vm1468, %v1465, %v1467
    %v1485 = vsel %vm1433, %v1469, 0.0
    %v1486 = vsel %vm1434, %v1470, 0.0
    %v1487 = vsel %vm1435, %v1471, 0.0
    %v1488 = vsel %vm1436, %v1472, 0.0
    %v1489 = vsel %vm1437, %v1473, 0.0
    %v1490 = vsel %vm1438, %v1474, 0.0
    %v1491 = vsel %vm1439, %v1475, 0.0
    %v1492 = vsel %vm1440, %v1476, 0.0
    %v1493 = vld [vmem:[#allocation2 + $0x8] sm:$0xff]
    %v1494 = vld [vmem:[#allocation2 + $0x10] sm:$0xff]
    %v1495 = vld [vmem:[#allocation2 + $0x18] sm:$0xff]
    %v1496 = vld [vmem:[#allocation2 + $0x20] sm:$0xff]
    %v1497 = vld [vmem:[#allocation2 + $0x28] sm:$0xff]
    %v1498 = vld [vmem:[#allocation2 + $0x30] sm:$0xff]
    %v1499 = vld [vmem:[#allocation2 + $0x38] sm:$0xff]
    %v1500 = vld [vmem:[#allocation2 + $0x40] sm:$0xff]
    %v1501 = vld [vmem:[#allocation2 + $0x48] sm:$0xff]
    %v1502 = vsel %vm462, 1, 0
    %v1503 = vsel %vm463, 1, 0
    %v1504 = vsel %vm464, 1, 0
    %v1505 = vsel %vm465, 1, 0
    %v1506 = vsel %vm466, 1, 0
    %v1507 = vsel %vm467, 1, 0
    %v1508 = vsel %vm468, 1, 0
    %v1509 = vsel %vm469, 1, 0
    %vm1510 = vcmp.eq.s32.totalorder %v1502, 1
    %vm1511 = vcmp.eq.s32.totalorder %v1503, 1
    %vm1512 = vcmp.eq.s32.totalorder %v1504, 1
    %vm1513 = vcmp.eq.s32.totalorder %v1505, 1
    %vm1514 = vcmp.eq.s32.totalorder %v1506, 1
    %vm1515 = vcmp.eq.s32.totalorder %v1507, 1
    %vm1516 = vcmp.eq.s32.totalorder %v1508, 1
    %vm1517 = vcmp.eq.s32.totalorder %v1509, 1
    %1527 = vrot.lane.b32.xlu0 %v1493, 127
    %v1528 = vpop.permute.xlu0 %1527
    %1529 = vrot.lane.b32.xlu0 %v1494, 127
    %v1530 = vpop.permute.xlu0 %1529
    %1531 = vrot.lane.b32.xlu0 %v1495, 127
    %v1532 = vpop.permute.xlu0 %1531
    %1533 = vrot.lane.b32.xlu0 %v1496, 127
    %v1534 = vpop.permute.xlu0 %1533
    %1535 = vrot.lane.b32.xlu0 %v1497, 127
    %v1536 = vpop.permute.xlu0 %1535
    %1537 = vrot.lane.b32.xlu0 %v1498, 127
    %v1538 = vpop.permute.xlu0 %1537
    %1539 = vrot.lane.b32.xlu0 %v1499, 127
    %v1540 = vpop.permute.xlu0 %1539
    %1541 = vrot.lane.b32.xlu0 %v1500, 127
    %v1542 = vpop.permute.xlu0 %1541
    %1543 = vrot.lane.b32.xlu0 %v1501, 127
    %v1544 = vpop.permute.xlu0 %1543
    %vm1545 = vcmask 1039360
    %v1546 = vsel %vm1545, %v1528, %v1530
    %v1547 = vsel %vm1545, %v1530, %v1532
    %v1548 = vsel %vm1545, %v1532, %v1534
    %v1549 = vsel %vm1545, %v1534, %v1536
    %v1550 = vsel %vm1545, %v1536, %v1538
    %v1551 = vsel %vm1545, %v1538, %v1540
    %v1552 = vsel %vm1545, %v1540, %v1542
    %v1553 = vsel %vm1545, %v1542, %v1544
    %v1562 = vsel %vm1510, %v1546, 0.0
    %v1563 = vsel %vm1511, %v1547, 0.0
    %v1564 = vsel %vm1512, %v1548, 0.0
    %v1565 = vsel %vm1513, %v1549, 0.0
    %v1566 = vsel %vm1514, %v1550, 0.0
    %v1567 = vsel %vm1515, %v1551, 0.0
    %v1568 = vsel %vm1516, %v1552, 0.0
    %v1569 = vsel %vm1517, %v1553, 0.0
    %v1570 = vsel %vm845, 1, 0
    %v1571 = vsel %vm846, 1, 0
    %v1572 = vsel %vm847, 1, 0
    %v1573 = vsel %vm848, 1, 0
    %v1574 = vsel %vm849, 1, 0
    %v1575 = vsel %vm850, 1, 0
    %v1576 = vsel %vm851, 1, 0
    %v1577 = vsel %vm852, 1, 0
    %vm1578 = vcmp.eq.s32.totalorder %v1570, 1
    %vm1579 = vcmp.eq.s32.totalorder %v1571, 1
    %vm1580 = vcmp.eq.s32.totalorder %v1572, 1
    %vm1581 = vcmp.eq.s32.totalorder %v1573, 1
    %vm1582 = vcmp.eq.s32.totalorder %v1574, 1
    %vm1583 = vcmp.eq.s32.totalorder %v1575, 1
    %vm1584 = vcmp.eq.s32.totalorder %v1576, 1
    %vm1585 = vcmp.eq.s32.totalorder %v1577, 1
    %1586 = vrot.lane.b32.xlu0 %v1493, 121
    %v1587 = vpop.permute.xlu0 %1586
    %1588 = vrot.lane.b32.xlu0 %v1494, 121
    %v1589 = vpop.permute.xlu0 %1588
    %1590 = vrot.lane.b32.xlu0 %v1495, 121
    %v1591 = vpop.permute.xlu0 %1590
    %1592 = vrot.lane.b32.xlu0 %v1496, 121
    %v1593 = vpop.permute.xlu0 %1592
    %1594 = vrot.lane.b32.xlu0 %v1497, 121
    %v1595 = vpop.permute.xlu0 %1594
    %1596 = vrot.lane.b32.xlu0 %v1498, 121
    %v1597 = vpop.permute.xlu0 %1596
    %1598 = vrot.lane.b32.xlu0 %v1499, 121
    %v1599 = vpop.permute.xlu0 %1598
    %1600 = vrot.lane.b32.xlu0 %v1500, 121
    %v1601 = vpop.permute.xlu0 %1600
    %1602 = vrot.lane.b32.xlu0 %v1501, 121
    %v1603 = vpop.permute.xlu0 %1602
    %vm1604 = vcmask 990208
    %v1605 = vsel %vm1604, %v1587, %v1589
    %v1606 = vsel %vm1604, %v1589, %v1591
    %v1607 = vsel %vm1604, %v1591, %v1593
    %v1608 = vsel %vm1604, %v1593, %v1595
    %v1609 = vsel %vm1604, %v1595, %v1597
    %v1610 = vsel %vm1604, %v1597, %v1599
    %v1611 = vsel %vm1604, %v1599, %v1601
    %v1612 = vsel %vm1604, %v1601, %v1603
    %v1621 = vsel %vm1578, %v1605, 0.0
    %v1622 = vsel %vm1579, %v1606, 0.0
    %v1623 = vsel %vm1580, %v1607, 0.0
    %v1624 = vsel %vm1581, %v1608, 0.0
    %v1625 = vsel %vm1582, %v1609, 0.0
    %v1626 = vsel %vm1583, %v1610, 0.0
    %v1627 = vsel %vm1584, %v1611, 0.0
    %v1628 = vsel %vm1585, %v1612, 0.0
    %v1629 = vrot.slane %v1417, 4
    %v1630 = vrot.slane %v1418, 4
    %v1631 = vrot.slane %v1419, 4
    %v1632 = vrot.slane %v1420, 4
    %v1633 = vrot.slane %v1421, 4
    %v1634 = vrot.slane %v1422, 4
    %v1635 = vrot.slane %v1423, 4
    %v1636 = vrot.slane %v1424, 4
    %v1653 = vrot.slane %v1621, 4
    %v1654 = vrot.slane %v1622, 4
    %v1655 = vrot.slane %v1623, 4
    %v1656 = vrot.slane %v1624, 4
    %v1657 = vrot.slane %v1625, 4
    %v1658 = vrot.slane %v1626, 4
    %v1659 = vrot.slane %v1627, 4
    %v1660 = vrot.slane %v1628, 4
    %v1669 = vsel %vm660, %v1485, %v1629
    %v1670 = vsel %vm660, %v1486, %v1630
    %v1671 = vsel %vm660, %v1487, %v1631
    %v1672 = vsel %vm660, %v1488, %v1632
    %v1673 = vsel %vm660, %v1489, %v1633
    %v1674 = vsel %vm660, %v1490, %v1634
    %v1675 = vsel %vm660, %v1491, %v1635
    %v1676 = vsel %vm660, %v1492, %v1636
    %v1677 = vsel %vm660, %v1562, %v1653
    %v1678 = vsel %vm660, %v1563, %v1654
    %v1679 = vsel %vm660, %v1564, %v1655
    %v1680 = vsel %vm660, %v1565, %v1656
    %v1681 = vsel %vm660, %v1566, %v1657
    %v1682 = vsel %vm660, %v1567, %v1658
    %v1683 = vsel %vm660, %v1568, %v1659
    %v1684 = vsel %vm660, %v1569, %v1660
    %v1685 = vpack.c.bf16 %v1670, %v1669
    %v1686 = vpack.c.bf16 %v1672, %v1671
    %v1687 = vpack.c.bf16 %v1674, %v1673
    %v1688 = vpack.c.bf16 %v1676, %v1675
    %v1689 = vpack.c.bf16 %v1678, %v1677
    %v1690 = vpack.c.bf16 %v1680, %v1679
    %v1691 = vpack.c.bf16 %v1682, %v1681
    %v1692 = vpack.c.bf16 %v1684, %v1683
    %1693 = vst [vmem:[#allocation3 + $0xc0] sm:$0xff] %v1685
    %1694 = vst [vmem:[#allocation3 + $0xc8] sm:$0xff] %v1686
    %1695 = vst [vmem:[#allocation3 + $0xd0] sm:$0xff] %v1687
    %1696 = vst [vmem:[#allocation3 + $0xd8] sm:$0xff] %v1688
    %1697 = vst [vmem:[#allocation3 + $0xe0] sm:$0xff] %v1689
    %1698 = vst [vmem:[#allocation3 + $0xe8] sm:$0xff] %v1690
    %1699 = vst [vmem:[#allocation3 + $0xf0] sm:$0xff] %v1691
    %1700 = vst [vmem:[#allocation3 + $0xf8] sm:$0xff] %v1692
    %v1701 = vld [vmem:[#allocation2 + $0x8] sm:$0xff]
    %v1702 = vld [vmem:[#allocation2 + $0x10] sm:$0xff]
    %v1703 = vld [vmem:[#allocation2 + $0x18] sm:$0xff]
    %v1704 = vld [vmem:[#allocation2 + $0x20] sm:$0xff]
    %v1705 = vld [vmem:[#allocation2 + $0x28] sm:$0xff]
    %v1706 = vld [vmem:[#allocation2 + $0x30] sm:$0xff]
    %v1707 = vld [vmem:[#allocation2 + $0x38] sm:$0xff]
    %v1708 = vld [vmem:[#allocation2 + $0x40] sm:$0xff]
    %v1709 = vld [vmem:[#allocation2 + $0x48] sm:$0xff]
    %v1710 = vsel %vm837, 1, 0
    %v1711 = vsel %vm838, 1, 0
    %v1712 = vsel %vm839, 1, 0
    %v1713 = vsel %vm840, 1, 0
    %v1714 = vsel %vm841, 1, 0
    %v1715 = vsel %vm842, 1, 0
    %v1716 = vsel %vm843, 1, 0
    %v1717 = vsel %vm844, 1, 0
    %vm1718 = vcmp.eq.s32.totalorder %v1710, 1
    %vm1719 = vcmp.eq.s32.totalorder %v1711, 1
    %vm1720 = vcmp.eq.s32.totalorder %v1712, 1
    %vm1721 = vcmp.eq.s32.totalorder %v1713, 1
    %vm1722 = vcmp.eq.s32.totalorder %v1714, 1
    %vm1723 = vcmp.eq.s32.totalorder %v1715, 1
    %vm1724 = vcmp.eq.s32.totalorder %v1716, 1
    %vm1725 = vcmp.eq.s32.totalorder %v1717, 1
    %1735 = vrot.lane.b32.xlu0 %v1701, 120
    %v1736 = vpop.permute.xlu0 %1735
    %1737 = vrot.lane.b32.xlu0 %v1702, 120
    %v1738 = vpop.permute.xlu0 %1737
    %1739 = vrot.lane.b32.xlu0 %v1703, 120
    %v1740 = vpop.permute.xlu0 %1739
    %1741 = vrot.lane.b32.xlu0 %v1704, 120
    %v1742 = vpop.permute.xlu0 %1741
    %1743 = vrot.lane.b32.xlu0 %v1705, 120
    %v1744 = vpop.permute.xlu0 %1743
    %1745 = vrot.lane.b32.xlu0 %v1706, 120
    %v1746 = vpop.permute.xlu0 %1745
    %1747 = vrot.lane.b32.xlu0 %v1707, 120
    %v1748 = vpop.permute.xlu0 %1747
    %1749 = vrot.lane.b32.xlu0 %v1708, 120
    %v1750 = vpop.permute.xlu0 %1749
    %1751 = vrot.lane.b32.xlu0 %v1709, 120
    %v1752 = vpop.permute.xlu0 %1751
    %vm1753 = vcmask 982016
    %v1754 = vsel %vm1753, %v1736, %v1738
    %v1755 = vsel %vm1753, %v1738, %v1740
    %v1756 = vsel %vm1753, %v1740, %v1742
    %v1757 = vsel %vm1753, %v1742, %v1744
    %v1758 = vsel %vm1753, %v1744, %v1746
    %v1759 = vsel %vm1753, %v1746, %v1748
    %v1760 = vsel %vm1753, %v1748, %v1750
    %v1761 = vsel %vm1753, %v1750, %v1752
    %v1770 = vsel %vm1718, %v1754, 0.0
    %v1771 = vsel %vm1719, %v1755, 0.0
    %v1772 = vsel %vm1720, %v1756, 0.0
    %v1773 = vsel %vm1721, %v1757, 0.0
    %v1774 = vsel %vm1722, %v1758, 0.0
    %v1775 = vsel %vm1723, %v1759, 0.0
    %v1776 = vsel %vm1724, %v1760, 0.0
    %v1777 = vsel %vm1725, %v1761, 0.0
    %v1778 = vsel %vm1076, 1, 0
    %v1779 = vsel %vm1077, 1, 0
    %v1780 = vsel %vm1078, 1, 0
    %v1781 = vsel %vm1079, 1, 0
    %v1782 = vsel %vm1080, 1, 0
    %v1783 = vsel %vm1081, 1, 0
    %v1784 = vsel %vm1082, 1, 0
    %v1785 = vsel %vm1083, 1, 0
    %vm1786 = vcmp.eq.s32.totalorder %v1778, 1
    %vm1787 = vcmp.eq.s32.totalorder %v1779, 1
    %vm1788 = vcmp.eq.s32.totalorder %v1780, 1
    %vm1789 = vcmp.eq.s32.totalorder %v1781, 1
    %vm1790 = vcmp.eq.s32.totalorder %v1782, 1
    %vm1791 = vcmp.eq.s32.totalorder %v1783, 1
    %vm1792 = vcmp.eq.s32.totalorder %v1784, 1
    %vm1793 = vcmp.eq.s32.totalorder %v1785, 1
    %1794 = vrot.lane.b32.xlu0 %v1701, 119
    %v1795 = vpop.permute.xlu0 %1794
    %1796 = vrot.lane.b32.xlu0 %v1702, 119
    %v1797 = vpop.permute.xlu0 %1796
    %1798 = vrot.lane.b32.xlu0 %v1703, 119
    %v1799 = vpop.permute.xlu0 %1798
    %1800 = vrot.lane.b32.xlu0 %v1704, 119
    %v1801 = vpop.permute.xlu0 %1800
    %1802 = vrot.lane.b32.xlu0 %v1705, 119
    %v1803 = vpop.permute.xlu0 %1802
    %1804 = vrot.lane.b32.xlu0 %v1706, 119
    %v1805 = vpop.permute.xlu0 %1804
    %1806 = vrot.lane.b32.xlu0 %v1707, 119
    %v1807 = vpop.permute.xlu0 %1806
    %1808 = vrot.lane.b32.xlu0 %v1708, 119
    %v1809 = vpop.permute.xlu0 %1808
    %1810 = vrot.lane.b32.xlu0 %v1709, 119
    %v1811 = vpop.permute.xlu0 %1810
    %vm1812 = vcmask 973824
    %v1813 = vsel %vm1812, %v1795, %v1797
    %v1814 = vsel %vm1812, %v1797, %v1799
    %v1815 = vsel %vm1812, %v1799, %v1801
    %v1816 = vsel %vm1812, %v1801, %v1803
    %v1817 = vsel %vm1812, %v1803, %v1805
    %v1818 = vsel %vm1812, %v1805, %v1807
    %v1819 = vsel %vm1812, %v1807, %v1809
    %v1820 = vsel %vm1812, %v1809, %v1811
    %v1829 = vsel %vm1786, %v1813, 0.0
    %v1830 = vsel %vm1787, %v1814, 0.0
    %v1831 = vsel %vm1788, %v1815, 0.0
    %v1832 = vsel %vm1789, %v1816, 0.0
    %v1833 = vsel %vm1790, %v1817, 0.0
    %v1834 = vsel %vm1791, %v1818, 0.0
    %v1835 = vsel %vm1792, %v1819, 0.0
    %v1836 = vsel %vm1793, %v1820, 0.0
    %vm1837 = vcmp.lt.s32.totalorder %v270, 448
    %vm1838 = vcmp.lt.s32.totalorder %v271, 448
    %vm1839 = vcmp.lt.s32.totalorder %v272, 448
    %vm1840 = vcmp.lt.s32.totalorder %v273, 448
    %vm1841 = vcmp.lt.s32.totalorder %v274, 448
    %vm1842 = vcmp.lt.s32.totalorder %v275, 448
    %vm1843 = vcmp.lt.s32.totalorder %v276, 448
    %vm1844 = vcmp.lt.s32.totalorder %v277, 448
    %vm1845 = vmand %vm311, %vm1837
    %vm1846 = vmand %vm312, %vm1838
    %vm1847 = vmand %vm313, %vm1839
    %vm1848 = vmand %vm314, %vm1840
    %vm1849 = vmand %vm315, %vm1841
    %vm1850 = vmand %vm316, %vm1842
    %vm1851 = vmand %vm317, %vm1843
    %vm1852 = vmand %vm318, %vm1844
    %v1853 = vsel %vm1845, 1, 0
    %v1854 = vsel %vm1846, 1, 0
    %v1855 = vsel %vm1847, 1, 0
    %v1856 = vsel %vm1848, 1, 0
    %v1857 = vsel %vm1849, 1, 0
    %v1858 = vsel %vm1850, 1, 0
    %v1859 = vsel %vm1851, 1, 0
    %v1860 = vsel %vm1852, 1, 0
    %vm1861 = vcmp.eq.s32.totalorder %v1853, 1
    %vm1862 = vcmp.eq.s32.totalorder %v1854, 1
    %vm1863 = vcmp.eq.s32.totalorder %v1855, 1
    %vm1864 = vcmp.eq.s32.totalorder %v1856, 1
    %vm1865 = vcmp.eq.s32.totalorder %v1857, 1
    %vm1866 = vcmp.eq.s32.totalorder %v1858, 1
    %vm1867 = vcmp.eq.s32.totalorder %v1859, 1
    %vm1868 = vcmp.eq.s32.totalorder %v1860, 1
    %1869 = vrot.lane.b32.xlu0 %v1701, 73
    %v1870 = vpop.permute.xlu0 %1869
    %1871 = vrot.lane.b32.xlu0 %v1702, 73
    %v1872 = vpop.permute.xlu0 %1871
    %1873 = vrot.lane.b32.xlu0 %v1703, 73
    %v1874 = vpop.permute.xlu0 %1873
    %1875 = vrot.lane.b32.xlu0 %v1704, 73
    %v1876 = vpop.permute.xlu0 %1875
    %1877 = vrot.lane.b32.xlu0 %v1705, 73
    %v1878 = vpop.permute.xlu0 %1877
    %1879 = vrot.lane.b32.xlu0 %v1706, 73
    %v1880 = vpop.permute.xlu0 %1879
    %1881 = vrot.lane.b32.xlu0 %v1707, 73
    %v1882 = vpop.permute.xlu0 %1881
    %1883 = vrot.lane.b32.xlu0 %v1708, 73
    %v1884 = vpop.permute.xlu0 %1883
    %1885 = vrot.lane.b32.xlu0 %v1709, 73
    %v1886 = vpop.permute.xlu0 %1885
    %v1887 = vsel %vm370, %v1870, %v1872
    %v1888 = vsel %vm370, %v1872, %v1874
    %v1889 = vsel %vm370, %v1874, %v1876
    %v1890 = vsel %vm370, %v1876, %v1878
    %v1891 = vsel %vm370, %v1878, %v1880
    %v1892 = vsel %vm370, %v1880, %v1882
    %v1893 = vsel %vm370, %v1882, %v1884
    %v1894 = vsel %vm370, %v1884, %v1886
    %v1903 = vsel %vm1861, %v1887, 0.0
    %v1904 = vsel %vm1862, %v1888, 0.0
    %v1905 = vsel %vm1863, %v1889, 0.0
    %v1906 = vsel %vm1864, %v1890, 0.0
    %v1907 = vsel %vm1865, %v1891, 0.0
    %v1908 = vsel %vm1866, %v1892, 0.0
    %v1909 = vsel %vm1867, %v1893, 0.0
    %v1910 = vsel %vm1868, %v1894, 0.0
    %vm1911 = vmand %vm295, %vm1837
    %vm1912 = vmand %vm296, %vm1838
    %vm1913 = vmand %vm297, %vm1839
    %vm1914 = vmand %vm298, %vm1840
    %vm1915 = vmand %vm299, %vm1841
    %vm1916 = vmand %vm300, %vm1842
    %vm1917 = vmand %vm301, %vm1843
    %vm1918 = vmand %vm302, %vm1844
    %v1919 = vsel %vm1911, 1, 0
    %v1920 = vsel %vm1912, 1, 0
    %v1921 = vsel %vm1913, 1, 0
    %v1922 = vsel %vm1914, 1, 0
    %v1923 = vsel %vm1915, 1, 0
    %v1924 = vsel %vm1916, 1, 0
    %v1925 = vsel %vm1917, 1, 0
    %v1926 = vsel %vm1918, 1, 0
    %vm1927 = vcmp.eq.s32.totalorder %v1919, 1
    %vm1928 = vcmp.eq.s32.totalorder %v1920, 1
    %vm1929 = vcmp.eq.s32.totalorder %v1921, 1
    %vm1930 = vcmp.eq.s32.totalorder %v1922, 1
    %vm1931 = vcmp.eq.s32.totalorder %v1923, 1
    %vm1932 = vcmp.eq.s32.totalorder %v1924, 1
    %vm1933 = vcmp.eq.s32.totalorder %v1925, 1
    %vm1934 = vcmp.eq.s32.totalorder %v1926, 1
    %1935 = vrot.lane.b32.xlu0 %v1701, 72
    %v1936 = vpop.permute.xlu0 %1935
    %1937 = vrot.lane.b32.xlu0 %v1702, 72
    %v1938 = vpop.permute.xlu0 %1937
    %1939 = vrot.lane.b32.xlu0 %v1703, 72
    %v1940 = vpop.permute.xlu0 %1939
    %1941 = vrot.lane.b32.xlu0 %v1704, 72
    %v1942 = vpop.permute.xlu0 %1941
    %1943 = vrot.lane.b32.xlu0 %v1705, 72
    %v1944 = vpop.permute.xlu0 %1943
    %1945 = vrot.lane.b32.xlu0 %v1706, 72
    %v1946 = vpop.permute.xlu0 %1945
    %1947 = vrot.lane.b32.xlu0 %v1707, 72
    %v1948 = vpop.permute.xlu0 %1947
    %1949 = vrot.lane.b32.xlu0 %v1708, 72
    %v1950 = vpop.permute.xlu0 %1949
    %1951 = vrot.lane.b32.xlu0 %v1709, 72
    %v1952 = vpop.permute.xlu0 %1951
    %v1953 = vsel %vm437, %v1936, %v1938
    %v1954 = vsel %vm437, %v1938, %v1940
    %v1955 = vsel %vm437, %v1940, %v1942
    %v1956 = vsel %vm437, %v1942, %v1944
    %v1957 = vsel %vm437, %v1944, %v1946
    %v1958 = vsel %vm437, %v1946, %v1948
    %v1959 = vsel %vm437, %v1948, %v1950
    %v1960 = vsel %vm437, %v1950, %v1952
    %v1969 = vsel %vm1927, %v1953, 0.0
    %v1970 = vsel %vm1928, %v1954, 0.0
    %v1971 = vsel %vm1929, %v1955, 0.0
    %v1972 = vsel %vm1930, %v1956, 0.0
    %v1973 = vsel %vm1931, %v1957, 0.0
    %v1974 = vsel %vm1932, %v1958, 0.0
    %v1975 = vsel %vm1933, %v1959, 0.0
    %v1976 = vsel %vm1934, %v1960, 0.0
    %v1985 = vrot.slane %v1829, 4
    %v1986 = vrot.slane %v1830, 4
    %v1987 = vrot.slane %v1831, 4
    %v1988 = vrot.slane %v1832, 4
    %v1989 = vrot.slane %v1833, 4
    %v1990 = vrot.slane %v1834, 4
    %v1991 = vrot.slane %v1835, 4
    %v1992 = vrot.slane %v1836, 4
    %v2009 = vrot.slane %v1969, 4
    %v2010 = vrot.slane %v1970, 4
    %v2011 = vrot.slane %v1971, 4
    %v2012 = vrot.slane %v1972, 4
    %v2013 = vrot.slane %v1973, 4
    %v2014 = vrot.slane %v1974, 4
    %v2015 = vrot.slane %v1975, 4
    %v2016 = vrot.slane %v1976, 4
    %v2025 = vsel %vm660, %v1770, %v1985
    %v2026 = vsel %vm660, %v1771, %v1986
    %v2027 = vsel %vm660, %v1772, %v1987
    %v2028 = vsel %vm660, %v1773, %v1988
    %v2029 = vsel %vm660, %v1774, %v1989
    %v2030 = vsel %vm660, %v1775, %v1990
    %v2031 = vsel %vm660, %v1776, %v1991
    %v2032 = vsel %vm660, %v1777, %v1992
    %v2033 = vsel %vm660, %v1903, %v2009
    %v2034 = vsel %vm660, %v1904, %v2010
    %v2035 = vsel %vm660, %v1905, %v2011
    %v2036 = vsel %vm660, %v1906, %v2012
    %v2037 = vsel %vm660, %v1907, %v2013
    %v2038 = vsel %vm660, %v1908, %v2014
    %v2039 = vsel %vm660, %v1909, %v2015
    %v2040 = vsel %vm660, %v1910, %v2016
    %v2041 = vpack.c.bf16 %v2026, %v2025
    %v2042 = vpack.c.bf16 %v2028, %v2027
    %v2043 = vpack.c.bf16 %v2030, %v2029
    %v2044 = vpack.c.bf16 %v2032, %v2031
    %v2045 = vpack.c.bf16 %v2034, %v2033
    %v2046 = vpack.c.bf16 %v2036, %v2035
    %v2047 = vpack.c.bf16 %v2038, %v2037
    %v2048 = vpack.c.bf16 %v2040, %v2039
    %2049 = vst [vmem:[#allocation3 + $0x100] sm:$0xff] %v2041
    %2050 = vst [vmem:[#allocation3 + $0x108] sm:$0xff] %v2042
    %2051 = vst [vmem:[#allocation3 + $0x110] sm:$0xff] %v2043
    %2052 = vst [vmem:[#allocation3 + $0x118] sm:$0xff] %v2044
    %2053 = vst [vmem:[#allocation3 + $0x120] sm:$0xff] %v2045
    %2054 = vst [vmem:[#allocation3 + $0x128] sm:$0xff] %v2046
    %2055 = vst [vmem:[#allocation3 + $0x130] sm:$0xff] %v2047
    %2056 = vst [vmem:[#allocation3 + $0x138] sm:$0xff] %v2048
    %v2057 = vld [vmem:[#allocation2 + $0x8] sm:$0xff]
    %v2058 = vld [vmem:[#allocation2 + $0x10] sm:$0xff]
    %v2059 = vld [vmem:[#allocation2 + $0x18] sm:$0xff]
    %v2060 = vld [vmem:[#allocation2 + $0x20] sm:$0xff]
    %v2061 = vld [vmem:[#allocation2 + $0x28] sm:$0xff]
    %v2062 = vld [vmem:[#allocation2 + $0x30] sm:$0xff]
    %v2063 = vld [vmem:[#allocation2 + $0x38] sm:$0xff]
    %v2064 = vld [vmem:[#allocation2 + $0x40] sm:$0xff]
    %v2065 = vld [vmem:[#allocation2 + $0x48] sm:$0xff]
    %vm2066 = vmand %vm470, %vm1837
    %vm2067 = vmand %vm471, %vm1838
    %vm2068 = vmand %vm472, %vm1839
    %vm2069 = vmand %vm473, %vm1840
    %vm2070 = vmand %vm474, %vm1841
    %vm2071 = vmand %vm475, %vm1842
    %vm2072 = vmand %vm476, %vm1843
    %vm2073 = vmand %vm477, %vm1844
    %v2074 = vsel %vm2066, 1, 0
    %v2075 = vsel %vm2067, 1, 0
    %v2076 = vsel %vm2068, 1, 0
    %v2077 = vsel %vm2069, 1, 0
    %v2078 = vsel %vm2070, 1, 0
    %v2079 = vsel %vm2071, 1, 0
    %v2080 = vsel %vm2072, 1, 0
    %v2081 = vsel %vm2073, 1, 0
    %vm2082 = vcmp.eq.s32.totalorder %v2074, 1
    %vm2083 = vcmp.eq.s32.totalorder %v2075, 1
    %vm2084 = vcmp.eq.s32.totalorder %v2076, 1
    %vm2085 = vcmp.eq.s32.totalorder %v2077, 1
    %vm2086 = vcmp.eq.s32.totalorder %v2078, 1
    %vm2087 = vcmp.eq.s32.totalorder %v2079, 1
    %vm2088 = vcmp.eq.s32.totalorder %v2080, 1
    %vm2089 = vcmp.eq.s32.totalorder %v2081, 1
    %2099 = vrot.lane.b32.xlu0 %v2057, 71
    %v2100 = vpop.permute.xlu0 %2099
    %2101 = vrot.lane.b32.xlu0 %v2058, 71
    %v2102 = vpop.permute.xlu0 %2101
    %2103 = vrot.lane.b32.xlu0 %v2059, 71
    %v2104 = vpop.permute.xlu0 %2103
    %2105 = vrot.lane.b32.xlu0 %v2060, 71
    %v2106 = vpop.permute.xlu0 %2105
    %2107 = vrot.lane.b32.xlu0 %v2061, 71
    %v2108 = vpop.permute.xlu0 %2107
    %2109 = vrot.lane.b32.xlu0 %v2062, 71
    %v2110 = vpop.permute.xlu0 %2109
    %2111 = vrot.lane.b32.xlu0 %v2063, 71
    %v2112 = vpop.permute.xlu0 %2111
    %2113 = vrot.lane.b32.xlu0 %v2064, 71
    %v2114 = vpop.permute.xlu0 %2113
    %2115 = vrot.lane.b32.xlu0 %v2065, 71
    %v2116 = vpop.permute.xlu0 %2115
    %v2117 = vsel %vm520, %v2100, %v2102
    %v2118 = vsel %vm520, %v2102, %v2104
    %v2119 = vsel %vm520, %v2104, %v2106
    %v2120 = vsel %vm520, %v2106, %v2108
    %v2121 = vsel %vm520, %v2108, %v2110
    %v2122 = vsel %vm520, %v2110, %v2112
    %v2123 = vsel %vm520, %v2112, %v2114
    %v2124 = vsel %vm520, %v2114, %v2116
    %v2133 = vsel %vm2082, %v2117, 0.0
    %v2134 = vsel %vm2083, %v2118, 0.0
    %v2135 = vsel %vm2084, %v2119, 0.0
    %v2136 = vsel %vm2085, %v2120, 0.0
    %v2137 = vsel %vm2086, %v2121, 0.0
    %v2138 = vsel %vm2087, %v2122, 0.0
    %v2139 = vsel %vm2088, %v2123, 0.0
    %v2140 = vsel %vm2089, %v2124, 0.0
    %vm2141 = vmand %vm287, %vm1837
    %vm2142 = vmand %vm288, %vm1838
    %vm2143 = vmand %vm289, %vm1839
    %vm2144 = vmand %vm290, %vm1840
    %vm2145 = vmand %vm291, %vm1841
    %vm2146 = vmand %vm292, %vm1842
    %vm2147 = vmand %vm293, %vm1843
    %vm2148 = vmand %vm294, %vm1844
    %v2149 = vsel %vm2141, 1, 0
    %v2150 = vsel %vm2142, 1, 0
    %v2151 = vsel %vm2143, 1, 0
    %v2152 = vsel %vm2144, 1, 0
    %v2153 = vsel %vm2145, 1, 0
    %v2154 = vsel %vm2146, 1, 0
    %v2155 = vsel %vm2147, 1, 0
    %v2156 = vsel %vm2148, 1, 0
    %vm2157 = vcmp.eq.s32.totalorder %v2149, 1
    %vm2158 = vcmp.eq.s32.totalorder %v2150, 1
    %vm2159 = vcmp.eq.s32.totalorder %v2151, 1
    %vm2160 = vcmp.eq.s32.totalorder %v2152, 1
    %vm2161 = vcmp.eq.s32.totalorder %v2153, 1
    %vm2162 = vcmp.eq.s32.totalorder %v2154, 1
    %vm2163 = vcmp.eq.s32.totalorder %v2155, 1
    %vm2164 = vcmp.eq.s32.totalorder %v2156, 1
    %2165 = vrot.lane.b32.xlu0 %v2057, 65
    %v2166 = vpop.permute.xlu0 %2165
    %2167 = vrot.lane.b32.xlu0 %v2058, 65
    %v2168 = vpop.permute.xlu0 %2167
    %2169 = vrot.lane.b32.xlu0 %v2059, 65
    %v2170 = vpop.permute.xlu0 %2169
    %2171 = vrot.lane.b32.xlu0 %v2060, 65
    %v2172 = vpop.permute.xlu0 %2171
    %2173 = vrot.lane.b32.xlu0 %v2061, 65
    %v2174 = vpop.permute.xlu0 %2173
    %2175 = vrot.lane.b32.xlu0 %v2062, 65
    %v2176 = vpop.permute.xlu0 %2175
    %2177 = vrot.lane.b32.xlu0 %v2063, 65
    %v2178 = vpop.permute.xlu0 %2177
    %2179 = vrot.lane.b32.xlu0 %v2064, 65
    %v2180 = vpop.permute.xlu0 %2179
    %2181 = vrot.lane.b32.xlu0 %v2065, 65
    %v2182 = vpop.permute.xlu0 %2181
    %v2183 = vsel %vm587, %v2166, %v2168
    %v2184 = vsel %vm587, %v2168, %v2170
    %v2185 = vsel %vm587, %v2170, %v2172
    %v2186 = vsel %vm587, %v2172, %v2174
    %v2187 = vsel %vm587, %v2174, %v2176
    %v2188 = vsel %vm587, %v2176, %v2178
    %v2189 = vsel %vm587, %v2178, %v2180
    %v2190 = vsel %vm587, %v2180, %v2182
    %v2199 = vsel %vm2157, %v2183, 0.0
    %v2200 = vsel %vm2158, %v2184, 0.0
    %v2201 = vsel %vm2159, %v2185, 0.0
    %v2202 = vsel %vm2160, %v2186, 0.0
    %v2203 = vsel %vm2161, %v2187, 0.0
    %v2204 = vsel %vm2162, %v2188, 0.0
    %v2205 = vsel %vm2163, %v2189, 0.0
    %v2206 = vsel %vm2164, %v2190, 0.0
    %v2207 = vsel %vm1837, 1, 0
    %v2208 = vsel %vm1838, 1, 0
    %v2209 = vsel %vm1839, 1, 0
    %v2210 = vsel %vm1840, 1, 0
    %v2211 = vsel %vm1841, 1, 0
    %v2212 = vsel %vm1842, 1, 0
    %v2213 = vsel %vm1843, 1, 0
    %v2214 = vsel %vm1844, 1, 0
    %vm2215 = vcmp.eq.s32.totalorder %v2207, 1
    %vm2216 = vcmp.eq.s32.totalorder %v2208, 1
    %vm2217 = vcmp.eq.s32.totalorder %v2209, 1
    %vm2218 = vcmp.eq.s32.totalorder %v2210, 1
    %vm2219 = vcmp.eq.s32.totalorder %v2211, 1
    %vm2220 = vcmp.eq.s32.totalorder %v2212, 1
    %vm2221 = vcmp.eq.s32.totalorder %v2213, 1
    %vm2222 = vcmp.eq.s32.totalorder %v2214, 1
    %2223 = vrot.lane.b32.xlu0 %v2057, 64
    %v2224 = vpop.permute.xlu0 %2223
    %2225 = vrot.lane.b32.xlu0 %v2058, 64
    %v2226 = vpop.permute.xlu0 %2225
    %2227 = vrot.lane.b32.xlu0 %v2059, 64
    %v2228 = vpop.permute.xlu0 %2227
    %2229 = vrot.lane.b32.xlu0 %v2060, 64
    %v2230 = vpop.permute.xlu0 %2229
    %2231 = vrot.lane.b32.xlu0 %v2061, 64
    %v2232 = vpop.permute.xlu0 %2231
    %2233 = vrot.lane.b32.xlu0 %v2062, 64
    %v2234 = vpop.permute.xlu0 %2233
    %2235 = vrot.lane.b32.xlu0 %v2063, 64
    %v2236 = vpop.permute.xlu0 %2235
    %2237 = vrot.lane.b32.xlu0 %v2064, 64
    %v2238 = vpop.permute.xlu0 %2237
    %2239 = vrot.lane.b32.xlu0 %v2065, 64
    %v2240 = vpop.permute.xlu0 %2239
    %v2241 = vsel %vm745, %v2224, %v2226
    %v2242 = vsel %vm745, %v2226, %v2228
    %v2243 = vsel %vm745, %v2228, %v2230
    %v2244 = vsel %vm745, %v2230, %v2232
    %v2245 = vsel %vm745, %v2232, %v2234
    %v2246 = vsel %vm745, %v2234, %v2236
    %v2247 = vsel %vm745, %v2236, %v2238
    %v2248 = vsel %vm745, %v2238, %v2240
    %v2257 = vsel %vm2215, %v2241, 0.0
    %v2258 = vsel %vm2216, %v2242, 0.0
    %v2259 = vsel %vm2217, %v2243, 0.0
    %v2260 = vsel %vm2218, %v2244, 0.0
    %v2261 = vsel %vm2219, %v2245, 0.0
    %v2262 = vsel %vm2220, %v2246, 0.0
    %v2263 = vsel %vm2221, %v2247, 0.0
    %v2264 = vsel %vm2222, %v2248, 0.0
    %vm2265 = vmand %vm462, %vm1837
    %vm2266 = vmand %vm463, %vm1838
    %vm2267 = vmand %vm464, %vm1839
    %vm2268 = vmand %vm465, %vm1840
    %vm2269 = vmand %vm466, %vm1841
    %vm2270 = vmand %vm467, %vm1842
    %vm2271 = vmand %vm468, %vm1843
    %vm2272 = vmand %vm469, %vm1844
    %v2273 = vsel %vm2265, 1, 0
    %v2274 = vsel %vm2266, 1, 0
    %v2275 = vsel %vm2267, 1, 0
    %v2276 = vsel %vm2268, 1, 0
    %v2277 = vsel %vm2269, 1, 0
    %v2278 = vsel %vm2270, 1, 0
    %v2279 = vsel %vm2271, 1, 0
    %v2280 = vsel %vm2272, 1, 0
    %vm2281 = vcmp.eq.s32.totalorder %v2273, 1
    %vm2282 = vcmp.eq.s32.totalorder %v2274, 1
    %vm2283 = vcmp.eq.s32.totalorder %v2275, 1
    %vm2284 = vcmp.eq.s32.totalorder %v2276, 1
    %vm2285 = vcmp.eq.s32.totalorder %v2277, 1
    %vm2286 = vcmp.eq.s32.totalorder %v2278, 1
    %vm2287 = vcmp.eq.s32.totalorder %v2279, 1
    %vm2288 = vcmp.eq.s32.totalorder %v2280, 1
    %2289 = vrot.lane.b32.xlu0 %v2057, 63
    %v2290 = vpop.permute.xlu0 %2289
    %2291 = vrot.lane.b32.xlu0 %v2058, 63
    %v2292 = vpop.permute.xlu0 %2291
    %2293 = vrot.lane.b32.xlu0 %v2059, 63
    %v2294 = vpop.permute.xlu0 %2293
    %2295 = vrot.lane.b32.xlu0 %v2060, 63
    %v2296 = vpop.permute.xlu0 %2295
    %2297 = vrot.lane.b32.xlu0 %v2061, 63
    %v2298 = vpop.permute.xlu0 %2297
    %2299 = vrot.lane.b32.xlu0 %v2062, 63
    %v2300 = vpop.permute.xlu0 %2299
    %2301 = vrot.lane.b32.xlu0 %v2063, 63
    %v2302 = vpop.permute.xlu0 %2301
    %2303 = vrot.lane.b32.xlu0 %v2064, 63
    %v2304 = vpop.permute.xlu0 %2303
    %2305 = vrot.lane.b32.xlu0 %v2065, 63
    %v2306 = vpop.permute.xlu0 %2305
    %v2307 = vsel %vm812, %v2290, %v2292
    %v2308 = vsel %vm812, %v2292, %v2294
    %v2309 = vsel %vm812, %v2294, %v2296
    %v2310 = vsel %vm812, %v2296, %v2298
    %v2311 = vsel %vm812, %v2298, %v2300
    %v2312 = vsel %vm812, %v2300, %v2302
    %v2313 = vsel %vm812, %v2302, %v2304
    %v2314 = vsel %vm812, %v2304, %v2306
    %v2323 = vsel %vm2281, %v2307, 0.0
    %v2324 = vsel %vm2282, %v2308, 0.0
    %v2325 = vsel %vm2283, %v2309, 0.0
    %v2326 = vsel %vm2284, %v2310, 0.0
    %v2327 = vsel %vm2285, %v2311, 0.0
    %v2328 = vsel %vm2286, %v2312, 0.0
    %v2329 = vsel %vm2287, %v2313, 0.0
    %v2330 = vsel %vm2288, %v2314, 0.0
    %v2339 = vrot.slane %v2199, 4
    %v2340 = vrot.slane %v2200, 4
    %v2341 = vrot.slane %v2201, 4
    %v2342 = vrot.slane %v2202, 4
    %v2343 = vrot.slane %v2203, 4
    %v2344 = vrot.slane %v2204, 4
    %v2345 = vrot.slane %v2205, 4
    %v2346 = vrot.slane %v2206, 4
    %v2363 = vrot.slane %v2323, 4
    %v2364 = vrot.slane %v2324, 4
    %v2365 = vrot.slane %v2325, 4
    %v2366 = vrot.slane %v2326, 4
    %v2367 = vrot.slane %v2327, 4
    %v2368 = vrot.slane %v2328, 4
    %v2369 = vrot.slane %v2329, 4
    %v2370 = vrot.slane %v2330, 4
    %v2379 = vsel %vm660, %v2133, %v2339
    %v2380 = vsel %vm660, %v2134, %v2340
    %v2381 = vsel %vm660, %v2135, %v2341
    %v2382 = vsel %vm660, %v2136, %v2342
    %v2383 = vsel %vm660, %v2137, %v2343
    %v2384 = vsel %vm660, %v2138, %v2344
    %v2385 = vsel %vm660, %v2139, %v2345
    %v2386 = vsel %vm660, %v2140, %v2346
    %v2387 = vsel %vm660, %v2257, %v2363
    %v2388 = vsel %vm660, %v2258, %v2364
    %v2389 = vsel %vm660, %v2259, %v2365
    %v2390 = vsel %vm660, %v2260, %v2366
    %v2391 = vsel %vm660, %v2261, %v2367
    %v2392 = vsel %vm660, %v2262, %v2368
    %v2393 = vsel %vm660, %v2263, %v2369
    %v2394 = vsel %vm660, %v2264, %v2370
    %v2395 = vpack.c.bf16 %v2380, %v2379
    %v2396 = vpack.c.bf16 %v2382, %v2381
    %v2397 = vpack.c.bf16 %v2384, %v2383
    %v2398 = vpack.c.bf16 %v2386, %v2385
    %v2399 = vpack.c.bf16 %v2388, %v2387
    %v2400 = vpack.c.bf16 %v2390, %v2389
    %v2401 = vpack.c.bf16 %v2392, %v2391
    %v2402 = vpack.c.bf16 %v2394, %v2393
    %2403 = vst [vmem:[#allocation3 + $0x140] sm:$0xff] %v2395
    %2404 = vst [vmem:[#allocation3 + $0x148] sm:$0xff] %v2396
    %2405 = vst [vmem:[#allocation3 + $0x150] sm:$0xff] %v2397
    %2406 = vst [vmem:[#allocation3 + $0x158] sm:$0xff] %v2398
    %2407 = vst [vmem:[#allocation3 + $0x160] sm:$0xff] %v2399
    %2408 = vst [vmem:[#allocation3 + $0x168] sm:$0xff] %v2400
    %2409 = vst [vmem:[#allocation3 + $0x170] sm:$0xff] %v2401
    %2410 = vst [vmem:[#allocation3 + $0x178] sm:$0xff] %v2402
    %v2411 = vld [vmem:[#allocation2 + $0x8] sm:$0xff]
    %v2412 = vld [vmem:[#allocation2 + $0x10] sm:$0xff]
    %v2413 = vld [vmem:[#allocation2 + $0x18] sm:$0xff]
    %v2414 = vld [vmem:[#allocation2 + $0x20] sm:$0xff]
    %v2415 = vld [vmem:[#allocation2 + $0x28] sm:$0xff]
    %v2416 = vld [vmem:[#allocation2 + $0x30] sm:$0xff]
    %v2417 = vld [vmem:[#allocation2 + $0x38] sm:$0xff]
    %v2418 = vld [vmem:[#allocation2 + $0x40] sm:$0xff]
    %v2419 = vld [vmem:[#allocation2 + $0x48] sm:$0xff]
    %vm2420 = vmand %vm845, %vm1837
    %vm2421 = vmand %vm846, %vm1838
    %vm2422 = vmand %vm847, %vm1839
    %vm2423 = vmand %vm848, %vm1840
    %vm2424 = vmand %vm849, %vm1841
    %vm2425 = vmand %vm850, %vm1842
    %vm2426 = vmand %vm851, %vm1843
    %vm2427 = vmand %vm852, %vm1844
    %v2428 = vsel %vm2420, 1, 0
    %v2429 = vsel %vm2421, 1, 0
    %v2430 = vsel %vm2422, 1, 0
    %v2431 = vsel %vm2423, 1, 0
    %v2432 = vsel %vm2424, 1, 0
    %v2433 = vsel %vm2425, 1, 0
    %v2434 = vsel %vm2426, 1, 0
    %v2435 = vsel %vm2427, 1, 0
    %vm2436 = vcmp.eq.s32.totalorder %v2428, 1
    %vm2437 = vcmp.eq.s32.totalorder %v2429, 1
    %vm2438 = vcmp.eq.s32.totalorder %v2430, 1
    %vm2439 = vcmp.eq.s32.totalorder %v2431, 1
    %vm2440 = vcmp.eq.s32.totalorder %v2432, 1
    %vm2441 = vcmp.eq.s32.totalorder %v2433, 1
    %vm2442 = vcmp.eq.s32.totalorder %v2434, 1
    %vm2443 = vcmp.eq.s32.totalorder %v2435, 1
    %2453 = vrot.lane.b32.xlu0 %v2411, 57
    %v2454 = vpop.permute.xlu0 %2453
    %2455 = vrot.lane.b32.xlu0 %v2412, 57
    %v2456 = vpop.permute.xlu0 %2455
    %2457 = vrot.lane.b32.xlu0 %v2413, 57
    %v2458 = vpop.permute.xlu0 %2457
    %2459 = vrot.lane.b32.xlu0 %v2414, 57
    %v2460 = vpop.permute.xlu0 %2459
    %2461 = vrot.lane.b32.xlu0 %v2415, 57
    %v2462 = vpop.permute.xlu0 %2461
    %2463 = vrot.lane.b32.xlu0 %v2416, 57
    %v2464 = vpop.permute.xlu0 %2463
    %2465 = vrot.lane.b32.xlu0 %v2417, 57
    %v2466 = vpop.permute.xlu0 %2465
    %2467 = vrot.lane.b32.xlu0 %v2418, 57
    %v2468 = vpop.permute.xlu0 %2467
    %2469 = vrot.lane.b32.xlu0 %v2419, 57
    %v2470 = vpop.permute.xlu0 %2469
    %v2471 = vsel %vm895, %v2454, %v2456
    %v2472 = vsel %vm895, %v2456, %v2458
    %v2473 = vsel %vm895, %v2458, %v2460
    %v2474 = vsel %vm895, %v2460, %v2462
    %v2475 = vsel %vm895, %v2462, %v2464
    %v2476 = vsel %vm895, %v2464, %v2466
    %v2477 = vsel %vm895, %v2466, %v2468
    %v2478 = vsel %vm895, %v2468, %v2470
    %v2487 = vsel %vm2436, %v2471, 0.0
    %v2488 = vsel %vm2437, %v2472, 0.0
    %v2489 = vsel %vm2438, %v2473, 0.0
    %v2490 = vsel %vm2439, %v2474, 0.0
    %v2491 = vsel %vm2440, %v2475, 0.0
    %v2492 = vsel %vm2441, %v2476, 0.0
    %v2493 = vsel %vm2442, %v2477, 0.0
    %v2494 = vsel %vm2443, %v2478, 0.0
    %vm2495 = vmand %vm837, %vm1837
    %vm2496 = vmand %vm838, %vm1838
    %vm2497 = vmand %vm839, %vm1839
    %vm2498 = vmand %vm840, %vm1840
    %vm2499 = vmand %vm841, %vm1841
    %vm2500 = vmand %vm842, %vm1842
    %vm2501 = vmand %vm843, %vm1843
    %vm2502 = vmand %vm844, %vm1844
    %v2503 = vsel %vm2495, 1, 0
    %v2504 = vsel %vm2496, 1, 0
    %v2505 = vsel %vm2497, 1, 0
    %v2506 = vsel %vm2498, 1, 0
    %v2507 = vsel %vm2499, 1, 0
    %v2508 = vsel %vm2500, 1, 0
    %v2509 = vsel %vm2501, 1, 0
    %v2510 = vsel %vm2502, 1, 0
    %vm2511 = vcmp.eq.s32.totalorder %v2503, 1
    %vm2512 = vcmp.eq.s32.totalorder %v2504, 1
    %vm2513 = vcmp.eq.s32.totalorder %v2505, 1
    %vm2514 = vcmp.eq.s32.totalorder %v2506, 1
    %vm2515 = vcmp.eq.s32.totalorder %v2507, 1
    %vm2516 = vcmp.eq.s32.totalorder %v2508, 1
    %vm2517 = vcmp.eq.s32.totalorder %v2509, 1
    %vm2518 = vcmp.eq.s32.totalorder %v2510, 1
    %2519 = vrot.lane.b32.xlu0 %v2411, 56
    %v2520 = vpop.permute.xlu0 %2519
    %2521 = vrot.lane.b32.xlu0 %v2412, 56
    %v2522 = vpop.permute.xlu0 %2521
    %2523 = vrot.lane.b32.xlu0 %v2413, 56
    %v2524 = vpop.permute.xlu0 %2523
    %2525 = vrot.lane.b32.xlu0 %v2414, 56
    %v2526 = vpop.permute.xlu0 %2525
    %2527 = vrot.lane.b32.xlu0 %v2415, 56
    %v2528 = vpop.permute.xlu0 %2527
    %2529 = vrot.lane.b32.xlu0 %v2416, 56
    %v2530 = vpop.permute.xlu0 %2529
    %2531 = vrot.lane.b32.xlu0 %v2417, 56
    %v2532 = vpop.permute.xlu0 %2531
    %2533 = vrot.lane.b32.xlu0 %v2418, 56
    %v2534 = vpop.permute.xlu0 %2533
    %2535 = vrot.lane.b32.xlu0 %v2419, 56
    %v2536 = vpop.permute.xlu0 %2535
    %v2537 = vsel %vm962, %v2520, %v2522
    %v2538 = vsel %vm962, %v2522, %v2524
    %v2539 = vsel %vm962, %v2524, %v2526
    %v2540 = vsel %vm962, %v2526, %v2528
    %v2541 = vsel %vm962, %v2528, %v2530
    %v2542 = vsel %vm962, %v2530, %v2532
    %v2543 = vsel %vm962, %v2532, %v2534
    %v2544 = vsel %vm962, %v2534, %v2536
    %v2553 = vsel %vm2511, %v2537, 0.0
    %v2554 = vsel %vm2512, %v2538, 0.0
    %v2555 = vsel %vm2513, %v2539, 0.0
    %v2556 = vsel %vm2514, %v2540, 0.0
    %v2557 = vsel %vm2515, %v2541, 0.0
    %v2558 = vsel %vm2516, %v2542, 0.0
    %v2559 = vsel %vm2517, %v2543, 0.0
    %v2560 = vsel %vm2518, %v2544, 0.0
    %vm2561 = vmand %vm1076, %vm1837
    %vm2562 = vmand %vm1077, %vm1838
    %vm2563 = vmand %vm1078, %vm1839
    %vm2564 = vmand %vm1079, %vm1840
    %vm2565 = vmand %vm1080, %vm1841
    %vm2566 = vmand %vm1081, %vm1842
    %vm2567 = vmand %vm1082, %vm1843
    %vm2568 = vmand %vm1083, %vm1844
    %v2569 = vsel %vm2561, 1, 0
    %v2570 = vsel %vm2562, 1, 0
    %v2571 = vsel %vm2563, 1, 0
    %v2572 = vsel %vm2564, 1, 0
    %v2573 = vsel %vm2565, 1, 0
    %v2574 = vsel %vm2566, 1, 0
    %v2575 = vsel %vm2567, 1, 0
    %v2576 = vsel %vm2568, 1, 0
    %vm2577 = vcmp.eq.s32.totalorder %v2569, 1
    %vm2578 = vcmp.eq.s32.totalorder %v2570, 1
    %vm2579 = vcmp.eq.s32.totalorder %v2571, 1
    %vm2580 = vcmp.eq.s32.totalorder %v2572, 1
    %vm2581 = vcmp.eq.s32.totalorder %v2573, 1
    %vm2582 = vcmp.eq.s32.totalorder %v2574, 1
    %vm2583 = vcmp.eq.s32.totalorder %v2575, 1
    %vm2584 = vcmp.eq.s32.totalorder %v2576, 1
    %2585 = vrot.lane.b32.xlu0 %v2411, 55
    %v2586 = vpop.permute.xlu0 %2585
    %2587 = vrot.lane.b32.xlu0 %v2412, 55
    %v2588 = vpop.permute.xlu0 %2587
    %2589 = vrot.lane.b32.xlu0 %v2413, 55
    %v2590 = vpop.permute.xlu0 %2589
    %2591 = vrot.lane.b32.xlu0 %v2414, 55
    %v2592 = vpop.permute.xlu0 %2591
    %2593 = vrot.lane.b32.xlu0 %v2415, 55
    %v2594 = vpop.permute.xlu0 %2593
    %2595 = vrot.lane.b32.xlu0 %v2416, 55
    %v2596 = vpop.permute.xlu0 %2595
    %2597 = vrot.lane.b32.xlu0 %v2417, 55
    %v2598 = vpop.permute.xlu0 %2597
    %2599 = vrot.lane.b32.xlu0 %v2418, 55
    %v2600 = vpop.permute.xlu0 %2599
    %2601 = vrot.lane.b32.xlu0 %v2419, 55
    %v2602 = vpop.permute.xlu0 %2601
    %v2603 = vsel %vm1135, %v2586, %v2588
    %v2604 = vsel %vm1135, %v2588, %v2590
    %v2605 = vsel %vm1135, %v2590, %v2592
    %v2606 = vsel %vm1135, %v2592, %v2594
    %v2607 = vsel %vm1135, %v2594, %v2596
    %v2608 = vsel %vm1135, %v2596, %v2598
    %v2609 = vsel %vm1135, %v2598, %v2600
    %v2610 = vsel %vm1135, %v2600, %v2602
    %v2619 = vsel %vm2577, %v2603, 0.0
    %v2620 = vsel %vm2578, %v2604, 0.0
    %v2621 = vsel %vm2579, %v2605, 0.0
    %v2622 = vsel %vm2580, %v2606, 0.0
    %v2623 = vsel %vm2581, %v2607, 0.0
    %v2624 = vsel %vm2582, %v2608, 0.0
    %v2625 = vsel %vm2583, %v2609, 0.0
    %v2626 = vsel %vm2584, %v2610, 0.0
    %v2635 = vrot.slane %v2553, 4
    %v2636 = vrot.slane %v2554, 4
    %v2637 = vrot.slane %v2555, 4
    %v2638 = vrot.slane %v2556, 4
    %v2639 = vrot.slane %v2557, 4
    %v2640 = vrot.slane %v2558, 4
    %v2641 = vrot.slane %v2559, 4
    %v2642 = vrot.slane %v2560, 4
    %v2651 = vsel %vm660, %v2487, %v2635
    %v2652 = vsel %vm660, %v2488, %v2636
    %v2653 = vsel %vm660, %v2489, %v2637
    %v2654 = vsel %vm660, %v2490, %v2638
    %v2655 = vsel %vm660, %v2491, %v2639
    %v2656 = vsel %vm660, %v2492, %v2640
    %v2657 = vsel %vm660, %v2493, %v2641
    %v2658 = vsel %vm660, %v2494, %v2642
    %v2659 = vsel %vm660, %v2619, 0.0
    %v2660 = vsel %vm660, %v2620, 0.0
    %v2661 = vsel %vm660, %v2621, 0.0
    %v2662 = vsel %vm660, %v2622, 0.0
    %v2663 = vsel %vm660, %v2623, 0.0
    %v2664 = vsel %vm660, %v2624, 0.0
    %v2665 = vsel %vm660, %v2625, 0.0
    %v2666 = vsel %vm660, %v2626, 0.0
    %v2667 = vpack.c.bf16 %v2652, %v2651
    %v2668 = vpack.c.bf16 %v2654, %v2653
    %v2669 = vpack.c.bf16 %v2656, %v2655
    %v2670 = vpack.c.bf16 %v2658, %v2657
    %v2671 = vpack.c.bf16 %v2660, %v2659
    %v2672 = vpack.c.bf16 %v2662, %v2661
    %v2673 = vpack.c.bf16 %v2664, %v2663
    %v2674 = vpack.c.bf16 %v2666, %v2665
    %2675 = vst [vmem:[#allocation3 + $0x180] sm:$0xff] %v2667
    %2676 = vst [vmem:[#allocation3 + $0x188] sm:$0xff] %v2668
    %2677 = vst [vmem:[#allocation3 + $0x190] sm:$0xff] %v2669
    %2678 = vst [vmem:[#allocation3 + $0x198] sm:$0xff] %v2670
    %2679 = vst [vmem:[#allocation3 + $0x1a0] sm:$0xff] %v2671
    %2680 = vst [vmem:[#allocation3 + $0x1a8] sm:$0xff] %v2672
    %2681 = vst [vmem:[#allocation3 + $0x1b0] sm:$0xff] %v2673
    %2682 = vst [vmem:[#allocation3 + $0x1b8] sm:$0xff] %v2674
    %v2683 = vld [vmem:[%s3] sm:$0xf]
    %v2684 = vld [vmem:[#allocation3] sm:$0xff]
    %v2685 = vld [vmem:[#allocation3 + $0x8] sm:$0xff]
    %v2686 = vld [vmem:[#allocation3 + $0x10] sm:$0xff]
    %v2687 = vld [vmem:[#allocation3 + $0x18] sm:$0xff]
    %v2688 = vld [vmem:[#allocation3 + $0x20] sm:$0xff]
    %v2689 = vld [vmem:[#allocation3 + $0x28] sm:$0xff]
    %v2690 = vld [vmem:[#allocation3 + $0x30] sm:$0xff]
    %v2691 = vld [vmem:[#allocation3 + $0x38] sm:$0xff]
    %v2692 = vld [vmem:[#allocation3 + $0x40] sm:$0xff]
    %v2693 = vld [vmem:[#allocation3 + $0x48] sm:$0xff]
    %v2694 = vld [vmem:[#allocation3 + $0x50] sm:$0xff]
    %v2695 = vld [vmem:[#allocation3 + $0x58] sm:$0xff]
    %v2696 = vld [vmem:[#allocation3 + $0x60] sm:$0xff]
    %v2697 = vld [vmem:[#allocation3 + $0x68] sm:$0xff]
    %v2698 = vld [vmem:[#allocation3 + $0x70] sm:$0xff]
    %v2699 = vld [vmem:[#allocation3 + $0x78] sm:$0xff]
    %v2700 = vld [vmem:[#allocation3 + $0x80] sm:$0xff]
    %v2701 = vld [vmem:[#allocation3 + $0x88] sm:$0xff]
    %v2702 = vld [vmem:[#allocation3 + $0x90] sm:$0xff]
    %v2703 = vld [vmem:[#allocation3 + $0x98] sm:$0xff]
    %v2704 = vld [vmem:[#allocation3 + $0xa0] sm:$0xff]
    %v2705 = vld [vmem:[#allocation3 + $0xa8] sm:$0xff]
    %v2706 = vld [vmem:[#allocation3 + $0xb0] sm:$0xff]
    %v2707 = vld [vmem:[#allocation3 + $0xb8] sm:$0xff]
    %v2708 = vld [vmem:[#allocation3 + $0xc0] sm:$0xff]
    %v2709 = vld [vmem:[#allocation3 + $0xc8] sm:$0xff]
    %v2710 = vld [vmem:[#allocation3 + $0xd0] sm:$0xff]
    %v2711 = vld [vmem:[#allocation3 + $0xd8] sm:$0xff]
    %v2712 = vld [vmem:[#allocation3 + $0xe0] sm:$0xff]
    %v2713 = vld [vmem:[#allocation3 + $0xe8] sm:$0xff]
    %v2714 = vld [vmem:[#allocation3 + $0xf0] sm:$0xff]
    %v2715 = vld [vmem:[#allocation3 + $0xf8] sm:$0xff]
    %v2716 = vld [vmem:[#allocation3 + $0x100] sm:$0xff]
    %v2717 = vld [vmem:[#allocation3 + $0x108] sm:$0xff]
    %v2718 = vld [vmem:[#allocation3 + $0x110] sm:$0xff]
    %v2719 = vld [vmem:[#allocation3 + $0x118] sm:$0xff]
    %v2720 = vld [vmem:[#allocation3 + $0x120] sm:$0xff]
    %v2721 = vld [vmem:[#allocation3 + $0x128] sm:$0xff]
    %v2722 = vld [vmem:[#allocation3 + $0x130] sm:$0xff]
    %v2723 = vld [vmem:[#allocation3 + $0x138] sm:$0xff]
    %v2724 = vld [vmem:[#allocation3 + $0x140] sm:$0xff]
    %v2725 = vld [vmem:[#allocation3 + $0x148] sm:$0xff]
    %v2726 = vld [vmem:[#allocation3 + $0x150] sm:$0xff]
    %v2727 = vld [vmem:[#allocation3 + $0x158] sm:$0xff]
    %v2728 = vld [vmem:[#allocation3 + $0x160] sm:$0xff]
    %v2729 = vld [vmem:[#allocation3 + $0x168] sm:$0xff]
    %v2730 = vld [vmem:[#allocation3 + $0x170] sm:$0xff]
    %v2731 = vld [vmem:[#allocation3 + $0x178] sm:$0xff]
    %v2732 = vld [vmem:[#allocation3 + $0x180] sm:$0xff]
    %v2733 = vld [vmem:[#allocation3 + $0x188] sm:$0xff]
    %v2734 = vld [vmem:[#allocation3 + $0x190] sm:$0xff]
    %v2735 = vld [vmem:[#allocation3 + $0x198] sm:$0xff]
    %v2736 = vld [vmem:[#allocation3 + $0x1a0] sm:$0xff]
    %v2737 = vld [vmem:[#allocation3 + $0x1a8] sm:$0xff]
    %v2738 = vld [vmem:[#allocation3 + $0x1b0] sm:$0xff]
    %v2739 = vld [vmem:[#allocation3 + $0x1b8] sm:$0xff]
    %v2740 = vld [vmem:[%s4] sm:$0xff]
    %2742 = vset.pattern.permute.xlu0 0
    %2743 = vperm.xlu0 %2742, %v2740
    %v2744 = vpop.permute.xlu0 %2743
    %v2802 = vunpack.c.l.b16 %v2684
    %v2803 = vunpack.c.h.b16 %v2684
    %v2804 = vunpack.c.l.b16 %v2685
    %v2805 = vunpack.c.h.b16 %v2685
    %v2806 = vunpack.c.l.b16 %v2686
    %v2807 = vunpack.c.h.b16 %v2686
    %v2808 = vunpack.c.l.b16 %v2687
    %v2809 = vunpack.c.h.b16 %v2687
    %v2810 = vunpack.c.l.b16 %v2688
    %v2811 = vunpack.c.h.b16 %v2688
    %v2812 = vunpack.c.l.b16 %v2689
    %v2813 = vunpack.c.h.b16 %v2689
    %v2814 = vunpack.c.l.b16 %v2690
    %v2815 = vunpack.c.h.b16 %v2690
    %v2816 = vunpack.c.l.b16 %v2691
    %v2817 = vunpack.c.h.b16 %v2691
    %v2818 = vunpack.c.l.b16 %v2692
    %v2819 = vunpack.c.h.b16 %v2692
    %v2820 = vunpack.c.l.b16 %v2693
    %v2821 = vunpack.c.h.b16 %v2693
    %v2822 = vunpack.c.l.b16 %v2694
    %v2823 = vunpack.c.h.b16 %v2694
    %v2824 = vunpack.c.l.b16 %v2695
    %v2825 = vunpack.c.h.b16 %v2695
    %v2826 = vunpack.c.l.b16 %v2696
    %v2827 = vunpack.c.h.b16 %v2696
    %v2828 = vunpack.c.l.b16 %v2697
    %v2829 = vunpack.c.h.b16 %v2697
    %v2830 = vunpack.c.l.b16 %v2698
    %v2831 = vunpack.c.h.b16 %v2698
    %v2832 = vunpack.c.l.b16 %v2699
    %v2833 = vunpack.c.h.b16 %v2699
    %v2834 = vunpack.c.l.b16 %v2700
    %v2835 = vunpack.c.h.b16 %v2700
    %v2836 = vunpack.c.l.b16 %v2701
    %v2837 = vunpack.c.h.b16 %v2701
    %v2838 = vunpack.c.l.b16 %v2702
    %v2839 = vunpack.c.h.b16 %v2702
    %v2840 = vunpack.c.l.b16 %v2703
    %v2841 = vunpack.c.h.b16 %v2703
    %v2842 = vunpack.c.l.b16 %v2704
    %v2843 = vunpack.c.h.b16 %v2704
    %v2844 = vunpack.c.l.b16 %v2705
    %v2845 = vunpack.c.h.b16 %v2705
    %v2846 = vunpack.c.l.b16 %v2706
    %v2847 = vunpack.c.h.b16 %v2706
    %v2848 = vunpack.c.l.b16 %v2707
    %v2849 = vunpack.c.h.b16 %v2707
    %v2850 = vunpack.c.l.b16 %v2708
    %v2851 = vunpack.c.h.b16 %v2708
    %v2852 = vunpack.c.l.b16 %v2709
    %v2853 = vunpack.c.h.b16 %v2709
    %v2854 = vunpack.c.l.b16 %v2710
    %v2855 = vunpack.c.h.b16 %v2710
    %v2856 = vunpack.c.l.b16 %v2711
    %v2857 = vunpack.c.h.b16 %v2711
    %v2858 = vunpack.c.l.b16 %v2712
    %v2859 = vunpack.c.h.b16 %v2712
    %v2860 = vunpack.c.l.b16 %v2713
    %v2861 = vunpack.c.h.b16 %v2713
    %v2862 = vunpack.c.l.b16 %v2714
    %v2863 = vunpack.c.h.b16 %v2714
    %v2864 = vunpack.c.l.b16 %v2715
    %v2865 = vunpack.c.h.b16 %v2715
    %v2866 = vunpack.c.l.b16 %v2716
    %v2867 = vunpack.c.h.b16 %v2716
    %v2868 = vunpack.c.l.b16 %v2717
    %v2869 = vunpack.c.h.b16 %v2717
    %v2870 = vunpack.c.l.b16 %v2718
    %v2871 = vunpack.c.h.b16 %v2718
    %v2872 = vunpack.c.l.b16 %v2719
    %v2873 = vunpack.c.h.b16 %v2719
    %v2874 = vunpack.c.l.b16 %v2720
    %v2875 = vunpack.c.h.b16 %v2720
    %v2876 = vunpack.c.l.b16 %v2721
    %v2877 = vunpack.c.h.b16 %v2721
    %v2878 = vunpack.c.l.b16 %v2722
    %v2879 = vunpack.c.h.b16 %v2722
    %v2880 = vunpack.c.l.b16 %v2723
    %v2881 = vunpack.c.h.b16 %v2723
    %v2882 = vunpack.c.l.b16 %v2724
    %v2883 = vunpack.c.h.b16 %v2724
    %v2884 = vunpack.c.l.b16 %v2725
    %v2885 = vunpack.c.h.b16 %v2725
    %v2886 = vunpack.c.l.b16 %v2726
    %v2887 = vunpack.c.h.b16 %v2726
    %v2888 = vunpack.c.l.b16 %v2727
    %v2889 = vunpack.c.h.b16 %v2727
    %v2890 = vunpack.c.l.b16 %v2728
    %v2891 = vunpack.c.h.b16 %v2728
    %v2892 = vunpack.c.l.b16 %v2729
    %v2893 = vunpack.c.h.b16 %v2729
    %v2894 = vunpack.c.l.b16 %v2730
    %v2895 = vunpack.c.h.b16 %v2730
    %v2896 = vunpack.c.l.b16 %v2731
    %v2897 = vunpack.c.h.b16 %v2731
    %v2898 = vunpack.c.l.b16 %v2732
    %v2899 = vunpack.c.h.b16 %v2732
    %v2900 = vunpack.c.l.b16 %v2733
    %v2901 = vunpack.c.h.b16 %v2733
    %v2902 = vunpack.c.l.b16 %v2734
    %v2903 = vunpack.c.h.b16 %v2734
    %v2904 = vunpack.c.l.b16 %v2735
    %v2905 = vunpack.c.h.b16 %v2735
    %v2906 = vunpack.c.l.b16 %v2736
    %v2907 = vunpack.c.h.b16 %v2736
    %v2908 = vunpack.c.l.b16 %v2737
    %v2909 = vunpack.c.h.b16 %v2737
    %v2910 = vunpack.c.l.b16 %v2738
    %v2911 = vunpack.c.h.b16 %v2738
    %v2912 = vunpack.c.l.b16 %v2739
    %v2913 = vunpack.c.h.b16 %v2739
    %v2914 = vpack.c.b16 %v2810, %v2802
    %v2915 = vpack.c.b16 %v2811, %v2803
    %v2916 = vpack.c.b16 %v2812, %v2804
    %v2917 = vpack.c.b16 %v2813, %v2805
    %v2918 = vpack.c.b16 %v2814, %v2806
    %v2919 = vpack.c.b16 %v2815, %v2807
    %v2920 = vpack.c.b16 %v2816, %v2808
    %v2921 = vpack.c.b16 %v2817, %v2809
    %v2922 = vpack.c.b16 %v2826, %v2818
    %v2923 = vpack.c.b16 %v2827, %v2819
    %v2924 = vpack.c.b16 %v2828, %v2820
    %v2925 = vpack.c.b16 %v2829, %v2821
    %v2926 = vpack.c.b16 %v2830, %v2822
    %v2927 = vpack.c.b16 %v2831, %v2823
    %v2928 = vpack.c.b16 %v2832, %v2824
    %v2929 = vpack.c.b16 %v2833, %v2825
    %v2930 = vpack.c.b16 %v2842, %v2834
    %v2931 = vpack.c.b16 %v2843, %v2835
    %v2932 = vpack.c.b16 %v2844, %v2836
    %v2933 = vpack.c.b16 %v2845, %v2837
    %v2934 = vpack.c.b16 %v2846, %v2838
    %v2935 = vpack.c.b16 %v2847, %v2839
    %v2936 = vpack.c.b16 %v2848, %v2840
    %v2937 = vpack.c.b16 %v2849, %v2841
    %v2938 = vpack.c.b16 %v2858, %v2850
    %v2939 = vpack.c.b16 %v2859, %v2851
    %v2940 = vpack.c.b16 %v2860, %v2852
    %v2941 = vpack.c.b16 %v2861, %v2853
    %v2942 = vpack.c.b16 %v2862, %v2854
    %v2943 = vpack.c.b16 %v2863, %v2855
    %v2944 = vpack.c.b16 %v2864, %v2856
    %v2945 = vpack.c.b16 %v2865, %v2857
    %v2946 = vpack.c.b16 %v2874, %v2866
    %v2947 = vpack.c.b16 %v2875, %v2867
    %v2948 = vpack.c.b16 %v2876, %v2868
    %v2949 = vpack.c.b16 %v2877, %v2869
    %v2950 = vpack.c.b16 %v2878, %v2870
    %v2951 = vpack.c.b16 %v2879, %v2871
    %v2952 = vpack.c.b16 %v2880, %v2872
    %v2953 = vpack.c.b16 %v2881, %v2873
    %v2954 = vpack.c.b16 %v2890, %v2882
    %v2955 = vpack.c.b16 %v2891, %v2883
    %v2956 = vpack.c.b16 %v2892, %v2884
    %v2957 = vpack.c.b16 %v2893, %v2885
    %v2958 = vpack.c.b16 %v2894, %v2886
    %v2959 = vpack.c.b16 %v2895, %v2887
    %v2960 = vpack.c.b16 %v2896, %v2888
    %v2961 = vpack.c.b16 %v2897, %v2889
    %v2962 = vpack.c.b16 %v2906, %v2898
    %v2963 = vpack.c.b16 %v2907, %v2899
    %v2964 = vpack.c.b16 %v2908, %v2900
    %v2965 = vpack.c.b16 %v2909, %v2901
    %v2966 = vpack.c.b16 %v2910, %v2902
    %v2967 = vpack.c.b16 %v2911, %v2903
    %v2968 = vpack.c.b16 %v2912, %v2904
    %v2969 = vpack.c.b16 %v2913, %v2905
    %vm3026 = vcmask 916480
    %v3028 = vsel %vm3026, %v2683, 0
    %3030 = vmatpush.bf16.msra.mxu0 0
    %3031 = vmatpush.bf16.msra.mxu0 %v2962
    %3032 = vmatpush.bf16.msra.mxu0 %v2954
    %3033 = vmatpush.bf16.msra.mxu0 %v2946
    %3034 = vmatpush.bf16.msra.mxu0 %v2938
    %3035 = vmatpush.bf16.msra.mxu0 %v2930
    %3036 = vmatpush.bf16.msra.mxu0 %v2922
    %3037 = vmatpush.bf16.msra.mxu0 %v2914
    %3038 = vmatmul.bf16.gmra.mxu0 %v3028
    %v3039 = vpop.f32.mrf.mxu0
    %v3040 = vadd.f32 %v2744, %v3039
    %v3041 = vpop.f32.mrf.mxu0
    %3042 = vdwg.mxu0
    %3043 = vmatpush.bf16.msra.mxu0 0
    %3044 = vmatpush.bf16.msra.mxu0 %v2963
    %3045 = vmatpush.bf16.msra.mxu0 %v2955
    %3046 = vmatpush.bf16.msra.mxu0 %v2947
    %3047 = vmatpush.bf16.msra.mxu0 %v2939
    %3048 = vmatpush.bf16.msra.mxu0 %v2931
    %3049 = vmatpush.bf16.msra.mxu0 %v2923
    %3050 = vmatpush.bf16.msra.mxu0 %v2915
    %3051 = vmatmul.bf16.gmra.mxu0 %v3028
    %v3052 = vpop.f32.mrf.mxu0
    %v3053 = vadd.f32 %v2744, %v3052
    %v3054 = vpop.f32.mrf.mxu0
    %3055 = vdwg.mxu0
    %3056 = vmatpush.bf16.msra.mxu0 0
    %3057 = vmatpush.bf16.msra.mxu0 %v2964
    %3058 = vmatpush.bf16.msra.mxu0 %v2956
    %3059 = vmatpush.bf16.msra.mxu0 %v2948
    %3060 = vmatpush.bf16.msra.mxu0 %v2940
    %3061 = vmatpush.bf16.msra.mxu0 %v2932
    %3062 = vmatpush.bf16.msra.mxu0 %v2924
    %3063 = vmatpush.bf16.msra.mxu0 %v2916
    %3064 = vmatmul.bf16.gmra.mxu0 %v3028
    %v3065 = vpop.f32.mrf.mxu0
    %v3066 = vadd.f32 %v2744, %v3065
    %v3067 = vpop.f32.mrf.mxu0
    %3068 = vdwg.mxu0
    %3069 = vmatpush.bf16.msra.mxu0 0
    %3070 = vmatpush.bf16.msra.mxu0 %v2965
    %3071 = vmatpush.bf16.msra.mxu0 %v2957
    %3072 = vmatpush.bf16.msra.mxu0 %v2949
    %3073 = vmatpush.bf16.msra.mxu0 %v2941
    %3074 = vmatpush.bf16.msra.mxu0 %v2933
    %3075 = vmatpush.bf16.msra.mxu0 %v2925
    %3076 = vmatpush.bf16.msra.mxu0 %v2917
    %3077 = vmatmul.bf16.gmra.mxu0 %v3028
    %v3078 = vpop.f32.mrf.mxu0
    %v3079 = vadd.f32 %v2744, %v3078
    %v3080 = vpop.f32.mrf.mxu0
    %3081 = vdwg.mxu0
    %3082 = vmatpush.bf16.msra.mxu0 0
    %3083 = vmatpush.bf16.msra.mxu0 %v2966
    %3084 = vmatpush.bf16.msra.mxu0 %v2958
    %3085 = vmatpush.bf16.msra.mxu0 %v2950
    %3086 = vmatpush.bf16.msra.mxu0 %v2942
    %3087 = vmatpush.bf16.msra.mxu0 %v2934
    %3088 = vmatpush.bf16.msra.mxu0 %v2926
    %3089 = vmatpush.bf16.msra.mxu0 %v2918
    %3090 = vmatmul.bf16.gmra.mxu0 %v3028
    %v3091 = vpop.f32.mrf.mxu0
    %v3092 = vadd.f32 %v2744, %v3091
    %v3093 = vpop.f32.mrf.mxu0
    %3094 = vdwg.mxu0
    %3095 = vmatpush.bf16.msra.mxu0 0
    %3096 = vmatpush.bf16.msra.mxu0 %v2967
    %3097 = vmatpush.bf16.msra.mxu0 %v2959
    %3098 = vmatpush.bf16.msra.mxu0 %v2951
    %3099 = vmatpush.bf16.msra.mxu0 %v2943
    %3100 = vmatpush.bf16.msra.mxu0 %v2935
    %3101 = vmatpush.bf16.msra.mxu0 %v2927
    %3102 = vmatpush.bf16.msra.mxu0 %v2919
    %3103 = vmatmul.bf16.gmra.mxu0 %v3028
    %v3104 = vpop.f32.mrf.mxu0
    %v3105 = vadd.f32 %v2744, %v3104
    %v3106 = vpop.f32.mrf.mxu0
    %3107 = vdwg.mxu0
    %3108 = vmatpush.bf16.msra.mxu0 0
    %3109 = vmatpush.bf16.msra.mxu0 %v2968
    %3110 = vmatpush.bf16.msra.mxu0 %v2960
    %3111 = vmatpush.bf16.msra.mxu0 %v2952
    %3112 = vmatpush.bf16.msra.mxu0 %v2944
    %3113 = vmatpush.bf16.msra.mxu0 %v2936
    %3114 = vmatpush.bf16.msra.mxu0 %v2928
    %3115 = vmatpush.bf16.msra.mxu0 %v2920
    %3116 = vmatmul.bf16.gmra.mxu0 %v3028
    %v3117 = vpop.f32.mrf.mxu0
    %v3118 = vadd.f32 %v2744, %v3117
    %v3119 = vpop.f32.mrf.mxu0
    %3120 = vdwg.mxu0
    %3121 = vmatpush.bf16.msra.mxu0 0
    %3122 = vmatpush.bf16.msra.mxu0 %v2969
    %3123 = vmatpush.bf16.msra.mxu0 %v2961
    %3124 = vmatpush.bf16.msra.mxu0 %v2953
    %3125 = vmatpush.bf16.msra.mxu0 %v2945
    %3126 = vmatpush.bf16.msra.mxu0 %v2937
    %3127 = vmatpush.bf16.msra.mxu0 %v2929
    %3128 = vmatpush.bf16.msra.mxu0 %v2921
    %3129 = vmatmul.bf16.gmra.mxu0 %v3028
    %v3130 = vpop.f32.mrf.mxu0
    %v3131 = vadd.f32 %v2744, %v3130
    %v3132 = vpop.f32.mrf.mxu0
    %3133 = vdwg.mxu0
    %v3134 = vmax.f32 %v3040, 0.0
    %v3135 = vmax.f32 %v3053, 0.0
    %v3136 = vmax.f32 %v3066, 0.0
    %v3137 = vmax.f32 %v3079, 0.0
    %v3138 = vmax.f32 %v3092, 0.0
    %v3139 = vmax.f32 %v3105, 0.0
    %v3140 = vmax.f32 %v3118, 0.0
    %v3141 = vmax.f32 %v3131, 0.0
    %v3142 = vld [vmem:[%s5] sm:$0xff]
    %v3143 = vld [vmem:[%s6] sm:$0xff]
    %3145 = vset.pattern.permute.xlu0 0
    %3146 = vperm.xlu0 %3145, %v3143
    %v3147 = vpop.permute.xlu0 %3146
    %v3150 = vsel %vm63, %v3142, 0
    %3152 = vmatpush.msra.mxu0 0.0
    %3153 = vmatpush.msra.mxu0 0.0
    %3154 = vmatpush.msra.mxu0 0.0
    %3155 = vmatpush.msra.mxu0 0.0
    %3156 = vmatpush.msra.mxu0 0.0
    %3157 = vmatpush.msra.mxu0 0.0
    %3158 = vmatpush.msra.mxu0 0.0
    %3159 = vmatpush.msra.mxu0 0.0
    %3160 = vmatpush.msra.mxu0 0.0
    %3161 = vmatpush.msra.mxu0 0.0
    %3162 = vmatpush.msra.mxu0 0.0
    %3163 = vmatpush.msra.mxu0 0.0
    %3164 = vmatpush.msra.mxu0 0.0
    %3165 = vmatpush.msra.mxu0 0.0
    %3166 = vmatpush.msra.mxu0 0.0
    %3167 = vmatpush.msra.mxu0 %v3134
    %3168 = vmatmul.f32.gmra.mxu0 %v3150
    %v3169 = vpop.f32.mrf.mxu0
    %v3170 = vadd.f32 %v3147, %v3169
    %3171 = vdwg.mxu0
    %3172 = vmatpush.msra.mxu0 0.0
    %3173 = vmatpush.msra.mxu0 0.0
    %3174 = vmatpush.msra.mxu0 0.0
    %3175 = vmatpush.msra.mxu0 0.0
    %3176 = vmatpush.msra.mxu0 0.0
    %3177 = vmatpush.msra.mxu0 0.0
    %3178 = vmatpush.msra.mxu0 0.0
    %3179 = vmatpush.msra.mxu0 0.0
    %3180 = vmatpush.msra.mxu0 0.0
    %3181 = vmatpush.msra.mxu0 0.0
    %3182 = vmatpush.msra.mxu0 0.0
    %3183 = vmatpush.msra.mxu0 0.0
    %3184 = vmatpush.msra.mxu0 0.0
    %3185 = vmatpush.msra.mxu0 0.0
    %3186 = vmatpush.msra.mxu0 0.0
    %3187 = vmatpush.msra.mxu0 %v3135
    %3188 = vmatmul.f32.gmra.mxu0 %v3150
    %v3189 = vpop.f32.mrf.mxu0
    %v3190 = vadd.f32 %v3147, %v3189
    %3191 = vdwg.mxu0
    %3192 = vmatpush.msra.mxu0 0.0
    %3193 = vmatpush.msra.mxu0 0.0
    %3194 = vmatpush.msra.mxu0 0.0
    %3195 = vmatpush.msra.mxu0 0.0
    %3196 = vmatpush.msra.mxu0 0.0
    %3197 = vmatpush.msra.mxu0 0.0
    %3198 = vmatpush.msra.mxu0 0.0
    %3199 = vmatpush.msra.mxu0 0.0
    %3200 = vmatpush.msra.mxu0 0.0
    %3201 = vmatpush.msra.mxu0 0.0
    %3202 = vmatpush.msra.mxu0 0.0
    %3203 = vmatpush.msra.mxu0 0.0
    %3204 = vmatpush.msra.mxu0 0.0
    %3205 = vmatpush.msra.mxu0 0.0
    %3206 = vmatpush.msra.mxu0 0.0
    %3207 = vmatpush.msra.mxu0 %v3136
    %3208 = vmatmul.f32.gmra.mxu0 %v3150
    %v3209 = vpop.f32.mrf.mxu0
    %v3210 = vadd.f32 %v3147, %v3209
    %3211 = vdwg.mxu0
    %3212 = vmatpush.msra.mxu0 0.0
    %3213 = vmatpush.msra.mxu0 0.0
    %3214 = vmatpush.msra.mxu0 0.0
    %3215 = vmatpush.msra.mxu0 0.0
    %3216 = vmatpush.msra.mxu0 0.0
    %3217 = vmatpush.msra.mxu0 0.0
    %3218 = vmatpush.msra.mxu0 0.0
    %3219 = vmatpush.msra.mxu0 0.0
    %3220 = vmatpush.msra.mxu0 0.0
    %3221 = vmatpush.msra.mxu0 0.0
    %3222 = vmatpush.msra.mxu0 0.0
    %3223 = vmatpush.msra.mxu0 0.0
    %3224 = vmatpush.msra.mxu0 0.0
    %3225 = vmatpush.msra.mxu0 0.0
    %3226 = vmatpush.msra.mxu0 0.0
    %3227 = vmatpush.msra.mxu0 %v3137
    %3228 = vmatmul.f32.gmra.mxu0 %v3150
    %v3229 = vpop.f32.mrf.mxu0
    %v3230 = vadd.f32 %v3147, %v3229
    %3231 = vdwg.mxu0
    %3232 = vmatpush.msra.mxu0 0.0
    %3233 = vmatpush.msra.mxu0 0.0
    %3234 = vmatpush.msra.mxu0 0.0
    %3235 = vmatpush.msra.mxu0 0.0
    %3236 = vmatpush.msra.mxu0 0.0
    %3237 = vmatpush.msra.mxu0 0.0
    %3238 = vmatpush.msra.mxu0 0.0
    %3239 = vmatpush.msra.mxu0 0.0
    %3240 = vmatpush.msra.mxu0 0.0
    %3241 = vmatpush.msra.mxu0 0.0
    %3242 = vmatpush.msra.mxu0 0.0
    %3243 = vmatpush.msra.mxu0 0.0
    %3244 = vmatpush.msra.mxu0 0.0
    %3245 = vmatpush.msra.mxu0 0.0
    %3246 = vmatpush.msra.mxu0 0.0
    %3247 = vmatpush.msra.mxu0 %v3138
    %3248 = vmatmul.f32.gmra.mxu0 %v3150
    %v3249 = vpop.f32.mrf.mxu0
    %v3250 = vadd.f32 %v3147, %v3249
    %3251 = vdwg.mxu0
    %3252 = vmatpush.msra.mxu0 0.0
    %3253 = vmatpush.msra.mxu0 0.0
    %3254 = vmatpush.msra.mxu0 0.0
    %3255 = vmatpush.msra.mxu0 0.0
    %3256 = vmatpush.msra.mxu0 0.0
    %3257 = vmatpush.msra.mxu0 0.0
    %3258 = vmatpush.msra.mxu0 0.0
    %3259 = vmatpush.msra.mxu0 0.0
    %3260 = vmatpush.msra.mxu0 0.0
    %3261 = vmatpush.msra.mxu0 0.0
    %3262 = vmatpush.msra.mxu0 0.0
    %3263 = vmatpush.msra.mxu0 0.0
    %3264 = vmatpush.msra.mxu0 0.0
    %3265 = vmatpush.msra.mxu0 0.0
    %3266 = vmatpush.msra.mxu0 0.0
    %3267 = vmatpush.msra.mxu0 %v3139
    %3268 = vmatmul.f32.gmra.mxu0 %v3150
    %v3269 = vpop.f32.mrf.mxu0
    %v3270 = vadd.f32 %v3147, %v3269
    %3271 = vdwg.mxu0
    %3272 = vmatpush.msra.mxu0 0.0
    %3273 = vmatpush.msra.mxu0 0.0
    %3274 = vmatpush.msra.mxu0 0.0
    %3275 = vmatpush.msra.mxu0 0.0
    %3276 = vmatpush.msra.mxu0 0.0
    %3277 = vmatpush.msra.mxu0 0.0
    %3278 = vmatpush.msra.mxu0 0.0
    %3279 = vmatpush.msra.mxu0 0.0
    %3280 = vmatpush.msra.mxu0 0.0
    %3281 = vmatpush.msra.mxu0 0.0
    %3282 = vmatpush.msra.mxu0 0.0
    %3283 = vmatpush.msra.mxu0 0.0
    %3284 = vmatpush.msra.mxu0 0.0
    %3285 = vmatpush.msra.mxu0 0.0
    %3286 = vmatpush.msra.mxu0 0.0
    %3287 = vmatpush.msra.mxu0 %v3140
    %3288 = vmatmul.f32.gmra.mxu0 %v3150
    %v3289 = vpop.f32.mrf.mxu0
    %v3290 = vadd.f32 %v3147, %v3289
    %3291 = vdwg.mxu0
    %3292 = vmatpush.msra.mxu0 0.0
    %3293 = vmatpush.msra.mxu0 0.0
    %3294 = vmatpush.msra.mxu0 0.0
    %3295 = vmatpush.msra.mxu0 0.0
    %3296 = vmatpush.msra.mxu0 0.0
    %3297 = vmatpush.msra.mxu0 0.0
    %3298 = vmatpush.msra.mxu0 0.0
    %3299 = vmatpush.msra.mxu0 0.0
    %3300 = vmatpush.msra.mxu0 0.0
    %3301 = vmatpush.msra.mxu0 0.0
    %3302 = vmatpush.msra.mxu0 0.0
    %3303 = vmatpush.msra.mxu0 0.0
    %3304 = vmatpush.msra.mxu0 0.0
    %3305 = vmatpush.msra.mxu0 0.0
    %3306 = vmatpush.msra.mxu0 0.0
    %3307 = vmatpush.msra.mxu0 %v3141
    %3308 = vmatmul.f32.gmra.mxu0 %v3150
    %v3309 = vpop.f32.mrf.mxu0
    %v3310 = vadd.f32 %v3147, %v3309
    %3311 = vdwg.mxu0
    %v3312 = vadd.f32 %v3170, %v3190
    %v3313 = vadd.f32 %v3312, %v3210
    %v3314 = vadd.f32 %v3313, %v3230
    %v3315 = vadd.f32 %v3314, %v3250
    %v3316 = vadd.f32 %v3315, %v3270
    %v3317 = vadd.f32 %v3316, %v3290
    %v3318 = vadd.f32 %v3317, %v3310
    %3319 = vadd.xlane.f32.xlu0 %v3318
    %v3320 = vpop.xlane.xlu0 %3319
    %v3321 = vmul.f32 %v3320, 0.0009765625
    %v3322 = vmul.f32 %v3170, %v3170
    %v3323 = vmul.f32 %v3190, %v3190
    %v3324 = vmul.f32 %v3210, %v3210
    %v3325 = vmul.f32 %v3230, %v3230
    %v3326 = vmul.f32 %v3250, %v3250
    %v3327 = vmul.f32 %v3270, %v3270
    %v3328 = vmul.f32 %v3290, %v3290
    %v3329 = vmul.f32 %v3310, %v3310
    %v3330 = vadd.f32 %v3322, %v3323
    %v3331 = vadd.f32 %v3330, %v3324
    %v3332 = vadd.f32 %v3331, %v3325
    %v3333 = vadd.f32 %v3332, %v3326
    %v3334 = vadd.f32 %v3333, %v3327
    %v3335 = vadd.f32 %v3334, %v3328
    %v3336 = vadd.f32 %v3335, %v3329
    %3337 = vadd.xlane.f32.xlu0 %v3336
    %v3338 = vpop.xlane.xlu0 %3337
    %v3339 = vmul.f32 %v3338, 0.0009765625
    %v3340 = vmul.f32 %v3321, %v3321
    %v3341 = vsub.f32 %v3339, %v3340
    %v3342 = vld [vmem:[%s7] sm:$0xff]
    %v3343 = vadd.f32 %v3341, 1e-05
    %v3344 = vrsqrt.pop %v3343
    %v3345 = vmul.f32 %v3344, %v3343
    %v3346 = vmul.f32 %v3345, %v3344
    %v3347 = vmul.f32 0.5, %v3346
    %v3348 = vsub.f32 1.5, %v3347
    %v3349 = vmul.f32 %v3344, %v3348
    %vm3350 = vweird.f32 %v3343
    %vm3351 = vweird.f32 %v3344
    %vm3352 = vmor %vm3350, %vm3351
    %v3353 = vsel %vm3352, %v3344, %v3349
    %v3354 = vmul.f32 %v3342, %v3353
    %v3355 = vld [vmem:[%s8] sm:$0xff]
    %v3356 = vmul.f32 %v3321, %v3354
    %v3357 = vsub.f32 %v3355, %v3356
    %3359 = vset.pattern.permute.xlu0 0
    %3360 = vperm.xlu0 %3359, %v3354
    %v3361 = vpop.permute.xlu0 %3360
    %v3363 = vmul.f32 %v3170, %v3361
    %v3364 = vmul.f32 %v3190, %v3361
    %v3365 = vmul.f32 %v3210, %v3361
    %v3366 = vmul.f32 %v3230, %v3361
    %v3367 = vmul.f32 %v3250, %v3361
    %v3368 = vmul.f32 %v3270, %v3361
    %v3369 = vmul.f32 %v3290, %v3361
    %v3370 = vmul.f32 %v3310, %v3361
    %3372 = vset.pattern.permute.xlu0 0
    %3373 = vperm.xlu0 %3372, %v3357
    %v3374 = vpop.permute.xlu0 %3373
    %v3376 = vadd.f32 %v3363, %v3374
    %v3377 = vadd.f32 %v3364, %v3374
    %v3378 = vadd.f32 %v3365, %v3374
    %v3379 = vadd.f32 %v3366, %v3374
    %v3380 = vadd.f32 %v3367, %v3374
    %v3381 = vadd.f32 %v3368, %v3374
    %v3382 = vadd.f32 %v3369, %v3374
    %v3383 = vadd.f32 %v3370, %v3374
    %v3384 = vld [vmem:[#allocation4] sm:$0xff]
    %v3385 = vld [vmem:[#allocation4 + $0x8] sm:$0xff]
    %v3386 = vld [vmem:[#allocation4 + $0x10] sm:$0xff]
    %v3387 = vld [vmem:[#allocation4 + $0x18] sm:$0xff]
    %v3388 = vld [vmem:[#allocation4 + $0x20] sm:$0xff]
    %v3389 = vld [vmem:[#allocation4 + $0x28] sm:$0xff]
    %v3390 = vld [vmem:[#allocation4 + $0x30] sm:$0xff]
    %v3391 = vld [vmem:[#allocation4 + $0x38] sm:$0xff]
    %v3392 = vadd.f32 %v3376, %v3384
    %v3393 = vadd.f32 %v3377, %v3385
    %v3394 = vadd.f32 %v3378, %v3386
    %v3395 = vadd.f32 %v3379, %v3387
    %v3396 = vadd.f32 %v3380, %v3388
    %v3397 = vadd.f32 %v3381, %v3389
    %v3398 = vadd.f32 %v3382, %v3390
    %v3399 = vadd.f32 %v3383, %v3391
    %v3400 = vmax.f32 %v3392, 0.0
    %v3401 = vmax.f32 %v3393, 0.0
    %v3402 = vmax.f32 %v3394, 0.0
    %v3403 = vmax.f32 %v3395, 0.0
    %v3404 = vmax.f32 %v3396, 0.0
    %v3405 = vmax.f32 %v3397, 0.0
    %v3406 = vmax.f32 %v3398, 0.0
    %v3407 = vmax.f32 %v3399, 0.0
    %3408 = vst [vmem:[#allocation7] sm:$0xff] %v3400
    %3409 = vst [vmem:[#allocation7 + $0x8] sm:$0xff] %v3401
    %3410 = vst [vmem:[#allocation7 + $0x10] sm:$0xff] %v3402
    %3411 = vst [vmem:[#allocation7 + $0x18] sm:$0xff] %v3403
    %3412 = vst [vmem:[#allocation7 + $0x20] sm:$0xff] %v3404
    %3413 = vst [vmem:[#allocation7 + $0x28] sm:$0xff] %v3405
    %3414 = vst [vmem:[#allocation7 + $0x30] sm:$0xff] %v3406
    %3415 = vst [vmem:[#allocation7 + $0x38] sm:$0xff] %v3407
    // Predicated region
    $region42: #{tpu_custom_call.1} parent=1 // pred_check
      _
    $region43: #{tpu_custom_call.1} parent=1 // pred_check_branch
      %3417 = sbr.rel (0) target = $region45
    $region44: #{tpu_custom_call.1} parent=1 // pred_region
      %3419 = vsyncadd [#allocation6], 0
      %s3421 = sshll.u32 [#allocation7], 4
      %s3422 = int_to_ptr.vmem [resolvable:$true] %s3421
      %s3423 = sshll.u32 %s9, 4
      %s3424 = int_to_ptr.hbm [resolvable:$true] %s3423
      %3426 = dma.vmem_to_hbm [thread:$0]  %s3422, 1024, %s3424, [#allocation6]
    $region45: #{tpu_custom_call.1} parent=1 // pred_fallthru
      _
    // Predicated region
    $region46: #{tpu_custom_call.1} parent=1 // pred_check
      _
    $region47: #{tpu_custom_call.1} parent=1 // pred_check_branch
      %3428 = sbr.rel (0) target = $region49
    $region48: #{tpu_custom_call.1} parent=1 // pred_region
      %3430 = dma.done [#allocation6], 1024
    $region49: #{tpu_custom_call.1} parent=1 // pred_fallthru
      _
    %3431 = vsyncpa [#allocation5], 1
    %3432 = vsyncpa [#allocation6], 1

</llo_original>
